<compile_context>
chip_gen: v7x
topology: tpu7x:2x2x1
jax: 0.10.0
libtpu: 0.0.40
codegen_flags: <defaults>
</compile_context>

<pallas_src>
import jax
import jax.numpy as jnp
from jax.experimental import pallas as pl
from jax.experimental.pallas import tpu as pltpu

EPS = 1e-6

# ------------------------------ configuration ------------------------------
C_DIM    = 32                       # cfg.model.encoder.c_dim (== hidden_dim)
NUM_EEF  = 1                        # cfg.env.num_eef
DOF      = 7                        # cfg.env.dof
EEF_DIM  = 13                       # cfg.env.eef_dim
HIDDEN   = C_DIM
N_STATE  = NUM_EEF * (EEF_DIM // 3)         # z_state vector channels (pos + 3 dirs) = 4
CIN      = C_DIM + N_STATE                  # xyz_fc / grip_fc vector input channels
N_SCAL   = NUM_EEF                          # scalar input channels (dof >= 4)
N_OUT    = 1 if DOF <= 4 else 2             # xyz_fc vector output channels
CPC      = 3                                # synthetic encoder input vector channels
PC_SCALE = 1.0
AC_MODE  = "abs"
MT_MAX   = 512                              # max point tile (lane dim)
OFF_PAD  = 8                                # sublane-padded offset out channels


# ------------------- in-kernel VN helpers on (C, 3*MT) slabs ----------------
def _split3(a, mt):
    return a[:, :mt], a[:, mt:2 * mt], a[:, 2 * mt:]


def _tile3(a):
    return jnp.concatenate([a, a, a], axis=-1)


def _vn_layernorm_slab(q, gamma, beta, mt):
    # q: (C, 3*MT); LayerNorm over channel axis of the per-point vector norms.
    qx, qy, qz = _split3(q, mt)
    n2 = qx * qx + qy * qy + qz * qz + EPS                 # (C, MT)
    n = jnp.sqrt(n2)
    mu = jnp.mean(n, axis=0, keepdims=True)
    var = jnp.maximum(jnp.mean(n2, axis=0, keepdims=True) - mu * mu, 0.0)
    nln = (n - mu) * jax.lax.rsqrt(var + EPS) * gamma + beta
    r = nln * pl.reciprocal(n, approx=True)
    return q * _tile3(r)


def _vn_relu_slab(q, wa, mt):
    # VN-LeakyReLU with negative_slope=0.0 (VN-ReLU), fused over xyz lanes.
    d = jnp.dot(wa, q, preferred_element_type=jnp.float32)  # (C, 3*MT), one matmul
    qx, qy, qz = _split3(q, mt)
    dx, dy, dz = _split3(d, mt)
    dot = qx * dx + qy * dy + qz * dz
    dsq = dx * dx + dy * dy + dz * dz + EPS
    fac = jnp.minimum(dot, 0.0) * pl.reciprocal(dsq, approx=True)
    return q - _tile3(fac) * d


# --------------------------------- kernel ----------------------------------
def sim3_policy_kernel(
    pcn_ref, qst_ref, dst_ref, mag_ref,                 # per-point / per-batch data
    we_ref, ge_ref, be_ref, wea_ref,                    # synthetic encoder layer
    w1qd_ref, g1_ref, b1_ref, w1a_ref,                  # xyz_fc layer 1 (VecLNA, s_in)
    w2_ref, g2_ref, b2_ref, w2a_ref,                    # xyz_fc layer 2 (VecLNA)
    w3p_ref,                                            # xyz_fc layer 3 (padded)
    pf_ref, off_ref, so3_ref,                           # outputs
):
    mt = pcn_ref.shape[-1]

    # so3 accumulator (resident output block across the m grid axis)
    @pl.when(pl.program_id(1) == 0)
    def _init():
        so3_ref[...] = jnp.zeros_like(so3_ref)

    pcn = pcn_ref[0]                                         # (3, CPC, MT)
    x = jnp.concatenate([pcn[0], pcn[1], pcn[2]], axis=-1)   # (CPC, 3*MT)

    # --- synthetic SIM3 encoder per-point layer: VecLinear(CPC->C)+VN-LN+VN-ReLU
    q = jnp.dot(we_ref[...], x, preferred_element_type=jnp.float32)   # (C, 3*MT)
    q = _vn_layernorm_slab(q, ge_ref[...], be_ref[...], mt)
    pf = _vn_relu_slab(q, wea_ref[...], mt)

    for i in range(3):                                       # per_point_so3 + pooling
        pfi = pf[:, i * mt:(i + 1) * mt]
        pf_ref[0, i] = pfi
        so3_ref[0, i] = so3_ref[0, i] + jnp.sum(pfi, axis=-1, keepdims=True)

    # --- xyz_fc layer 1: VecLNA(CIN -> H, s_in=N_SCAL)
    # w1 and w1d (point-cloud columns) are stacked -> single (2H, C) matmul.
    # The z_state half of the concat input is point-independent; its (tiny)
    # contribution qst/dst/mag was precomputed per batch in JAX glue.
    qd = jnp.dot(w1qd_ref[...], pf, preferred_element_type=jnp.float32)  # (2H, 3*MT)
    q_c, d_c = [], []
    for i in range(3):
        q_c.append(qd[:HIDDEN, i * mt:(i + 1) * mt] + qst_ref[0, i])
        d_c.append(qd[HIDDEN:, i * mt:(i + 1) * mt] + dst_ref[0, i])
    inv_dn = jax.lax.rsqrt(d_c[0] * d_c[0] + d_c[1] * d_c[1] + d_c[2] * d_c[2] + EPS)
    mag = mag_ref[0]                                         # (H, 1)
    q1 = jnp.concatenate([q_c[i] + mag * d_c[i] * inv_dn for i in range(3)], axis=-1)
    q1 = _vn_layernorm_slab(q1, g1_ref[...], b1_ref[...], mt)
    h1 = _vn_relu_slab(q1, w1a_ref[...], mt)

    # --- xyz_fc layer 2: VecLNA(H -> H)
    q2 = jnp.dot(w2_ref[...], h1, preferred_element_type=jnp.float32)
    q2 = _vn_layernorm_slab(q2, g2_ref[...], b2_ref[...], mt)
    h2 = _vn_relu_slab(q2, w2a_ref[...], mt)

    # --- xyz_fc layer 3: VecLinear(H -> N_OUT), weight zero-padded to 8 rows
    off = jnp.dot(w3p_ref[...], h2, preferred_element_type=jnp.float32)  # (8, 3*MT)
    for i in range(3):
        off_ref[0, i] = off[:, i * mt:(i + 1) * mt]


# ------------------------------ kernel wrapper ------------------------------
def _round_up(x, m):
    return ((x + m - 1) // m) * m


def _call_kernel(pcn, qst, dst, mag, weights):
    B = pcn.shape[0]
    M = pcn.shape[-1]
    mt = min(MT_MAX, _round_up(M, 128))
    Mp = _round_up(M, mt)
    if Mp != M:                       # tail padding; zero points -> zero features
        pcn = jnp.pad(pcn, ((0, 0), (0, 0), (0, 0), (0, Mp - M)))
    grid = (B, Mp // mt)
    in_specs = [
        pl.BlockSpec((1, 3, CPC, mt), lambda b, m: (b, 0, 0, m)),
        pl.BlockSpec((1, 3, HIDDEN, 1), lambda b, m: (b, 0, 0, 0)),
        pl.BlockSpec((1, 3, HIDDEN, 1), lambda b, m: (b, 0, 0, 0)),
        pl.BlockSpec((1, HIDDEN, 1), lambda b, m: (b, 0, 0)),
    ] + [pl.BlockSpec(w.shape, lambda b, m: (0, 0)) for w in weights]
    out_specs = [
        pl.BlockSpec((1, 3, C_DIM, mt), lambda b, m: (b, 0, 0, m)),
        pl.BlockSpec((1, 3, OFF_PAD, mt), lambda b, m: (b, 0, 0, m)),
        pl.BlockSpec((1, 3, C_DIM, 1), lambda b, m: (b, 0, 0, 0)),
    ]
    out_shape = (
        jax.ShapeDtypeStruct((B, 3, C_DIM, Mp), jnp.float32),
        jax.ShapeDtypeStruct((B, 3, OFF_PAD, Mp), jnp.float32),
        jax.ShapeDtypeStruct((B, 3, C_DIM, 1), jnp.float32),
    )
    return pl.pallas_call(
        sim3_policy_kernel,
        grid=grid,
        in_specs=in_specs,
        out_specs=out_specs,
        out_shape=out_shape,
        compiler_params=pltpu.CompilerParams(
            dimension_semantics=("parallel", "arbitrary"),
            vmem_limit_bytes=32 * 1024 * 1024),
    )(pcn, qst, dst, mag, *weights)


# -------------------------- plain-JAX VN helpers (grip_fc) ------------------
def vec_lna_jax(v, s, W, Wd, Ws, gamma, beta, Wa):
    # v: (B, Cin, 3), s: (B, S) or None. Per-batch only (no M dimension).
    q = jnp.einsum('oi,bid->bod', W, v)
    if s is not None:
        dvec = jnp.einsum('oi,bid->bod', Wd, v)
        inv_dn = jax.lax.rsqrt(jnp.sum(dvec * dvec, axis=-1, keepdims=True) + EPS)
        mag = jnp.einsum('os,bs->bo', Ws, s)
        q = q + mag[..., None] * dvec * inv_dn
    n2 = jnp.sum(q * q, axis=-1) + EPS                       # (B, C)
    n = jnp.sqrt(n2)
    mu = jnp.mean(n, axis=1, keepdims=True)
    var = jnp.maximum(jnp.mean(n2, axis=1, keepdims=True) - mu * mu, 0.0)
    nln = (n - mu) * jax.lax.rsqrt(var + EPS) * gamma + beta
    q = q * (nln / n)[..., None]
    d = jnp.einsum('oi,bid->bod', Wa, q)
    dot = jnp.sum(q * d, axis=-1, keepdims=True)
    dsq = jnp.sum(d * d, axis=-1, keepdims=True) + EPS
    return q - jnp.minimum(dot, 0.0) / dsq * d


# ------------------------------- parameters --------------------------------
def init_params(key):
    def lin(k, out_d, in_d):
        return jax.random.normal(k, (out_d, in_d), jnp.float32) / jnp.sqrt(float(in_d))
    ks = jax.random.split(key, 20)
    p = {}
    # synthetic encoder per-point layer
    p['we'] = lin(ks[0], C_DIM, CPC)
    p['ge'] = jnp.ones((C_DIM, 1), jnp.float32)
    p['be'] = jnp.zeros((C_DIM, 1), jnp.float32)
    p['wea'] = lin(ks[1], C_DIM, C_DIM)
    # xyz_fc: VecLNA(CIN->H, s_in) -> VecLNA(H->H) -> VecLinear(H->N_OUT)
    p['w1'] = lin(ks[2], HIDDEN, CIN)
    p['w1d'] = lin(ks[3], HIDDEN, CIN)
    p['w1s'] = lin(ks[4], HIDDEN, N_SCAL)
    p['g1'] = jnp.ones((HIDDEN, 1), jnp.float32)
    p['b1'] = jnp.zeros((HIDDEN, 1), jnp.float32)
    p['w1a'] = lin(ks[5], HIDDEN, HIDDEN)
    p['w2'] = lin(ks[6], HIDDEN, HIDDEN)
    p['g2'] = jnp.ones((HIDDEN, 1), jnp.float32)
    p['b2'] = jnp.zeros((HIDDEN, 1), jnp.float32)
    p['w2a'] = lin(ks[7], HIDDEN, HIDDEN)
    p['w3'] = lin(ks[8], N_OUT, HIDDEN)
    # grip_fc: VecLNA(CIN->H, s_in) -> VecLNA(H->H) -> VecLinear(H->0, s_out=NUM_EEF)
    p['wg1'] = lin(ks[9], HIDDEN, CIN)
    p['wg1d'] = lin(ks[10], HIDDEN, CIN)
    p['wg1s'] = lin(ks[11], HIDDEN, N_SCAL)
    p['gg1'] = jnp.ones((HIDDEN,), jnp.float32)
    p['bg1'] = jnp.zeros((HIDDEN,), jnp.float32)
    p['wg1a'] = lin(ks[12], HIDDEN, HIDDEN)
    p['wg2'] = lin(ks[13], HIDDEN, HIDDEN)
    p['gg2'] = jnp.ones((HIDDEN,), jnp.float32)
    p['bg2'] = jnp.zeros((HIDDEN,), jnp.float32)
    p['wg2a'] = lin(ks[14], HIDDEN, HIDDEN)
    p['wgq'] = lin(ks[15], NUM_EEF, HIDDEN)
    p['wgk'] = lin(ks[16], NUM_EEF, HIDDEN)
    return p


# --------------------------------- forward ---------------------------------
def sim3_policy_forward(params, obs, predict_action=True):
    pc = obs['pc']                                        # (B, M, 3)
    z_pos, z_dir, z_scalar = obs['z_pos'], obs['z_dir'], obs['z_scalar']
    B, M, _ = pc.shape

    # ---- SIM3Vec4Latent (simplified synthetic encoder): center/scale + VN feats
    center = jnp.mean(pc, axis=1, keepdims=True)                         # (B,1,3)
    pc_c = pc - center
    scale = jnp.mean(jnp.linalg.norm(pc_c, axis=-1), axis=1) / PC_SCALE  # (B,)
    pc_n = pc_c / scale[:, None, None]
    a = jnp.mean(pc_n * jnp.linalg.norm(pc_n, axis=-1, keepdims=True), axis=1)  # (B,3)
    a_b = jnp.broadcast_to(a[:, None, :], pc_n.shape)
    ch = jnp.stack([pc_n, a_b, jnp.cross(pc_n, a_b)], axis=2)            # (B,M,CPC,3)
    pcn = jnp.transpose(ch, (0, 3, 2, 1))                                 # (B,3,CPC,M)

    # ---- state normalization (exactly as in the torch forward)
    z_pos_n = (z_pos - center) / scale[:, None, None]                    # (B,num_eef,3)
    z_state = jnp.concatenate([z_pos_n, z_dir], axis=1) if DOF == 7 else z_pos_n

    # point-independent part of xyz_fc layer-1 (glue; tiny per-batch matvecs)
    w1_st = params['w1'][:, C_DIM:]
    w1d_st = params['w1d'][:, C_DIM:]
    qst = jnp.einsum('oi,bid->bdo', w1_st, z_state)[..., None]           # (B,3,H,1)
    dst = jnp.einsum('oi,bid->bdo', w1d_st, z_state)[..., None]          # (B,3,H,1)
    mag = jnp.einsum('os,bs->bo', params['w1s'], z_scalar)[..., None]    # (B,H,1)

    # stacked / padded weights for fused in-kernel matmuls
    w1qd = jnp.concatenate([params['w1'][:, :C_DIM], params['w1d'][:, :C_DIM]], axis=0)
    w3p = jnp.zeros((OFF_PAD, HIDDEN), jnp.float32).at[:N_OUT].set(params['w3'])

    weights = [params['we'], params['ge'], params['be'], params['wea'],
               w1qd, params['g1'], params['b1'], params['w1a'],
               params['w2'], params['g2'], params['b2'], params['w2a'], w3p]

    pf_k, off_k, so3_sum = _call_kernel(pcn, qst, dst, mag, weights)

    point_feat = jnp.transpose(pf_k[..., :M], (0, 2, 1, 3))              # (B,C,3,M)
    so3 = jnp.transpose(so3_sum[..., 0], (0, 2, 1)) / M                  # (B,C,3)

    # ---- grip_fc (per-batch, no M dimension; plain JAX)
    v_g = jnp.concatenate([so3, z_state], axis=1)                         # (B,CIN,3)
    h = vec_lna_jax(v_g, z_scalar, params['wg1'], params['wg1d'], params['wg1s'],
                    params['gg1'], params['bg1'], params['wg1a'])
    h = vec_lna_jax(h, None, params['wg2'], None, None,
                    params['gg2'], params['bg2'], params['wg2a'])
    sq = jnp.einsum('oi,bid->bod', params['wgq'], h)
    sk = jnp.einsum('oi,bid->bod', params['wgk'], h)
    gripper_ac = jax.nn.sigmoid(jnp.sum(sq * sk, axis=-1))                # (B,NUM_EEF)

    # ---- offsets post-processing (matches torch reshape/permute/denorm)
    off_v = off_k[:, :, :N_OUT, :M]                                       # (B,3,N_OUT,M)
    offsets = jnp.transpose(off_v, (0, 3, 2, 1)).reshape(B, M, N_OUT * 3)
    cen = center if AC_MODE == 'abs' else 0.0
    xyz = offsets[..., :3] * scale[:, None, None] + cen
    offsets = jnp.concatenate([xyz, offsets[..., 3:]], axis=-1)

    ret = {'offsets': offsets, 'global_feat': so3, 'local_feat': point_feat,
           'min_scale': jnp.min(scale), 'mean_scale': jnp.mean(scale),
           'max_scale': jnp.max(scale)}
    if DOF > 3:
        ret['gripper_ac'] = gripper_ac
    if predict_action:
        acs = []
        for i in range(NUM_EEF):
            if DOF > 3:
                acs.append(gripper_ac[:, i:i + 1])
            # (note: torch code compares *normalized* z_pos against raw pc; replicated)
            dists = jnp.linalg.norm(z_pos_n[:, i:i + 1, :] - pc, axis=-1)  # (B,M)
            idx = jnp.argmin(dists, axis=1)
            acs.append(offsets[jnp.arange(B), idx])
        ret['ac'] = jnp.concatenate(acs, axis=1)
    return ret


# ----------------------------------- main -----------------------------------
if __name__ == "__main__":
    B, M = 2, 256
    key = jax.random.PRNGKey(0)
    k_pc, k_zp, k_zd, k_zs, k_par = jax.random.split(key, 5)
    pc = jax.random.normal(k_pc, (B, M, 3), jnp.float32) * 0.3 \
        + jnp.array([0.2, -0.1, 0.5], jnp.float32)
    z_pos = jax.random.normal(k_zp, (B, NUM_EEF, 3), jnp.float32) * 0.3
    z_dir = jax.random.normal(k_zd, (B, 3 * NUM_EEF, 3), jnp.float32)
    z_dir = z_dir / jnp.linalg.norm(z_dir, axis=-1, keepdims=True)
    z_scalar = jax.random.uniform(k_zs, (B, NUM_EEF), jnp.float32)

    params = init_params(k_par)
    obs = {'pc': pc, 'z_pos': z_pos, 'z_dir': z_dir, 'z_scalar': z_scalar}

    ret = sim3_policy_forward(params, obs, predict_action=True)
    jax.block_until_ready(ret)

    assert ret['offsets'].shape == (B, M, N_OUT * 3)
    assert ret['local_feat'].shape == (B, C_DIM, 3, M)
    assert ret['global_feat'].shape == (B, C_DIM, 3)
    assert ret['gripper_ac'].shape == (B, NUM_EEF)
    assert ret['ac'].shape == (B, NUM_EEF * (1 + N_OUT * 3))
    assert jnp.all(jnp.isfinite(ret['offsets']))
    print("KERNEL_OK")
</pallas_src>

<mosaic_0001>
module attributes {stable_mosaic.version = 11 : i64} {
  func.func @sim3_policy_kernel(%arg0: i32, %arg1: i32, %arg2: memref<1x3x3x256xf32, #tpu.memory_space<vmem>>, %arg3: memref<1x3x32x1xf32, #tpu.memory_space<vmem>>, %arg4: memref<1x3x32x1xf32, #tpu.memory_space<vmem>>, %arg5: memref<1x32x1xf32, #tpu.memory_space<vmem>>, %arg6: memref<32x3xf32, #tpu.memory_space<vmem>>, %arg7: memref<32x1xf32, #tpu.memory_space<vmem>>, %arg8: memref<32x1xf32, #tpu.memory_space<vmem>>, %arg9: memref<32x32xf32, #tpu.memory_space<vmem>>, %arg10: memref<64x32xf32, #tpu.memory_space<vmem>>, %arg11: memref<32x1xf32, #tpu.memory_space<vmem>>, %arg12: memref<32x1xf32, #tpu.memory_space<vmem>>, %arg13: memref<32x32xf32, #tpu.memory_space<vmem>>, %arg14: memref<32x32xf32, #tpu.memory_space<vmem>>, %arg15: memref<32x1xf32, #tpu.memory_space<vmem>>, %arg16: memref<32x1xf32, #tpu.memory_space<vmem>>, %arg17: memref<32x32xf32, #tpu.memory_space<vmem>>, %arg18: memref<8x32xf32, #tpu.memory_space<vmem>>, %arg19: memref<1x3x32x256xf32, #tpu.memory_space<vmem>>, %arg20: memref<1x3x8x256xf32, #tpu.memory_space<vmem>>, %arg21: memref<1x3x32x1xf32, #tpu.memory_space<vmem>>) attributes {dimension_semantics = [#tpu.dimension_semantics<parallel>, #tpu.dimension_semantics<arbitrary>], iteration_bounds = array<i64: 2, 1>, scalar_prefetch = 0 : i64, scratch_operands = 0 : i64, tpu.core_type = #tpu.core_type<tc>, window_params = [{transform_indices = @transform_0, window_bounds = array<i64: 1, 3, 3, 256>}, {transform_indices = @transform_1, window_bounds = array<i64: 1, 3, 32, 1>}, {transform_indices = @transform_2, window_bounds = array<i64: 1, 3, 32, 1>}, {transform_indices = @transform_3, window_bounds = array<i64: 1, 32, 1>}, {pipeline_mode = #tpu.pipeline_mode<synchronous>, transform_indices = @transform_4, window_bounds = array<i64: 32, 3>}, {pipeline_mode = #tpu.pipeline_mode<synchronous>, transform_indices = @transform_5, window_bounds = array<i64: 32, 1>}, {pipeline_mode = #tpu.pipeline_mode<synchronous>, transform_indices = @transform_6, window_bounds = array<i64: 32, 1>}, {pipeline_mode = #tpu.pipeline_mode<synchronous>, transform_indices = @transform_7, window_bounds = array<i64: 32, 32>}, {pipeline_mode = #tpu.pipeline_mode<synchronous>, transform_indices = @transform_8, window_bounds = array<i64: 64, 32>}, {pipeline_mode = #tpu.pipeline_mode<synchronous>, transform_indices = @transform_9, window_bounds = array<i64: 32, 1>}, {pipeline_mode = #tpu.pipeline_mode<synchronous>, transform_indices = @transform_10, window_bounds = array<i64: 32, 1>}, {pipeline_mode = #tpu.pipeline_mode<synchronous>, transform_indices = @transform_11, window_bounds = array<i64: 32, 32>}, {pipeline_mode = #tpu.pipeline_mode<synchronous>, transform_indices = @transform_12, window_bounds = array<i64: 32, 32>}, {pipeline_mode = #tpu.pipeline_mode<synchronous>, transform_indices = @transform_13, window_bounds = array<i64: 32, 1>}, {pipeline_mode = #tpu.pipeline_mode<synchronous>, transform_indices = @transform_14, window_bounds = array<i64: 32, 1>}, {pipeline_mode = #tpu.pipeline_mode<synchronous>, transform_indices = @transform_15, window_bounds = array<i64: 32, 32>}, {pipeline_mode = #tpu.pipeline_mode<synchronous>, transform_indices = @transform_16, window_bounds = array<i64: 8, 32>}, {transform_indices = @transform_17, window_bounds = array<i64: 1, 3, 32, 256>}, {transform_indices = @transform_18, window_bounds = array<i64: 1, 3, 8, 256>}, {transform_indices = @transform_19, window_bounds = array<i64: 1, 3, 32, 1>}]} {
    %c0_i32 = arith.constant 0 : i32
    %0 = arith.cmpi eq, %arg1, %c0_i32 : i32
    %1 = arith.extui %0 : i1 to i32
    %c0_i32_0 = arith.constant 0 : i32
    %2 = arith.cmpi ne, %1, %c0_i32_0 : i32
    scf.if %2 {
      %cst_140 = arith.constant 0.000000e+00 : f32
      %322 = vector.broadcast %cst_140 : f32 to vector<1x3x32x1xf32>
      %c0_141 = arith.constant 0 : index
      %c0_142 = arith.constant 0 : index
      %c0_143 = arith.constant 0 : index
      %c0_144 = arith.constant 0 : index
      %323 = vector.load %arg21[%c0_141, %c0_142, %c0_143, %c0_144] : memref<1x3x32x1xf32, #tpu.memory_space<vmem>>, vector<1x3x32x1xf32>
      tpu.vector_store %arg21[%c0_141, %c0_142, %c0_143, %c0_144], %322 {strides = array<i32>} : memref<1x3x32x1xf32, #tpu.memory_space<vmem>>, vector<1x3x32x1xf32>,
    } else {
    }
    %c0 = arith.constant 0 : index
    %c0_1 = arith.constant 0 : index
    %c0_2 = arith.constant 0 : index
    %c0_3 = arith.constant 0 : index
    %3 = vector.load %arg2[%c0, %c0_1, %c0_2, %c0_3] : memref<1x3x3x256xf32, #tpu.memory_space<vmem>>, vector<1x3x3x256xf32>
    %4 = vector.shape_cast %3 : vector<1x3x3x256xf32> to vector<3x3x256xf32>
    %5 = vector.extract_strided_slice %4 {offsets = [0, 0, 0], sizes = [1, 3, 256], strides = [1, 1, 1]} : vector<3x3x256xf32> to vector<1x3x256xf32>
    %6 = vector.shape_cast %5 : vector<1x3x256xf32> to vector<3x256xf32>
    %7 = vector.extract_strided_slice %4 {offsets = [1, 0, 0], sizes = [1, 3, 256], strides = [1, 1, 1]} : vector<3x3x256xf32> to vector<1x3x256xf32>
    %8 = vector.shape_cast %7 : vector<1x3x256xf32> to vector<3x256xf32>
    %9 = vector.extract_strided_slice %4 {offsets = [2, 0, 0], sizes = [1, 3, 256], strides = [1, 1, 1]} : vector<3x3x256xf32> to vector<1x3x256xf32>
    %10 = vector.shape_cast %9 : vector<1x3x256xf32> to vector<3x256xf32>
    %11 = tpu.concatenate %6, %8, %10 in 1 : vector<3x256xf32>, vector<3x256xf32>, vector<3x256xf32> -> vector<3x768xf32>
    %c0_4 = arith.constant 0 : index
    %c0_5 = arith.constant 0 : index
    %12 = vector.load %arg6[%c0_4, %c0_5] : memref<32x3xf32, #tpu.memory_space<vmem>>, vector<32x3xf32>
    %cst = arith.constant dense<0.000000e+00> : vector<32x768xf32>
    %13 = tpu.matmul %12, %11, %cst {dimension_numbers = #tpu.dot_dimension_numbers<[1], [0], [0], [1], [0, 0, 1, 1], [], []>} : vector<32x3xf32>, vector<3x768xf32>, vector<32x768xf32> -> vector<32x768xf32>
    %c0_6 = arith.constant 0 : index
    %c0_7 = arith.constant 0 : index
    %14 = vector.load %arg7[%c0_6, %c0_7] : memref<32x1xf32, #tpu.memory_space<vmem>>, vector<32x1xf32>
    %c0_8 = arith.constant 0 : index
    %c0_9 = arith.constant 0 : index
    %15 = vector.load %arg8[%c0_8, %c0_9] : memref<32x1xf32, #tpu.memory_space<vmem>>, vector<32x1xf32>
    %16 = vector.extract_strided_slice %13 {offsets = [0, 0], sizes = [32, 256], strides = [1, 1]} : vector<32x768xf32> to vector<32x256xf32>
    %17 = vector.extract_strided_slice %13 {offsets = [0, 256], sizes = [32, 256], strides = [1, 1]} : vector<32x768xf32> to vector<32x256xf32>
    %18 = vector.extract_strided_slice %13 {offsets = [0, 512], sizes = [32, 256], strides = [1, 1]} : vector<32x768xf32> to vector<32x256xf32>
    %19 = arith.mulf %16, %16 : vector<32x256xf32>
    %20 = arith.mulf %17, %17 : vector<32x256xf32>
    %21 = arith.addf %19, %20 : vector<32x256xf32>
    %22 = arith.mulf %18, %18 : vector<32x256xf32>
    %23 = arith.addf %21, %22 : vector<32x256xf32>
    %cst_10 = arith.constant 9.99999997E-7 : f32
    %24 = vector.broadcast %cst_10 : f32 to vector<32x256xf32>
    %25 = arith.addf %23, %24 : vector<32x256xf32>
    %26 = math.sqrt %25 : vector<32x256xf32>
    %cst_11 = arith.constant dense<0.000000e+00> : vector<256xf32>
    %27 = vector.multi_reduction <add>, %26, %cst_11 [0] : vector<32x256xf32> to vector<256xf32>
    %28 = vector.shape_cast %27 : vector<256xf32> to vector<1x256xf32>
    %cst_12 = arith.constant 3.200000e+01 : f32
    %29 = vector.broadcast %cst_12 : f32 to vector<1x256xf32>
    %30 = arith.divf %28, %29 : vector<1x256xf32>
    %cst_13 = arith.constant dense<0.000000e+00> : vector<256xf32>
    %31 = vector.multi_reduction <add>, %25, %cst_13 [0] : vector<32x256xf32> to vector<256xf32>
    %32 = vector.shape_cast %31 : vector<256xf32> to vector<1x256xf32>
    %cst_14 = arith.constant 3.200000e+01 : f32
    %33 = vector.broadcast %cst_14 : f32 to vector<1x256xf32>
    %34 = arith.divf %32, %33 : vector<1x256xf32>
    %35 = arith.mulf %30, %30 : vector<1x256xf32>
    %36 = arith.subf %34, %35 : vector<1x256xf32>
    %cst_15 = arith.constant 0.000000e+00 : f32
    %37 = vector.broadcast %cst_15 : f32 to vector<1x256xf32>
    %38 = arith.maximumf %36, %37 : vector<1x256xf32>
    %39 = vector.broadcast %30 : vector<1x256xf32> to vector<32x256xf32>
    %40 = arith.subf %26, %39 : vector<32x256xf32>
    %cst_16 = arith.constant 9.99999997E-7 : f32
    %41 = vector.broadcast %cst_16 : f32 to vector<1x256xf32>
    %42 = arith.addf %38, %41 : vector<1x256xf32>
    %43 = math.rsqrt %42 : vector<1x256xf32>
    %44 = vector.broadcast %43 : vector<1x256xf32> to vector<32x256xf32>
    %45 = arith.mulf %40, %44 : vector<32x256xf32>
    %46 = vector.broadcast %14 : vector<32x1xf32> to vector<32x256xf32>
    %47 = arith.mulf %45, %46 : vector<32x256xf32>
    %48 = vector.broadcast %15 : vector<32x1xf32> to vector<32x256xf32>
    %49 = arith.addf %47, %48 : vector<32x256xf32>
    %50 = tpu.reciprocal %26 {approx = true} : vector<32x256xf32> -> vector<32x256xf32>
    %51 = arith.mulf %49, %50 : vector<32x256xf32>
    %52 = tpu.concatenate %51, %51, %51 in 1 : vector<32x256xf32>, vector<32x256xf32>, vector<32x256xf32> -> vector<32x768xf32>
    %53 = arith.mulf %13, %52 : vector<32x768xf32>
    %c0_17 = arith.constant 0 : index
    %c0_18 = arith.constant 0 : index
    %54 = vector.load %arg9[%c0_17, %c0_18] : memref<32x32xf32, #tpu.memory_space<vmem>>, vector<32x32xf32>
    %cst_19 = arith.constant dense<0.000000e+00> : vector<32x768xf32>
    %55 = tpu.matmul %54, %53, %cst_19 {dimension_numbers = #tpu.dot_dimension_numbers<[1], [0], [0], [1], [0, 0, 1, 1], [], []>} : vector<32x32xf32>, vector<32x768xf32>, vector<32x768xf32> -> vector<32x768xf32>
    %56 = vector.extract_strided_slice %53 {offsets = [0, 0], sizes = [32, 256], strides = [1, 1]} : vector<32x768xf32> to vector<32x256xf32>
    %57 = vector.extract_strided_slice %53 {offsets = [0, 256], sizes = [32, 256], strides = [1, 1]} : vector<32x768xf32> to vector<32x256xf32>
    %58 = vector.extract_strided_slice %53 {offsets = [0, 512], sizes = [32, 256], strides = [1, 1]} : vector<32x768xf32> to vector<32x256xf32>
    %59 = vector.extract_strided_slice %55 {offsets = [0, 0], sizes = [32, 256], strides = [1, 1]} : vector<32x768xf32> to vector<32x256xf32>
    %60 = vector.extract_strided_slice %55 {offsets = [0, 256], sizes = [32, 256], strides = [1, 1]} : vector<32x768xf32> to vector<32x256xf32>
    %61 = vector.extract_strided_slice %55 {offsets = [0, 512], sizes = [32, 256], strides = [1, 1]} : vector<32x768xf32> to vector<32x256xf32>
    %62 = arith.mulf %56, %59 : vector<32x256xf32>
    %63 = arith.mulf %57, %60 : vector<32x256xf32>
    %64 = arith.addf %62, %63 : vector<32x256xf32>
    %65 = arith.mulf %58, %61 : vector<32x256xf32>
    %66 = arith.addf %64, %65 : vector<32x256xf32>
    %67 = arith.mulf %59, %59 : vector<32x256xf32>
    %68 = arith.mulf %60, %60 : vector<32x256xf32>
    %69 = arith.addf %67, %68 : vector<32x256xf32>
    %70 = arith.mulf %61, %61 : vector<32x256xf32>
    %71 = arith.addf %69, %70 : vector<32x256xf32>
    %cst_20 = arith.constant 9.99999997E-7 : f32
    %72 = vector.broadcast %cst_20 : f32 to vector<32x256xf32>
    %73 = arith.addf %71, %72 : vector<32x256xf32>
    %cst_21 = arith.constant 0.000000e+00 : f32
    %74 = vector.broadcast %cst_21 : f32 to vector<32x256xf32>
    %75 = arith.minimumf %66, %74 : vector<32x256xf32>
    %76 = tpu.reciprocal %73 {approx = true} : vector<32x256xf32> -> vector<32x256xf32>
    %77 = arith.mulf %75, %76 : vector<32x256xf32>
    %78 = tpu.concatenate %77, %77, %77 in 1 : vector<32x256xf32>, vector<32x256xf32>, vector<32x256xf32> -> vector<32x768xf32>
    %79 = arith.mulf %78, %55 : vector<32x768xf32>
    %80 = arith.subf %53, %79 : vector<32x768xf32>
    %81 = vector.extract_strided_slice %80 {offsets = [0, 0], sizes = [32, 256], strides = [1, 1]} : vector<32x768xf32> to vector<32x256xf32>
    %c0_22 = arith.constant 0 : index
    %c0_23 = arith.constant 0 : index
    %c0_24 = arith.constant 0 : index
    %c0_25 = arith.constant 0 : index
    %82 = vector.load %arg19[%c0_22, %c0_23, %c0_24, %c0_25] : memref<1x3x32x256xf32, #tpu.memory_space<vmem>>, vector<1x1x32x256xf32>
    %83 = vector.shape_cast %82 : vector<1x1x32x256xf32> to vector<32x256xf32>
    %84 = vector.shape_cast %81 : vector<32x256xf32> to vector<1x1x32x256xf32>
    tpu.vector_store %arg19[%c0_22, %c0_23, %c0_24, %c0_25], %84 {strides = array<i32>} : memref<1x3x32x256xf32, #tpu.memory_space<vmem>>, vector<1x1x32x256xf32>,
    %c0_26 = arith.constant 0 : index
    %c0_27 = arith.constant 0 : index
    %c0_28 = arith.constant 0 : index
    %c0_29 = arith.constant 0 : index
    %85 = vector.load %arg21[%c0_26, %c0_27, %c0_28, %c0_29] : memref<1x3x32x1xf32, #tpu.memory_space<vmem>>, vector<1x1x32x1xf32>
    %86 = vector.shape_cast %85 : vector<1x1x32x1xf32> to vector<32x1xf32>
    %cst_30 = arith.constant dense<0.000000e+00> : vector<32xf32>
    %87 = vector.multi_reduction <add>, %81, %cst_30 [1] : vector<32x256xf32> to vector<32xf32>
    %88 = vector.shape_cast %87 : vector<32xf32> to vector<32x1xf32>
    %89 = arith.addf %86, %88 : vector<32x1xf32>
    %c0_31 = arith.constant 0 : index
    %c0_32 = arith.constant 0 : index
    %c0_33 = arith.constant 0 : index
    %c0_34 = arith.constant 0 : index
    %90 = vector.load %arg21[%c0_31, %c0_32, %c0_33, %c0_34] : memref<1x3x32x1xf32, #tpu.memory_space<vmem>>, vector<1x1x32x1xf32>
    %91 = vector.shape_cast %90 : vector<1x1x32x1xf32> to vector<32x1xf32>
    %92 = vector.shape_cast %89 : vector<32x1xf32> to vector<1x1x32x1xf32>
    tpu.vector_store %arg21[%c0_31, %c0_32, %c0_33, %c0_34], %92 {strides = array<i32>} : memref<1x3x32x1xf32, #tpu.memory_space<vmem>>, vector<1x1x32x1xf32>,
    %93 = vector.extract_strided_slice %80 {offsets = [0, 256], sizes = [32, 256], strides = [1, 1]} : vector<32x768xf32> to vector<32x256xf32>
    %c0_35 = arith.constant 0 : index
    %c1 = arith.constant 1 : index
    %c0_36 = arith.constant 0 : index
    %c0_37 = arith.constant 0 : index
    %94 = vector.load %arg19[%c0_35, %c1, %c0_36, %c0_37] : memref<1x3x32x256xf32, #tpu.memory_space<vmem>>, vector<1x1x32x256xf32>
    %95 = vector.shape_cast %94 : vector<1x1x32x256xf32> to vector<32x256xf32>
    %96 = vector.shape_cast %93 : vector<32x256xf32> to vector<1x1x32x256xf32>
    tpu.vector_store %arg19[%c0_35, %c1, %c0_36, %c0_37], %96 {strides = array<i32>} : memref<1x3x32x256xf32, #tpu.memory_space<vmem>>, vector<1x1x32x256xf32>,
    %c0_38 = arith.constant 0 : index
    %c1_39 = arith.constant 1 : index
    %c0_40 = arith.constant 0 : index
    %c0_41 = arith.constant 0 : index
    %97 = vector.load %arg21[%c0_38, %c1_39, %c0_40, %c0_41] : memref<1x3x32x1xf32, #tpu.memory_space<vmem>>, vector<1x1x32x1xf32>
    %98 = vector.shape_cast %97 : vector<1x1x32x1xf32> to vector<32x1xf32>
    %cst_42 = arith.constant dense<0.000000e+00> : vector<32xf32>
    %99 = vector.multi_reduction <add>, %93, %cst_42 [1] : vector<32x256xf32> to vector<32xf32>
    %100 = vector.shape_cast %99 : vector<32xf32> to vector<32x1xf32>
    %101 = arith.addf %98, %100 : vector<32x1xf32>
    %c0_43 = arith.constant 0 : index
    %c1_44 = arith.constant 1 : index
    %c0_45 = arith.constant 0 : index
    %c0_46 = arith.constant 0 : index
    %102 = vector.load %arg21[%c0_43, %c1_44, %c0_45, %c0_46] : memref<1x3x32x1xf32, #tpu.memory_space<vmem>>, vector<1x1x32x1xf32>
    %103 = vector.shape_cast %102 : vector<1x1x32x1xf32> to vector<32x1xf32>
    %104 = vector.shape_cast %101 : vector<32x1xf32> to vector<1x1x32x1xf32>
    tpu.vector_store %arg21[%c0_43, %c1_44, %c0_45, %c0_46], %104 {strides = array<i32>} : memref<1x3x32x1xf32, #tpu.memory_space<vmem>>, vector<1x1x32x1xf32>,
    %105 = vector.extract_strided_slice %80 {offsets = [0, 512], sizes = [32, 256], strides = [1, 1]} : vector<32x768xf32> to vector<32x256xf32>
    %c0_47 = arith.constant 0 : index
    %c2 = arith.constant 2 : index
    %c0_48 = arith.constant 0 : index
    %c0_49 = arith.constant 0 : index
    %106 = vector.load %arg19[%c0_47, %c2, %c0_48, %c0_49] : memref<1x3x32x256xf32, #tpu.memory_space<vmem>>, vector<1x1x32x256xf32>
    %107 = vector.shape_cast %106 : vector<1x1x32x256xf32> to vector<32x256xf32>
    %108 = vector.shape_cast %105 : vector<32x256xf32> to vector<1x1x32x256xf32>
    tpu.vector_store %arg19[%c0_47, %c2, %c0_48, %c0_49], %108 {strides = array<i32>} : memref<1x3x32x256xf32, #tpu.memory_space<vmem>>, vector<1x1x32x256xf32>,
    %c0_50 = arith.constant 0 : index
    %c2_51 = arith.constant 2 : index
    %c0_52 = arith.constant 0 : index
    %c0_53 = arith.constant 0 : index
    %109 = vector.load %arg21[%c0_50, %c2_51, %c0_52, %c0_53] : memref<1x3x32x1xf32, #tpu.memory_space<vmem>>, vector<1x1x32x1xf32>
    %110 = vector.shape_cast %109 : vector<1x1x32x1xf32> to vector<32x1xf32>
    %cst_54 = arith.constant dense<0.000000e+00> : vector<32xf32>
    %111 = vector.multi_reduction <add>, %105, %cst_54 [1] : vector<32x256xf32> to vector<32xf32>
    %112 = vector.shape_cast %111 : vector<32xf32> to vector<32x1xf32>
    %113 = arith.addf %110, %112 : vector<32x1xf32>
    %c0_55 = arith.constant 0 : index
    %c2_56 = arith.constant 2 : index
    %c0_57 = arith.constant 0 : index
    %c0_58 = arith.constant 0 : index
    %114 = vector.load %arg21[%c0_55, %c2_56, %c0_57, %c0_58] : memref<1x3x32x1xf32, #tpu.memory_space<vmem>>, vector<1x1x32x1xf32>
    %115 = vector.shape_cast %114 : vector<1x1x32x1xf32> to vector<32x1xf32>
    %116 = vector.shape_cast %113 : vector<32x1xf32> to vector<1x1x32x1xf32>
    tpu.vector_store %arg21[%c0_55, %c2_56, %c0_57, %c0_58], %116 {strides = array<i32>} : memref<1x3x32x1xf32, #tpu.memory_space<vmem>>, vector<1x1x32x1xf32>,
    %c0_59 = arith.constant 0 : index
    %c0_60 = arith.constant 0 : index
    %117 = vector.load %arg10[%c0_59, %c0_60] : memref<64x32xf32, #tpu.memory_space<vmem>>, vector<64x32xf32>
    %cst_61 = arith.constant dense<0.000000e+00> : vector<64x768xf32>
    %118 = tpu.matmul %117, %80, %cst_61 {dimension_numbers = #tpu.dot_dimension_numbers<[1], [0], [0], [1], [0, 0, 1, 1], [], []>} : vector<64x32xf32>, vector<32x768xf32>, vector<64x768xf32> -> vector<64x768xf32>
    %119 = vector.extract_strided_slice %118 {offsets = [0, 0], sizes = [32, 256], strides = [1, 1]} : vector<64x768xf32> to vector<32x256xf32>
    %c0_62 = arith.constant 0 : index
    %c0_63 = arith.constant 0 : index
    %c0_64 = arith.constant 0 : index
    %c0_65 = arith.constant 0 : index
    %120 = vector.load %arg3[%c0_62, %c0_63, %c0_64, %c0_65] : memref<1x3x32x1xf32, #tpu.memory_space<vmem>>, vector<1x1x32x1xf32>
    %121 = vector.shape_cast %120 : vector<1x1x32x1xf32> to vector<32x1xf32>
    %122 = vector.broadcast %121 : vector<32x1xf32> to vector<32x256xf32>
    %123 = arith.addf %119, %122 : vector<32x256xf32>
    %124 = vector.extract_strided_slice %118 {offsets = [32, 0], sizes = [32, 256], strides = [1, 1]} : vector<64x768xf32> to vector<32x256xf32>
    %c0_66 = arith.constant 0 : index
    %c0_67 = arith.constant 0 : index
    %c0_68 = arith.constant 0 : index
    %c0_69 = arith.constant 0 : index
    %125 = vector.load %arg4[%c0_66, %c0_67, %c0_68, %c0_69] : memref<1x3x32x1xf32, #tpu.memory_space<vmem>>, vector<1x1x32x1xf32>
    %126 = vector.shape_cast %125 : vector<1x1x32x1xf32> to vector<32x1xf32>
    %127 = vector.broadcast %126 : vector<32x1xf32> to vector<32x256xf32>
    %128 = arith.addf %124, %127 : vector<32x256xf32>
    %129 = vector.extract_strided_slice %118 {offsets = [0, 256], sizes = [32, 256], strides = [1, 1]} : vector<64x768xf32> to vector<32x256xf32>
    %c0_70 = arith.constant 0 : index
    %c1_71 = arith.constant 1 : index
    %c0_72 = arith.constant 0 : index
    %c0_73 = arith.constant 0 : index
    %130 = vector.load %arg3[%c0_70, %c1_71, %c0_72, %c0_73] : memref<1x3x32x1xf32, #tpu.memory_space<vmem>>, vector<1x1x32x1xf32>
    %131 = vector.shape_cast %130 : vector<1x1x32x1xf32> to vector<32x1xf32>
    %132 = vector.broadcast %131 : vector<32x1xf32> to vector<32x256xf32>
    %133 = arith.addf %129, %132 : vector<32x256xf32>
    %134 = vector.extract_strided_slice %118 {offsets = [32, 256], sizes = [32, 256], strides = [1, 1]} : vector<64x768xf32> to vector<32x256xf32>
    %c0_74 = arith.constant 0 : index
    %c1_75 = arith.constant 1 : index
    %c0_76 = arith.constant 0 : index
    %c0_77 = arith.constant 0 : index
    %135 = vector.load %arg4[%c0_74, %c1_75, %c0_76, %c0_77] : memref<1x3x32x1xf32, #tpu.memory_space<vmem>>, vector<1x1x32x1xf32>
    %136 = vector.shape_cast %135 : vector<1x1x32x1xf32> to vector<32x1xf32>
    %137 = vector.broadcast %136 : vector<32x1xf32> to vector<32x256xf32>
    %138 = arith.addf %134, %137 : vector<32x256xf32>
    %139 = vector.extract_strided_slice %118 {offsets = [0, 512], sizes = [32, 256], strides = [1, 1]} : vector<64x768xf32> to vector<32x256xf32>
    %c0_78 = arith.constant 0 : index
    %c2_79 = arith.constant 2 : index
    %c0_80 = arith.constant 0 : index
    %c0_81 = arith.constant 0 : index
    %140 = vector.load %arg3[%c0_78, %c2_79, %c0_80, %c0_81] : memref<1x3x32x1xf32, #tpu.memory_space<vmem>>, vector<1x1x32x1xf32>
    %141 = vector.shape_cast %140 : vector<1x1x32x1xf32> to vector<32x1xf32>
    %142 = vector.broadcast %141 : vector<32x1xf32> to vector<32x256xf32>
    %143 = arith.addf %139, %142 : vector<32x256xf32>
    %144 = vector.extract_strided_slice %118 {offsets = [32, 512], sizes = [32, 256], strides = [1, 1]} : vector<64x768xf32> to vector<32x256xf32>
    %c0_82 = arith.constant 0 : index
    %c2_83 = arith.constant 2 : index
    %c0_84 = arith.constant 0 : index
    %c0_85 = arith.constant 0 : index
    %145 = vector.load %arg4[%c0_82, %c2_83, %c0_84, %c0_85] : memref<1x3x32x1xf32, #tpu.memory_space<vmem>>, vector<1x1x32x1xf32>
    %146 = vector.shape_cast %145 : vector<1x1x32x1xf32> to vector<32x1xf32>
    %147 = vector.broadcast %146 : vector<32x1xf32> to vector<32x256xf32>
    %148 = arith.addf %144, %147 : vector<32x256xf32>
    %149 = arith.mulf %128, %128 : vector<32x256xf32>
    %150 = arith.mulf %138, %138 : vector<32x256xf32>
    %151 = arith.addf %149, %150 : vector<32x256xf32>
    %152 = arith.mulf %148, %148 : vector<32x256xf32>
    %153 = arith.addf %151, %152 : vector<32x256xf32>
    %cst_86 = arith.constant 9.99999997E-7 : f32
    %154 = vector.broadcast %cst_86 : f32 to vector<32x256xf32>
    %155 = arith.addf %153, %154 : vector<32x256xf32>
    %156 = math.rsqrt %155 : vector<32x256xf32>
    %c0_87 = arith.constant 0 : index
    %c0_88 = arith.constant 0 : index
    %c0_89 = arith.constant 0 : index
    %157 = vector.load %arg5[%c0_87, %c0_88, %c0_89] : memref<1x32x1xf32, #tpu.memory_space<vmem>>, vector<1x32x1xf32>
    %158 = vector.shape_cast %157 : vector<1x32x1xf32> to vector<32x1xf32>
    %159 = vector.broadcast %158 : vector<32x1xf32> to vector<32x256xf32>
    %160 = arith.mulf %159, %128 : vector<32x256xf32>
    %161 = arith.mulf %160, %156 : vector<32x256xf32>
    %162 = arith.addf %123, %161 : vector<32x256xf32>
    %163 = vector.broadcast %158 : vector<32x1xf32> to vector<32x256xf32>
    %164 = arith.mulf %163, %138 : vector<32x256xf32>
    %165 = arith.mulf %164, %156 : vector<32x256xf32>
    %166 = arith.addf %133, %165 : vector<32x256xf32>
    %167 = vector.broadcast %158 : vector<32x1xf32> to vector<32x256xf32>
    %168 = arith.mulf %167, %148 : vector<32x256xf32>
    %169 = arith.mulf %168, %156 : vector<32x256xf32>
    %170 = arith.addf %143, %169 : vector<32x256xf32>
    %171 = tpu.concatenate %162, %166, %170 in 1 : vector<32x256xf32>, vector<32x256xf32>, vector<32x256xf32> -> vector<32x768xf32>
    %c0_90 = arith.constant 0 : index
    %c0_91 = arith.constant 0 : index
    %172 = vector.load %arg11[%c0_90, %c0_91] : memref<32x1xf32, #tpu.memory_space<vmem>>, vector<32x1xf32>
    %c0_92 = arith.constant 0 : index
    %c0_93 = arith.constant 0 : index
    %173 = vector.load %arg12[%c0_92, %c0_93] : memref<32x1xf32, #tpu.memory_space<vmem>>, vector<32x1xf32>
    %174 = vector.extract_strided_slice %171 {offsets = [0, 0], sizes = [32, 256], strides = [1, 1]} : vector<32x768xf32> to vector<32x256xf32>
    %175 = vector.extract_strided_slice %171 {offsets = [0, 256], sizes = [32, 256], strides = [1, 1]} : vector<32x768xf32> to vector<32x256xf32>
    %176 = vector.extract_strided_slice %171 {offsets = [0, 512], sizes = [32, 256], strides = [1, 1]} : vector<32x768xf32> to vector<32x256xf32>
    %177 = arith.mulf %174, %174 : vector<32x256xf32>
    %178 = arith.mulf %175, %175 : vector<32x256xf32>
    %179 = arith.addf %177, %178 : vector<32x256xf32>
    %180 = arith.mulf %176, %176 : vector<32x256xf32>
    %181 = arith.addf %179, %180 : vector<32x256xf32>
    %cst_94 = arith.constant 9.99999997E-7 : f32
    %182 = vector.broadcast %cst_94 : f32 to vector<32x256xf32>
    %183 = arith.addf %181, %182 : vector<32x256xf32>
    %184 = math.sqrt %183 : vector<32x256xf32>
    %cst_95 = arith.constant dense<0.000000e+00> : vector<256xf32>
    %185 = vector.multi_reduction <add>, %184, %cst_95 [0] : vector<32x256xf32> to vector<256xf32>
    %186 = vector.shape_cast %185 : vector<256xf32> to vector<1x256xf32>
    %cst_96 = arith.constant 3.200000e+01 : f32
    %187 = vector.broadcast %cst_96 : f32 to vector<1x256xf32>
    %188 = arith.divf %186, %187 : vector<1x256xf32>
    %cst_97 = arith.constant dense<0.000000e+00> : vector<256xf32>
    %189 = vector.multi_reduction <add>, %183, %cst_97 [0] : vector<32x256xf32> to vector<256xf32>
    %190 = vector.shape_cast %189 : vector<256xf32> to vector<1x256xf32>
    %cst_98 = arith.constant 3.200000e+01 : f32
    %191 = vector.broadcast %cst_98 : f32 to vector<1x256xf32>
    %192 = arith.divf %190, %191 : vector<1x256xf32>
    %193 = arith.mulf %188, %188 : vector<1x256xf32>
    %194 = arith.subf %192, %193 : vector<1x256xf32>
    %cst_99 = arith.constant 0.000000e+00 : f32
    %195 = vector.broadcast %cst_99 : f32 to vector<1x256xf32>
    %196 = arith.maximumf %194, %195 : vector<1x256xf32>
    %197 = vector.broadcast %188 : vector<1x256xf32> to vector<32x256xf32>
    %198 = arith.subf %184, %197 : vector<32x256xf32>
    %cst_100 = arith.constant 9.99999997E-7 : f32
    %199 = vector.broadcast %cst_100 : f32 to vector<1x256xf32>
    %200 = arith.addf %196, %199 : vector<1x256xf32>
    %201 = math.rsqrt %200 : vector<1x256xf32>
    %202 = vector.broadcast %201 : vector<1x256xf32> to vector<32x256xf32>
    %203 = arith.mulf %198, %202 : vector<32x256xf32>
    %204 = vector.broadcast %172 : vector<32x1xf32> to vector<32x256xf32>
    %205 = arith.mulf %203, %204 : vector<32x256xf32>
    %206 = vector.broadcast %173 : vector<32x1xf32> to vector<32x256xf32>
    %207 = arith.addf %205, %206 : vector<32x256xf32>
    %208 = tpu.reciprocal %184 {approx = true} : vector<32x256xf32> -> vector<32x256xf32>
    %209 = arith.mulf %207, %208 : vector<32x256xf32>
    %210 = tpu.concatenate %209, %209, %209 in 1 : vector<32x256xf32>, vector<32x256xf32>, vector<32x256xf32> -> vector<32x768xf32>
    %211 = arith.mulf %171, %210 : vector<32x768xf32>
    %c0_101 = arith.constant 0 : index
    %c0_102 = arith.constant 0 : index
    %212 = vector.load %arg13[%c0_101, %c0_102] : memref<32x32xf32, #tpu.memory_space<vmem>>, vector<32x32xf32>
    %cst_103 = arith.constant dense<0.000000e+00> : vector<32x768xf32>
    %213 = tpu.matmul %212, %211, %cst_103 {dimension_numbers = #tpu.dot_dimension_numbers<[1], [0], [0], [1], [0, 0, 1, 1], [], []>} : vector<32x32xf32>, vector<32x768xf32>, vector<32x768xf32> -> vector<32x768xf32>
    %214 = vector.extract_strided_slice %211 {offsets = [0, 0], sizes = [32, 256], strides = [1, 1]} : vector<32x768xf32> to vector<32x256xf32>
    %215 = vector.extract_strided_slice %211 {offsets = [0, 256], sizes = [32, 256], strides = [1, 1]} : vector<32x768xf32> to vector<32x256xf32>
    %216 = vector.extract_strided_slice %211 {offsets = [0, 512], sizes = [32, 256], strides = [1, 1]} : vector<32x768xf32> to vector<32x256xf32>
    %217 = vector.extract_strided_slice %213 {offsets = [0, 0], sizes = [32, 256], strides = [1, 1]} : vector<32x768xf32> to vector<32x256xf32>
    %218 = vector.extract_strided_slice %213 {offsets = [0, 256], sizes = [32, 256], strides = [1, 1]} : vector<32x768xf32> to vector<32x256xf32>
    %219 = vector.extract_strided_slice %213 {offsets = [0, 512], sizes = [32, 256], strides = [1, 1]} : vector<32x768xf32> to vector<32x256xf32>
    %220 = arith.mulf %214, %217 : vector<32x256xf32>
    %221 = arith.mulf %215, %218 : vector<32x256xf32>
    %222 = arith.addf %220, %221 : vector<32x256xf32>
    %223 = arith.mulf %216, %219 : vector<32x256xf32>
    %224 = arith.addf %222, %223 : vector<32x256xf32>
    %225 = arith.mulf %217, %217 : vector<32x256xf32>
    %226 = arith.mulf %218, %218 : vector<32x256xf32>
    %227 = arith.addf %225, %226 : vector<32x256xf32>
    %228 = arith.mulf %219, %219 : vector<32x256xf32>
    %229 = arith.addf %227, %228 : vector<32x256xf32>
    %cst_104 = arith.constant 9.99999997E-7 : f32
    %230 = vector.broadcast %cst_104 : f32 to vector<32x256xf32>
    %231 = arith.addf %229, %230 : vector<32x256xf32>
    %cst_105 = arith.constant 0.000000e+00 : f32
    %232 = vector.broadcast %cst_105 : f32 to vector<32x256xf32>
    %233 = arith.minimumf %224, %232 : vector<32x256xf32>
    %234 = tpu.reciprocal %231 {approx = true} : vector<32x256xf32> -> vector<32x256xf32>
    %235 = arith.mulf %233, %234 : vector<32x256xf32>
    %236 = tpu.concatenate %235, %235, %235 in 1 : vector<32x256xf32>, vector<32x256xf32>, vector<32x256xf32> -> vector<32x768xf32>
    %237 = arith.mulf %236, %213 : vector<32x768xf32>
    %238 = arith.subf %211, %237 : vector<32x768xf32>
    %c0_106 = arith.constant 0 : index
    %c0_107 = arith.constant 0 : index
    %239 = vector.load %arg14[%c0_106, %c0_107] : memref<32x32xf32, #tpu.memory_space<vmem>>, vector<32x32xf32>
    %cst_108 = arith.constant dense<0.000000e+00> : vector<32x768xf32>
    %240 = tpu.matmul %239, %238, %cst_108 {dimension_numbers = #tpu.dot_dimension_numbers<[1], [0], [0], [1], [0, 0, 1, 1], [], []>} : vector<32x32xf32>, vector<32x768xf32>, vector<32x768xf32> -> vector<32x768xf32>
    %c0_109 = arith.constant 0 : index
    %c0_110 = arith.constant 0 : index
    %241 = vector.load %arg15[%c0_109, %c0_110] : memref<32x1xf32, #tpu.memory_space<vmem>>, vector<32x1xf32>
    %c0_111 = arith.constant 0 : index
    %c0_112 = arith.constant 0 : index
    %242 = vector.load %arg16[%c0_111, %c0_112] : memref<32x1xf32, #tpu.memory_space<vmem>>, vector<32x1xf32>
    %243 = vector.extract_strided_slice %240 {offsets = [0, 0], sizes = [32, 256], strides = [1, 1]} : vector<32x768xf32> to vector<32x256xf32>
    %244 = vector.extract_strided_slice %240 {offsets = [0, 256], sizes = [32, 256], strides = [1, 1]} : vector<32x768xf32> to vector<32x256xf32>
    %245 = vector.extract_strided_slice %240 {offsets = [0, 512], sizes = [32, 256], strides = [1, 1]} : vector<32x768xf32> to vector<32x256xf32>
    %246 = arith.mulf %243, %243 : vector<32x256xf32>
    %247 = arith.mulf %244, %244 : vector<32x256xf32>
    %248 = arith.addf %246, %247 : vector<32x256xf32>
    %249 = arith.mulf %245, %245 : vector<32x256xf32>
    %250 = arith.addf %248, %249 : vector<32x256xf32>
    %cst_113 = arith.constant 9.99999997E-7 : f32
    %251 = vector.broadcast %cst_113 : f32 to vector<32x256xf32>
    %252 = arith.addf %250, %251 : vector<32x256xf32>
    %253 = math.sqrt %252 : vector<32x256xf32>
    %cst_114 = arith.constant dense<0.000000e+00> : vector<256xf32>
    %254 = vector.multi_reduction <add>, %253, %cst_114 [0] : vector<32x256xf32> to vector<256xf32>
    %255 = vector.shape_cast %254 : vector<256xf32> to vector<1x256xf32>
    %cst_115 = arith.constant 3.200000e+01 : f32
    %256 = vector.broadcast %cst_115 : f32 to vector<1x256xf32>
    %257 = arith.divf %255, %256 : vector<1x256xf32>
    %cst_116 = arith.constant dense<0.000000e+00> : vector<256xf32>
    %258 = vector.multi_reduction <add>, %252, %cst_116 [0] : vector<32x256xf32> to vector<256xf32>
    %259 = vector.shape_cast %258 : vector<256xf32> to vector<1x256xf32>
    %cst_117 = arith.constant 3.200000e+01 : f32
    %260 = vector.broadcast %cst_117 : f32 to vector<1x256xf32>
    %261 = arith.divf %259, %260 : vector<1x256xf32>
    %262 = arith.mulf %257, %257 : vector<1x256xf32>
    %263 = arith.subf %261, %262 : vector<1x256xf32>
    %cst_118 = arith.constant 0.000000e+00 : f32
    %264 = vector.broadcast %cst_118 : f32 to vector<1x256xf32>
    %265 = arith.maximumf %263, %264 : vector<1x256xf32>
    %266 = vector.broadcast %257 : vector<1x256xf32> to vector<32x256xf32>
    %267 = arith.subf %253, %266 : vector<32x256xf32>
    %cst_119 = arith.constant 9.99999997E-7 : f32
    %268 = vector.broadcast %cst_119 : f32 to vector<1x256xf32>
    %269 = arith.addf %265, %268 : vector<1x256xf32>
    %270 = math.rsqrt %269 : vector<1x256xf32>
    %271 = vector.broadcast %270 : vector<1x256xf32> to vector<32x256xf32>
    %272 = arith.mulf %267, %271 : vector<32x256xf32>
    %273 = vector.broadcast %241 : vector<32x1xf32> to vector<32x256xf32>
    %274 = arith.mulf %272, %273 : vector<32x256xf32>
    %275 = vector.broadcast %242 : vector<32x1xf32> to vector<32x256xf32>
    %276 = arith.addf %274, %275 : vector<32x256xf32>
    %277 = tpu.reciprocal %253 {approx = true} : vector<32x256xf32> -> vector<32x256xf32>
    %278 = arith.mulf %276, %277 : vector<32x256xf32>
    %279 = tpu.concatenate %278, %278, %278 in 1 : vector<32x256xf32>, vector<32x256xf32>, vector<32x256xf32> -> vector<32x768xf32>
    %280 = arith.mulf %240, %279 : vector<32x768xf32>
    %c0_120 = arith.constant 0 : index
    %c0_121 = arith.constant 0 : index
    %281 = vector.load %arg17[%c0_120, %c0_121] : memref<32x32xf32, #tpu.memory_space<vmem>>, vector<32x32xf32>
    %cst_122 = arith.constant dense<0.000000e+00> : vector<32x768xf32>
    %282 = tpu.matmul %281, %280, %cst_122 {dimension_numbers = #tpu.dot_dimension_numbers<[1], [0], [0], [1], [0, 0, 1, 1], [], []>} : vector<32x32xf32>, vector<32x768xf32>, vector<32x768xf32> -> vector<32x768xf32>
    %283 = vector.extract_strided_slice %280 {offsets = [0, 0], sizes = [32, 256], strides = [1, 1]} : vector<32x768xf32> to vector<32x256xf32>
    %284 = vector.extract_strided_slice %280 {offsets = [0, 256], sizes = [32, 256], strides = [1, 1]} : vector<32x768xf32> to vector<32x256xf32>
    %285 = vector.extract_strided_slice %280 {offsets = [0, 512], sizes = [32, 256], strides = [1, 1]} : vector<32x768xf32> to vector<32x256xf32>
    %286 = vector.extract_strided_slice %282 {offsets = [0, 0], sizes = [32, 256], strides = [1, 1]} : vector<32x768xf32> to vector<32x256xf32>
    %287 = vector.extract_strided_slice %282 {offsets = [0, 256], sizes = [32, 256], strides = [1, 1]} : vector<32x768xf32> to vector<32x256xf32>
    %288 = vector.extract_strided_slice %282 {offsets = [0, 512], sizes = [32, 256], strides = [1, 1]} : vector<32x768xf32> to vector<32x256xf32>
    %289 = arith.mulf %283, %286 : vector<32x256xf32>
    %290 = arith.mulf %284, %287 : vector<32x256xf32>
    %291 = arith.addf %289, %290 : vector<32x256xf32>
    %292 = arith.mulf %285, %288 : vector<32x256xf32>
    %293 = arith.addf %291, %292 : vector<32x256xf32>
    %294 = arith.mulf %286, %286 : vector<32x256xf32>
    %295 = arith.mulf %287, %287 : vector<32x256xf32>
    %296 = arith.addf %294, %295 : vector<32x256xf32>
    %297 = arith.mulf %288, %288 : vector<32x256xf32>
    %298 = arith.addf %296, %297 : vector<32x256xf32>
    %cst_123 = arith.constant 9.99999997E-7 : f32
    %299 = vector.broadcast %cst_123 : f32 to vector<32x256xf32>
    %300 = arith.addf %298, %299 : vector<32x256xf32>
    %cst_124 = arith.constant 0.000000e+00 : f32
    %301 = vector.broadcast %cst_124 : f32 to vector<32x256xf32>
    %302 = arith.minimumf %293, %301 : vector<32x256xf32>
    %303 = tpu.reciprocal %300 {approx = true} : vector<32x256xf32> -> vector<32x256xf32>
    %304 = arith.mulf %302, %303 : vector<32x256xf32>
    %305 = tpu.concatenate %304, %304, %304 in 1 : vector<32x256xf32>, vector<32x256xf32>, vector<32x256xf32> -> vector<32x768xf32>
    %306 = arith.mulf %305, %282 : vector<32x768xf32>
    %307 = arith.subf %280, %306 : vector<32x768xf32>
    %c0_125 = arith.constant 0 : index
    %c0_126 = arith.constant 0 : index
    %308 = vector.load %arg18[%c0_125, %c0_126] : memref<8x32xf32, #tpu.memory_space<vmem>>, vector<8x32xf32>
    %cst_127 = arith.constant dense<0.000000e+00> : vector<8x768xf32>
    %309 = tpu.matmul %308, %307, %cst_127 {dimension_numbers = #tpu.dot_dimension_numbers<[1], [0], [0], [1], [0, 0, 1, 1], [], []>} : vector<8x32xf32>, vector<32x768xf32>, vector<8x768xf32> -> vector<8x768xf32>
    %310 = vector.extract_strided_slice %309 {offsets = [0, 0], sizes = [8, 256], strides = [1, 1]} : vector<8x768xf32> to vector<8x256xf32>
    %c0_128 = arith.constant 0 : index
    %c0_129 = arith.constant 0 : index
    %c0_130 = arith.constant 0 : index
    %c0_131 = arith.constant 0 : index
    %311 = vector.load %arg20[%c0_128, %c0_129, %c0_130, %c0_131] : memref<1x3x8x256xf32, #tpu.memory_space<vmem>>, vector<1x1x8x256xf32>
    %312 = vector.shape_cast %311 : vector<1x1x8x256xf32> to vector<8x256xf32>
    %313 = vector.shape_cast %310 : vector<8x256xf32> to vector<1x1x8x256xf32>
    tpu.vector_store %arg20[%c0_128, %c0_129, %c0_130, %c0_131], %313 {strides = array<i32>} : memref<1x3x8x256xf32, #tpu.memory_space<vmem>>, vector<1x1x8x256xf32>,
    %314 = vector.extract_strided_slice %309 {offsets = [0, 256], sizes = [8, 256], strides = [1, 1]} : vector<8x768xf32> to vector<8x256xf32>
    %c0_132 = arith.constant 0 : index
    %c1_133 = arith.constant 1 : index
    %c0_134 = arith.constant 0 : index
    %c0_135 = arith.constant 0 : index
    %315 = vector.load %arg20[%c0_132, %c1_133, %c0_134, %c0_135] : memref<1x3x8x256xf32, #tpu.memory_space<vmem>>, vector<1x1x8x256xf32>
    %316 = vector.shape_cast %315 : vector<1x1x8x256xf32> to vector<8x256xf32>
    %317 = vector.shape_cast %314 : vector<8x256xf32> to vector<1x1x8x256xf32>
    tpu.vector_store %arg20[%c0_132, %c1_133, %c0_134, %c0_135], %317 {strides = array<i32>} : memref<1x3x8x256xf32, #tpu.memory_space<vmem>>, vector<1x1x8x256xf32>,
    %318 = vector.extract_strided_slice %309 {offsets = [0, 512], sizes = [8, 256], strides = [1, 1]} : vector<8x768xf32> to vector<8x256xf32>
    %c0_136 = arith.constant 0 : index
    %c2_137 = arith.constant 2 : index
    %c0_138 = arith.constant 0 : index
    %c0_139 = arith.constant 0 : index
    %319 = vector.load %arg20[%c0_136, %c2_137, %c0_138, %c0_139] : memref<1x3x8x256xf32, #tpu.memory_space<vmem>>, vector<1x1x8x256xf32>
    %320 = vector.shape_cast %319 : vector<1x1x8x256xf32> to vector<8x256xf32>
    %321 = vector.shape_cast %318 : vector<8x256xf32> to vector<1x1x8x256xf32>
    tpu.vector_store %arg20[%c0_136, %c2_137, %c0_138, %c0_139], %321 {strides = array<i32>} : memref<1x3x8x256xf32, #tpu.memory_space<vmem>>, vector<1x1x8x256xf32>,
    return
  }
  func.func @transform_0(%arg0: i32, %arg1: i32) -> (i32, i32, i32, i32) {
    %c0_i32 = arith.constant 0 : i32
    %c0_i32_0 = arith.constant 0 : i32
    %c0_i32_1 = arith.constant 0 : i32
    return %arg0, %c0_i32, %c0_i32_0, %arg1 : i32, i32, i32, i32
  }
  func.func @transform_1(%arg0: i32, %arg1: i32) -> (i32, i32, i32, i32) {
    %c0_i32 = arith.constant 0 : i32
    %c0_i32_0 = arith.constant 0 : i32
    %c0_i32_1 = arith.constant 0 : i32
    %c0_i32_2 = arith.constant 0 : i32
    return %arg0, %c0_i32, %c0_i32_0, %c0_i32_1 : i32, i32, i32, i32
  }
  func.func @transform_2(%arg0: i32, %arg1: i32) -> (i32, i32, i32, i32) {
    %c0_i32 = arith.constant 0 : i32
    %c0_i32_0 = arith.constant 0 : i32
    %c0_i32_1 = arith.constant 0 : i32
    %c0_i32_2 = arith.constant 0 : i32
    return %arg0, %c0_i32, %c0_i32_0, %c0_i32_1 : i32, i32, i32, i32
  }
  func.func @transform_3(%arg0: i32, %arg1: i32) -> (i32, i32, i32) {
    %c0_i32 = arith.constant 0 : i32
    %c0_i32_0 = arith.constant 0 : i32
    %c0_i32_1 = arith.constant 0 : i32
    return %arg0, %c0_i32, %c0_i32_0 : i32, i32, i32
  }
  func.func @transform_4(%arg0: i32, %arg1: i32) -> (i32, i32) {
    %c0_i32 = arith.constant 0 : i32
    %c0_i32_0 = arith.constant 0 : i32
    %c0_i32_1 = arith.constant 0 : i32
    return %c0_i32, %c0_i32_0 : i32, i32
  }
  func.func @transform_5(%arg0: i32, %arg1: i32) -> (i32, i32) {
    %c0_i32 = arith.constant 0 : i32
    %c0_i32_0 = arith.constant 0 : i32
    %c0_i32_1 = arith.constant 0 : i32
    return %c0_i32, %c0_i32_0 : i32, i32
  }
  func.func @transform_6(%arg0: i32, %arg1: i32) -> (i32, i32) {
    %c0_i32 = arith.constant 0 : i32
    %c0_i32_0 = arith.constant 0 : i32
    %c0_i32_1 = arith.constant 0 : i32
    return %c0_i32, %c0_i32_0 : i32, i32
  }
  func.func @transform_7(%arg0: i32, %arg1: i32) -> (i32, i32) {
    %c0_i32 = arith.constant 0 : i32
    %c0_i32_0 = arith.constant 0 : i32
    %c0_i32_1 = arith.constant 0 : i32
    return %c0_i32, %c0_i32_0 : i32, i32
  }
  func.func @transform_8(%arg0: i32, %arg1: i32) -> (i32, i32) {
    %c0_i32 = arith.constant 0 : i32
    %c0_i32_0 = arith.constant 0 : i32
    %c0_i32_1 = arith.constant 0 : i32
    return %c0_i32, %c0_i32_0 : i32, i32
  }
  func.func @transform_9(%arg0: i32, %arg1: i32) -> (i32, i32) {
    %c0_i32 = arith.constant 0 : i32
    %c0_i32_0 = arith.constant 0 : i32
    %c0_i32_1 = arith.constant 0 : i32
    return %c0_i32, %c0_i32_0 : i32, i32
  }
  func.func @transform_10(%arg0: i32, %arg1: i32) -> (i32, i32) {
    %c0_i32 = arith.constant 0 : i32
    %c0_i32_0 = arith.constant 0 : i32
    %c0_i32_1 = arith.constant 0 : i32
    return %c0_i32, %c0_i32_0 : i32, i32
  }
  func.func @transform_11(%arg0: i32, %arg1: i32) -> (i32, i32) {
    %c0_i32 = arith.constant 0 : i32
    %c0_i32_0 = arith.constant 0 : i32
    %c0_i32_1 = arith.constant 0 : i32
    return %c0_i32, %c0_i32_0 : i32, i32
  }
  func.func @transform_12(%arg0: i32, %arg1: i32) -> (i32, i32) {
    %c0_i32 = arith.constant 0 : i32
    %c0_i32_0 = arith.constant 0 : i32
    %c0_i32_1 = arith.constant 0 : i32
    return %c0_i32, %c0_i32_0 : i32, i32
  }
  func.func @transform_13(%arg0: i32, %arg1: i32) -> (i32, i32) {
    %c0_i32 = arith.constant 0 : i32
    %c0_i32_0 = arith.constant 0 : i32
    %c0_i32_1 = arith.constant 0 : i32
    return %c0_i32, %c0_i32_0 : i32, i32
  }
  func.func @transform_14(%arg0: i32, %arg1: i32) -> (i32, i32) {
    %c0_i32 = arith.constant 0 : i32
    %c0_i32_0 = arith.constant 0 : i32
    %c0_i32_1 = arith.constant 0 : i32
    return %c0_i32, %c0_i32_0 : i32, i32
  }
  func.func @transform_15(%arg0: i32, %arg1: i32) -> (i32, i32) {
    %c0_i32 = arith.constant 0 : i32
    %c0_i32_0 = arith.constant 0 : i32
    %c0_i32_1 = arith.constant 0 : i32
    return %c0_i32, %c0_i32_0 : i32, i32
  }
  func.func @transform_16(%arg0: i32, %arg1: i32) -> (i32, i32) {
    %c0_i32 = arith.constant 0 : i32
    %c0_i32_0 = arith.constant 0 : i32
    %c0_i32_1 = arith.constant 0 : i32
    return %c0_i32, %c0_i32_0 : i32, i32
  }
  func.func @transform_17(%arg0: i32, %arg1: i32) -> (i32, i32, i32, i32) {
    %c0_i32 = arith.constant 0 : i32
    %c0_i32_0 = arith.constant 0 : i32
    %c0_i32_1 = arith.constant 0 : i32
    return %arg0, %c0_i32, %c0_i32_0, %arg1 : i32, i32, i32, i32
  }
  func.func @transform_18(%arg0: i32, %arg1: i32) -> (i32, i32, i32, i32) {
    %c0_i32 = arith.constant 0 : i32
    %c0_i32_0 = arith.constant 0 : i32
    %c0_i32_1 = arith.constant 0 : i32
    return %arg0, %c0_i32, %c0_i32_0, %arg1 : i32, i32, i32, i32
  }
  func.func @transform_19(%arg0: i32, %arg1: i32) -> (i32, i32, i32, i32) {
    %c0_i32 = arith.constant 0 : i32
    %c0_i32_0 = arith.constant 0 : i32
    %c0_i32_1 = arith.constant 0 : i32
    %c0_i32_2 = arith.constant 0 : i32
    return %arg0, %c0_i32, %c0_i32_0, %c0_i32_1 : i32, i32, i32, i32
  }
}

</mosaic_0001>

<llo_original>
// kernel: tpu_custom_call.1
$region0: #{tpu_custom_call.1}
  #allocation0 [shape = 'u32[]', space=smem, size = 0x4, offset = 0x4, fixed_abs, tag = 'smem constant byte address 0x4 - core index']
  #allocation1 [shape = 'u32[144,128]{1,0:T(1,128)}', space=vmem, size = 0x12000, scoped, tag = 'internal scratch']
  %s0 = inlined_call_operand.vmem [shape: f32[2,3,3,256], index: 0, kind: input, shape index: {}]
  %s1 = inlined_call_operand.vmem [shape: f32[2,3,32,1], index: 1, kind: input, shape index: {}]
  %s2 = inlined_call_operand.vmem [shape: f32[2,3,32,1], index: 2, kind: input, shape index: {}]
  %s3 = inlined_call_operand.vmem [shape: f32[2,32,1], index: 3, kind: input, shape index: {}]
  %s4 = inlined_call_operand.vmem [shape: f32[32,3], index: 4, kind: input, shape index: {}]
  %s5 = inlined_call_operand.vmem [shape: f32[32,1], index: 5, kind: input, shape index: {}]
  %s6 = inlined_call_operand.vmem [shape: f32[32,1], index: 6, kind: input, shape index: {}]
  %s7 = inlined_call_operand.vmem [shape: f32[32,32], index: 7, kind: input, shape index: {}]
  %s8 = inlined_call_operand.vmem [shape: f32[64,32], index: 8, kind: input, shape index: {}]
  %s9 = inlined_call_operand.vmem [shape: f32[32,1], index: 9, kind: input, shape index: {}]
  %s10 = inlined_call_operand.vmem [shape: f32[32,1], index: 10, kind: input, shape index: {}]
  %s11 = inlined_call_operand.vmem [shape: f32[32,32], index: 11, kind: input, shape index: {}]
  %s12 = inlined_call_operand.vmem [shape: f32[32,32], index: 12, kind: input, shape index: {}]
  %s13 = inlined_call_operand.vmem [shape: f32[32,1], index: 13, kind: input, shape index: {}]
  %s14 = inlined_call_operand.vmem [shape: f32[32,1], index: 14, kind: input, shape index: {}]
  %s15 = inlined_call_operand.vmem [shape: f32[32,32], index: 15, kind: input, shape index: {}]
  %s16 = inlined_call_operand.vmem [shape: f32[8,32], index: 16, kind: input, shape index: {}]
  %s17 = inlined_call_operand.hbm [shape: f32[2,3,32,256], index: 17, kind: output, shape index: {0}]
  %s18 = inlined_call_operand.hbm [shape: f32[2,3,8,256], index: 18, kind: output, shape index: {1}]
  %s19 = inlined_call_operand.vmem [shape: f32[2,3,32,1], index: 19, kind: output, shape index: {2}]
  %20 = xla_tuple %s17, %s18, %s19
  %s21 = sld [smem:[#allocation0]]
  $region121: #{tpu_custom_call.1} parent=0
    _
  %s23 = ssub.s32 1, %s21
  %s24 = scalar_select 0, %s23, %s21
  $region1: #{tpu_custom_call.1} parent=0
    #allocation2 [shape = 'u8[196608]{0}', space=vmem, size = 0x30000, scoped, tag = 'output window, operand 0']
    #allocation3 [shape = 's32[2]{0}', space=sflag, size = 0x8, scoped, tag = 'scoped memory for tpu_custom_call.1']
    #allocation4 [shape = 'u8[49152]{0}', space=vmem, size = 0xc000, scoped, tag = 'output window, operand 1']
    #allocation5 [shape = 's32[2]{0}', space=sflag, size = 0x8, scoped, tag = 'scoped memory for tpu_custom_call.1']
    %25 = vsyncpa [#allocation3], 0
    %s26 = scalar_lea.sflag [#allocation3], 1
    %27 = vsyncpa %s26, 0
    %28 = vsyncpa [#allocation5], 0
    %s29 = scalar_lea.sflag [#allocation5], 1
    %30 = vsyncpa %s29, 0
    loop: start=0, step=1, limit=4
    $region2: #{tpu_custom_call.1} parent=1 // loop_pre_header
      _
    $region3: #{tpu_custom_call.1} parent=1 // loop_header
      %s32 = sphi 0, %s36
      %p33 = scmp.ge.s32.totalorder %s32, 4
      %s39 = sphi 0, %s51
      %s40 = sphi 0, %s47
      %s41 = sphi 0, %s39
      %s42 = sphi 0, %s40
      %s43 = sphi 0, %s41
      %s44 = sphi 0, %s42
      %s56 = sphi 0, %s58
      %s59 = sphi 0, %s56
      %s60 = sphi 0, %s59
      %s76 = sphi 0, %s60
      %s82 = sphi 0, %s84
      %s85 = sphi 0, %s82
      %s86 = sphi 0, %s85
      %s102 = sphi 0, %s86
      %s108 = sphi 0, %s110
      %s111 = sphi 0, %s108
      %s112 = sphi 0, %s111
      %s128 = sphi 0, %s112
      %s134 = sphi 0, %s136
      %s137 = sphi 0, %s134
      %s138 = sphi 0, %s137
      %s154 = sphi 0, %s138
      %s158 = sphi 0, %s158
      %s160 = sphi 0, %s158
      %s161 = sphi 0, %s160
      %s175 = sphi 0, %s161
      %s179 = sphi 0, %s179
      %s181 = sphi 0, %s179
      %s182 = sphi 0, %s181
      %s196 = sphi 0, %s182
      %s200 = sphi 0, %s200
      %s202 = sphi 0, %s200
      %s203 = sphi 0, %s202
      %s217 = sphi 0, %s203
      %s221 = sphi 0, %s221
      %s223 = sphi 0, %s221
      %s224 = sphi 0, %s223
      %s238 = sphi 0, %s224
      %s242 = sphi 0, %s242
      %s244 = sphi 0, %s242
      %s245 = sphi 0, %s244
      %s259 = sphi 0, %s245
      %s263 = sphi 0, %s263
      %s265 = sphi 0, %s263
      %s266 = sphi 0, %s265
      %s280 = sphi 0, %s266
      %s284 = sphi 0, %s284
      %s286 = sphi 0, %s284
      %s287 = sphi 0, %s286
      %s301 = sphi 0, %s287
      %s305 = sphi 0, %s305
      %s307 = sphi 0, %s305
      %s308 = sphi 0, %s307
      %s322 = sphi 0, %s308
      %s326 = sphi 0, %s326
      %s328 = sphi 0, %s326
      %s329 = sphi 0, %s328
      %s343 = sphi 0, %s329
      %s347 = sphi 0, %s347
      %s349 = sphi 0, %s347
      %s350 = sphi 0, %s349
      %s364 = sphi 0, %s350
      %s368 = sphi 0, %s368
      %s370 = sphi 0, %s368
      %s371 = sphi 0, %s370
      %s385 = sphi 0, %s371
      %s389 = sphi 0, %s389
      %s391 = sphi 0, %s389
      %s392 = sphi 0, %s391
      %s406 = sphi 0, %s392
      %s410 = sphi 0, %s410
      %s412 = sphi 0, %s410
      %s413 = sphi 0, %s412
      %s427 = sphi 0, %s413
      %s435 = sphi 0, %s437
      %s438 = sphi 0, %s435
      %s439 = sphi 0, %s438
      %s455 = sphi 0, %s439
      %s463 = sphi 0, %s465
      %s466 = sphi 0, %s463
      %s467 = sphi 0, %s466
      %s483 = sphi 0, %s467
      %s489 = sphi 0, %s491
      %s492 = sphi 0, %s489
      %s493 = sphi 0, %s492
      %s509 = sphi 0, %s493
    $region4: #{tpu_custom_call.1} parent=1 // loop_header_branch
      %35 = sbr.rel (%p33) target = $region8
    $region5: #{tpu_custom_call.1} parent=1 // loop_body
      %s37 = ssub.s32 %s32, 1
      %s38 = ssub.s32 %s32, 2
      %s45 = sadd.s32 1, %s40
      %p46 = scmp.ge.s32.totalorder %s45, 1
      %s47 = scalar_select %p46, 0, %s45
      %s48 = sadd.s32 1, %s39
      %s49 = scalar_select %p46, %s48, %s39
      %p50 = scmp.ge.s32.totalorder %s49, 2
      %s51 = scalar_select %p50, 0, %s49
      %s52 = ssub.s32 %s39, %s51
      %s53 = ssub.s32 %s40, %s47
      %s54 = sor.u32 %s52, %s53
      %p55 = scmp.eq.s32.totalorder %s54, 0
      %s57 = sadd.s32 %s56, 1
      %s58 = scalar_select %p55, %s56, %s57
      %p61 = pneg %p55
      %p62 = scmp.eq.s32.totalorder %s32, 1
      %p63 = por %p61, %p62
      %p64 = scmp.ne.s32.totalorder %s56, %s59
      %p65 = scmp.eq.s32.totalorder %s32, 0
      %p66 = por %p64, %p65
      %p67 = scmp.ne.s32.totalorder %s56, %s59
      %p68 = scmp.eq.s32.totalorder %s37, 1
      %p69 = por %p67, %p68
      %p70 = scmp.ne.s32.totalorder %s59, %s60
      %p71 = scmp.eq.s32.totalorder %s37, 0
      %p72 = por %p70, %p71
      %p73 = scmp.ne.s32.totalorder %s59, %s60
      %p74 = scmp.eq.s32.totalorder %s38, 1
      %p75 = por %p73, %p74
      %p77 = scmp.ne.s32.totalorder %s60, %s76
      %p78 = scmp.eq.s32.totalorder %s38, 0
      %p79 = por %p77, %p78
      %s80 = ssub.s32 %s39, %s51
      %p81 = scmp.eq.s32.totalorder %s80, 0
      %s83 = sadd.s32 %s82, 1
      %s84 = scalar_select %p81, %s82, %s83
      %p87 = pneg %p81
      %p88 = scmp.eq.s32.totalorder %s32, 1
      %p89 = por %p87, %p88
      %p90 = scmp.ne.s32.totalorder %s82, %s85
      %p91 = scmp.eq.s32.totalorder %s32, 0
      %p92 = por %p90, %p91
      %p93 = scmp.ne.s32.totalorder %s82, %s85
      %p94 = scmp.eq.s32.totalorder %s37, 1
      %p95 = por %p93, %p94
      %p96 = scmp.ne.s32.totalorder %s85, %s86
      %p97 = scmp.eq.s32.totalorder %s37, 0
      %p98 = por %p96, %p97
      %p99 = scmp.ne.s32.totalorder %s85, %s86
      %p100 = scmp.eq.s32.totalorder %s38, 1
      %p101 = por %p99, %p100
      %p103 = scmp.ne.s32.totalorder %s86, %s102
      %p104 = scmp.eq.s32.totalorder %s38, 0
      %p105 = por %p103, %p104
      %s106 = ssub.s32 %s39, %s51
      %p107 = scmp.eq.s32.totalorder %s106, 0
      %s109 = sadd.s32 %s108, 1
      %s110 = scalar_select %p107, %s108, %s109
      %p113 = pneg %p107
      %p114 = scmp.eq.s32.totalorder %s32, 1
      %p115 = por %p113, %p114
      %p116 = scmp.ne.s32.totalorder %s108, %s111
      %p117 = scmp.eq.s32.totalorder %s32, 0
      %p118 = por %p116, %p117
      %p119 = scmp.ne.s32.totalorder %s108, %s111
      %p120 = scmp.eq.s32.totalorder %s37, 1
      %p121 = por %p119, %p120
      %p122 = scmp.ne.s32.totalorder %s111, %s112
      %p123 = scmp.eq.s32.totalorder %s37, 0
      %p124 = por %p122, %p123
      %p125 = scmp.ne.s32.totalorder %s111, %s112
      %p126 = scmp.eq.s32.totalorder %s38, 1
      %p127 = por %p125, %p126
      %p129 = scmp.ne.s32.totalorder %s112, %s128
      %p130 = scmp.eq.s32.totalorder %s38, 0
      %p131 = por %p129, %p130
      %s132 = ssub.s32 %s39, %s51
      %p133 = scmp.eq.s32.totalorder %s132, 0
      %s135 = sadd.s32 %s134, 1
      %s136 = scalar_select %p133, %s134, %s135
      %p139 = pneg %p133
      %p140 = scmp.eq.s32.totalorder %s32, 1
      %p141 = por %p139, %p140
      %p142 = scmp.ne.s32.totalorder %s134, %s137
      %p143 = scmp.eq.s32.totalorder %s32, 0
      %p144 = por %p142, %p143
      %p145 = scmp.ne.s32.totalorder %s134, %s137
      %p146 = scmp.eq.s32.totalorder %s37, 1
      %p147 = por %p145, %p146
      %p148 = scmp.ne.s32.totalorder %s137, %s138
      %p149 = scmp.eq.s32.totalorder %s37, 0
      %p150 = por %p148, %p149
      %p151 = scmp.ne.s32.totalorder %s137, %s138
      %p152 = scmp.eq.s32.totalorder %s38, 1
      %p153 = por %p151, %p152
      %p155 = scmp.ne.s32.totalorder %s138, %s154
      %p156 = scmp.eq.s32.totalorder %s38, 0
      %p157 = por %p155, %p156
      %s159 = sadd.s32 %s158, 1
      %p162 = scmp.eq.s32.totalorder %s32, 1
      %p163 = scmp.ne.s32.totalorder %s158, %s160
      %p164 = scmp.eq.s32.totalorder %s32, 0
      %p165 = por %p163, %p164
      %p166 = scmp.ne.s32.totalorder %s158, %s160
      %p167 = scmp.eq.s32.totalorder %s37, 1
      %p168 = por %p166, %p167
      %p169 = scmp.ne.s32.totalorder %s160, %s161
      %p170 = scmp.eq.s32.totalorder %s37, 0
      %p171 = por %p169, %p170
      %p172 = scmp.ne.s32.totalorder %s160, %s161
      %p173 = scmp.eq.s32.totalorder %s38, 1
      %p174 = por %p172, %p173
      %p176 = scmp.ne.s32.totalorder %s161, %s175
      %p177 = scmp.eq.s32.totalorder %s38, 0
      %p178 = por %p176, %p177
      %s180 = sadd.s32 %s179, 1
      %p183 = scmp.eq.s32.totalorder %s32, 1
      %p184 = scmp.ne.s32.totalorder %s179, %s181
      %p185 = scmp.eq.s32.totalorder %s32, 0
      %p186 = por %p184, %p185
      %p187 = scmp.ne.s32.totalorder %s179, %s181
      %p188 = scmp.eq.s32.totalorder %s37, 1
      %p189 = por %p187, %p188
      %p190 = scmp.ne.s32.totalorder %s181, %s182
      %p191 = scmp.eq.s32.totalorder %s37, 0
      %p192 = por %p190, %p191
      %p193 = scmp.ne.s32.totalorder %s181, %s182
      %p194 = scmp.eq.s32.totalorder %s38, 1
      %p195 = por %p193, %p194
      %p197 = scmp.ne.s32.totalorder %s182, %s196
      %p198 = scmp.eq.s32.totalorder %s38, 0
      %p199 = por %p197, %p198
      %s201 = sadd.s32 %s200, 1
      %p204 = scmp.eq.s32.totalorder %s32, 1
      %p205 = scmp.ne.s32.totalorder %s200, %s202
      %p206 = scmp.eq.s32.totalorder %s32, 0
      %p207 = por %p205, %p206
      %p208 = scmp.ne.s32.totalorder %s200, %s202
      %p209 = scmp.eq.s32.totalorder %s37, 1
      %p210 = por %p208, %p209
      %p211 = scmp.ne.s32.totalorder %s202, %s203
      %p212 = scmp.eq.s32.totalorder %s37, 0
      %p213 = por %p211, %p212
      %p214 = scmp.ne.s32.totalorder %s202, %s203
      %p215 = scmp.eq.s32.totalorder %s38, 1
      %p216 = por %p214, %p215
      %p218 = scmp.ne.s32.totalorder %s203, %s217
      %p219 = scmp.eq.s32.totalorder %s38, 0
      %p220 = por %p218, %p219
      %s222 = sadd.s32 %s221, 1
      %p225 = scmp.eq.s32.totalorder %s32, 1
      %p226 = scmp.ne.s32.totalorder %s221, %s223
      %p227 = scmp.eq.s32.totalorder %s32, 0
      %p228 = por %p226, %p227
      %p229 = scmp.ne.s32.totalorder %s221, %s223
      %p230 = scmp.eq.s32.totalorder %s37, 1
      %p231 = por %p229, %p230
      %p232 = scmp.ne.s32.totalorder %s223, %s224
      %p233 = scmp.eq.s32.totalorder %s37, 0
      %p234 = por %p232, %p233
      %p235 = scmp.ne.s32.totalorder %s223, %s224
      %p236 = scmp.eq.s32.totalorder %s38, 1
      %p237 = por %p235, %p236
      %p239 = scmp.ne.s32.totalorder %s224, %s238
      %p240 = scmp.eq.s32.totalorder %s38, 0
      %p241 = por %p239, %p240
      %s243 = sadd.s32 %s242, 1
      %p246 = scmp.eq.s32.totalorder %s32, 1
      %p247 = scmp.ne.s32.totalorder %s242, %s244
      %p248 = scmp.eq.s32.totalorder %s32, 0
      %p249 = por %p247, %p248
      %p250 = scmp.ne.s32.totalorder %s242, %s244
      %p251 = scmp.eq.s32.totalorder %s37, 1
      %p252 = por %p250, %p251
      %p253 = scmp.ne.s32.totalorder %s244, %s245
      %p254 = scmp.eq.s32.totalorder %s37, 0
      %p255 = por %p253, %p254
      %p256 = scmp.ne.s32.totalorder %s244, %s245
      %p257 = scmp.eq.s32.totalorder %s38, 1
      %p258 = por %p256, %p257
      %p260 = scmp.ne.s32.totalorder %s245, %s259
      %p261 = scmp.eq.s32.totalorder %s38, 0
      %p262 = por %p260, %p261
      %s264 = sadd.s32 %s263, 1
      %p267 = scmp.eq.s32.totalorder %s32, 1
      %p268 = scmp.ne.s32.totalorder %s263, %s265
      %p269 = scmp.eq.s32.totalorder %s32, 0
      %p270 = por %p268, %p269
      %p271 = scmp.ne.s32.totalorder %s263, %s265
      %p272 = scmp.eq.s32.totalorder %s37, 1
      %p273 = por %p271, %p272
      %p274 = scmp.ne.s32.totalorder %s265, %s266
      %p275 = scmp.eq.s32.totalorder %s37, 0
      %p276 = por %p274, %p275
      %p277 = scmp.ne.s32.totalorder %s265, %s266
      %p278 = scmp.eq.s32.totalorder %s38, 1
      %p279 = por %p277, %p278
      %p281 = scmp.ne.s32.totalorder %s266, %s280
      %p282 = scmp.eq.s32.totalorder %s38, 0
      %p283 = por %p281, %p282
      %s285 = sadd.s32 %s284, 1
      %p288 = scmp.eq.s32.totalorder %s32, 1
      %p289 = scmp.ne.s32.totalorder %s284, %s286
      %p290 = scmp.eq.s32.totalorder %s32, 0
      %p291 = por %p289, %p290
      %p292 = scmp.ne.s32.totalorder %s284, %s286
      %p293 = scmp.eq.s32.totalorder %s37, 1
      %p294 = por %p292, %p293
      %p295 = scmp.ne.s32.totalorder %s286, %s287
      %p296 = scmp.eq.s32.totalorder %s37, 0
      %p297 = por %p295, %p296
      %p298 = scmp.ne.s32.totalorder %s286, %s287
      %p299 = scmp.eq.s32.totalorder %s38, 1
      %p300 = por %p298, %p299
      %p302 = scmp.ne.s32.totalorder %s287, %s301
      %p303 = scmp.eq.s32.totalorder %s38, 0
      %p304 = por %p302, %p303
      %s306 = sadd.s32 %s305, 1
      %p309 = scmp.eq.s32.totalorder %s32, 1
      %p310 = scmp.ne.s32.totalorder %s305, %s307
      %p311 = scmp.eq.s32.totalorder %s32, 0
      %p312 = por %p310, %p311
      %p313 = scmp.ne.s32.totalorder %s305, %s307
      %p314 = scmp.eq.s32.totalorder %s37, 1
      %p315 = por %p313, %p314
      %p316 = scmp.ne.s32.totalorder %s307, %s308
      %p317 = scmp.eq.s32.totalorder %s37, 0
      %p318 = por %p316, %p317
      %p319 = scmp.ne.s32.totalorder %s307, %s308
      %p320 = scmp.eq.s32.totalorder %s38, 1
      %p321 = por %p319, %p320
      %p323 = scmp.ne.s32.totalorder %s308, %s322
      %p324 = scmp.eq.s32.totalorder %s38, 0
      %p325 = por %p323, %p324
      %s327 = sadd.s32 %s326, 1
      %p330 = scmp.eq.s32.totalorder %s32, 1
      %p331 = scmp.ne.s32.totalorder %s326, %s328
      %p332 = scmp.eq.s32.totalorder %s32, 0
      %p333 = por %p331, %p332
      %p334 = scmp.ne.s32.totalorder %s326, %s328
      %p335 = scmp.eq.s32.totalorder %s37, 1
      %p336 = por %p334, %p335
      %p337 = scmp.ne.s32.totalorder %s328, %s329
      %p338 = scmp.eq.s32.totalorder %s37, 0
      %p339 = por %p337, %p338
      %p340 = scmp.ne.s32.totalorder %s328, %s329
      %p341 = scmp.eq.s32.totalorder %s38, 1
      %p342 = por %p340, %p341
      %p344 = scmp.ne.s32.totalorder %s329, %s343
      %p345 = scmp.eq.s32.totalorder %s38, 0
      %p346 = por %p344, %p345
      %s348 = sadd.s32 %s347, 1
      %p351 = scmp.eq.s32.totalorder %s32, 1
      %p352 = scmp.ne.s32.totalorder %s347, %s349
      %p353 = scmp.eq.s32.totalorder %s32, 0
      %p354 = por %p352, %p353
      %p355 = scmp.ne.s32.totalorder %s347, %s349
      %p356 = scmp.eq.s32.totalorder %s37, 1
      %p357 = por %p355, %p356
      %p358 = scmp.ne.s32.totalorder %s349, %s350
      %p359 = scmp.eq.s32.totalorder %s37, 0
      %p360 = por %p358, %p359
      %p361 = scmp.ne.s32.totalorder %s349, %s350
      %p362 = scmp.eq.s32.totalorder %s38, 1
      %p363 = por %p361, %p362
      %p365 = scmp.ne.s32.totalorder %s350, %s364
      %p366 = scmp.eq.s32.totalorder %s38, 0
      %p367 = por %p365, %p366
      %s369 = sadd.s32 %s368, 1
      %p372 = scmp.eq.s32.totalorder %s32, 1
      %p373 = scmp.ne.s32.totalorder %s368, %s370
      %p374 = scmp.eq.s32.totalorder %s32, 0
      %p375 = por %p373, %p374
      %p376 = scmp.ne.s32.totalorder %s368, %s370
      %p377 = scmp.eq.s32.totalorder %s37, 1
      %p378 = por %p376, %p377
      %p379 = scmp.ne.s32.totalorder %s370, %s371
      %p380 = scmp.eq.s32.totalorder %s37, 0
      %p381 = por %p379, %p380
      %p382 = scmp.ne.s32.totalorder %s370, %s371
      %p383 = scmp.eq.s32.totalorder %s38, 1
      %p384 = por %p382, %p383
      %p386 = scmp.ne.s32.totalorder %s371, %s385
      %p387 = scmp.eq.s32.totalorder %s38, 0
      %p388 = por %p386, %p387
      %s390 = sadd.s32 %s389, 1
      %p393 = scmp.eq.s32.totalorder %s32, 1
      %p394 = scmp.ne.s32.totalorder %s389, %s391
      %p395 = scmp.eq.s32.totalorder %s32, 0
      %p396 = por %p394, %p395
      %p397 = scmp.ne.s32.totalorder %s389, %s391
      %p398 = scmp.eq.s32.totalorder %s37, 1
      %p399 = por %p397, %p398
      %p400 = scmp.ne.s32.totalorder %s391, %s392
      %p401 = scmp.eq.s32.totalorder %s37, 0
      %p402 = por %p400, %p401
      %p403 = scmp.ne.s32.totalorder %s391, %s392
      %p404 = scmp.eq.s32.totalorder %s38, 1
      %p405 = por %p403, %p404
      %p407 = scmp.ne.s32.totalorder %s392, %s406
      %p408 = scmp.eq.s32.totalorder %s38, 0
      %p409 = por %p407, %p408
      %s411 = sadd.s32 %s410, 1
      %p414 = scmp.eq.s32.totalorder %s32, 1
      %p415 = scmp.ne.s32.totalorder %s410, %s412
      %p416 = scmp.eq.s32.totalorder %s32, 0
      %p417 = por %p415, %p416
      %p418 = scmp.ne.s32.totalorder %s410, %s412
      %p419 = scmp.eq.s32.totalorder %s37, 1
      %p420 = por %p418, %p419
      %p421 = scmp.ne.s32.totalorder %s412, %s413
      %p422 = scmp.eq.s32.totalorder %s37, 0
      %p423 = por %p421, %p422
      %p424 = scmp.ne.s32.totalorder %s412, %s413
      %p425 = scmp.eq.s32.totalorder %s38, 1
      %p426 = por %p424, %p425
      %p428 = scmp.ne.s32.totalorder %s413, %s427
      %p429 = scmp.eq.s32.totalorder %s38, 0
      %p430 = por %p428, %p429
      %s431 = ssub.s32 %s39, %s51
      %s432 = ssub.s32 %s40, %s47
      %s433 = sor.u32 %s431, %s432
      %p434 = scmp.eq.s32.totalorder %s433, 0
      %s436 = sadd.s32 %s435, 1
      %s437 = scalar_select %p434, %s435, %s436
      %p440 = pneg %p434
      %p441 = scmp.eq.s32.totalorder %s32, 1
      %p442 = por %p440, %p441
      %p443 = scmp.ne.s32.totalorder %s435, %s438
      %p444 = scmp.eq.s32.totalorder %s32, 0
      %p445 = por %p443, %p444
      %p446 = scmp.ne.s32.totalorder %s435, %s438
      %p447 = scmp.eq.s32.totalorder %s37, 1
      %p448 = por %p446, %p447
      %p449 = scmp.ne.s32.totalorder %s438, %s439
      %p450 = scmp.eq.s32.totalorder %s37, 0
      %p451 = por %p449, %p450
      %p452 = scmp.ne.s32.totalorder %s438, %s439
      %p453 = scmp.eq.s32.totalorder %s38, 1
      %p454 = por %p452, %p453
      %p456 = scmp.ne.s32.totalorder %s439, %s455
      %p457 = scmp.eq.s32.totalorder %s38, 0
      %p458 = por %p456, %p457
      %s459 = ssub.s32 %s39, %s51
      %s460 = ssub.s32 %s40, %s47
      %s461 = sor.u32 %s459, %s460
      %p462 = scmp.eq.s32.totalorder %s461, 0
      %s464 = sadd.s32 %s463, 1
      %s465 = scalar_select %p462, %s463, %s464
      %p468 = pneg %p462
      %p469 = scmp.eq.s32.totalorder %s32, 1
      %p470 = por %p468, %p469
      %p471 = scmp.ne.s32.totalorder %s463, %s466
      %p472 = scmp.eq.s32.totalorder %s32, 0
      %p473 = por %p471, %p472
      %p474 = scmp.ne.s32.totalorder %s463, %s466
      %p475 = scmp.eq.s32.totalorder %s37, 1
      %p476 = por %p474, %p475
      %p477 = scmp.ne.s32.totalorder %s466, %s467
      %p478 = scmp.eq.s32.totalorder %s37, 0
      %p479 = por %p477, %p478
      %p480 = scmp.ne.s32.totalorder %s466, %s467
      %p481 = scmp.eq.s32.totalorder %s38, 1
      %p482 = por %p480, %p481
      %p484 = scmp.ne.s32.totalorder %s467, %s483
      %p485 = scmp.eq.s32.totalorder %s38, 0
      %p486 = por %p484, %p485
      %s487 = ssub.s32 %s39, %s51
      %p488 = scmp.eq.s32.totalorder %s487, 0
      %s490 = sadd.s32 %s489, 1
      %s491 = scalar_select %p488, %s489, %s490
      %p494 = pneg %p488
      %p495 = scmp.eq.s32.totalorder %s32, 1
      %p496 = por %p494, %p495
      %p497 = scmp.ne.s32.totalorder %s489, %s492
      %p498 = scmp.eq.s32.totalorder %s32, 0
      %p499 = por %p497, %p498
      %p500 = scmp.ne.s32.totalorder %s489, %s492
      %p501 = scmp.eq.s32.totalorder %s37, 1
      %p502 = por %p500, %p501
      %p503 = scmp.ne.s32.totalorder %s492, %s493
      %p504 = scmp.eq.s32.totalorder %s37, 0
      %p505 = por %p503, %p504
      %p506 = scmp.ne.s32.totalorder %s492, %s493
      %p507 = scmp.eq.s32.totalorder %s38, 1
      %p508 = por %p506, %p507
      %p510 = scmp.ne.s32.totalorder %s493, %s509
      %p511 = scmp.eq.s32.totalorder %s38, 0
      %p512 = por %p510, %p511
      %p513 = scmp.le.s32.totalorder 1, %s32
      %p514 = scmp.lt.s32.totalorder %s32, 3
      %p515 = pnand %p513, %p514
      %p516 = pneg %p515
      // Predicated region
      $region9: #{tpu_custom_call.1} parent=5 // pred_check
        _
      $region10: #{tpu_custom_call.1} parent=5 // pred_check_branch
        %518 = sbr.rel (%p515) target = $region12
      $region11: #{tpu_custom_call.1} parent=5 // pred_region
        %s519 = ssub.s32 %s32, 1
        // Predicated region
        $region13: #{tpu_custom_call.1} parent=11 // pred_check
          %p520 = pneg %p171
        $region14: #{tpu_custom_call.1} parent=11 // pred_check_branch
          %522 = sbr.rel (%p520) target = $region16
        $region15: #{tpu_custom_call.1} parent=11 // pred_region
          _
        $region16: #{tpu_custom_call.1} parent=11 // pred_fallthru
          _
        // Predicated region
        $region17: #{tpu_custom_call.1} parent=11 // pred_check
          %p523 = pneg %p192
        $region18: #{tpu_custom_call.1} parent=11 // pred_check_branch
          %525 = sbr.rel (%p523) target = $region20
        $region19: #{tpu_custom_call.1} parent=11 // pred_region
          _
        $region20: #{tpu_custom_call.1} parent=11 // pred_fallthru
          _
        // Predicated region
        $region21: #{tpu_custom_call.1} parent=11 // pred_check
          %p526 = pneg %p213
        $region22: #{tpu_custom_call.1} parent=11 // pred_check_branch
          %528 = sbr.rel (%p526) target = $region24
        $region23: #{tpu_custom_call.1} parent=11 // pred_region
          _
        $region24: #{tpu_custom_call.1} parent=11 // pred_fallthru
          _
        // Predicated region
        $region25: #{tpu_custom_call.1} parent=11 // pred_check
          %p529 = pneg %p234
        $region26: #{tpu_custom_call.1} parent=11 // pred_check_branch
          %531 = sbr.rel (%p529) target = $region28
        $region27: #{tpu_custom_call.1} parent=11 // pred_region
          _
        $region28: #{tpu_custom_call.1} parent=11 // pred_fallthru
          _
        // Predicated region
        $region29: #{tpu_custom_call.1} parent=11 // pred_check
          %p532 = pneg %p255
        $region30: #{tpu_custom_call.1} parent=11 // pred_check_branch
          %534 = sbr.rel (%p532) target = $region32
        $region31: #{tpu_custom_call.1} parent=11 // pred_region
          _
        $region32: #{tpu_custom_call.1} parent=11 // pred_fallthru
          _
        // Predicated region
        $region33: #{tpu_custom_call.1} parent=11 // pred_check
          %p535 = pneg %p276
        $region34: #{tpu_custom_call.1} parent=11 // pred_check_branch
          %537 = sbr.rel (%p535) target = $region36
        $region35: #{tpu_custom_call.1} parent=11 // pred_region
          _
        $region36: #{tpu_custom_call.1} parent=11 // pred_fallthru
          _
        // Predicated region
        $region37: #{tpu_custom_call.1} parent=11 // pred_check
          %p538 = pneg %p297
        $region38: #{tpu_custom_call.1} parent=11 // pred_check_branch
          %540 = sbr.rel (%p538) target = $region40
        $region39: #{tpu_custom_call.1} parent=11 // pred_region
          _
        $region40: #{tpu_custom_call.1} parent=11 // pred_fallthru
          _
        // Predicated region
        $region41: #{tpu_custom_call.1} parent=11 // pred_check
          %p541 = pneg %p318
        $region42: #{tpu_custom_call.1} parent=11 // pred_check_branch
          %543 = sbr.rel (%p541) target = $region44
        $region43: #{tpu_custom_call.1} parent=11 // pred_region
          _
        $region44: #{tpu_custom_call.1} parent=11 // pred_fallthru
          _
        // Predicated region
        $region45: #{tpu_custom_call.1} parent=11 // pred_check
          %p544 = pneg %p339
        $region46: #{tpu_custom_call.1} parent=11 // pred_check_branch
          %546 = sbr.rel (%p544) target = $region48
        $region47: #{tpu_custom_call.1} parent=11 // pred_region
          _
        $region48: #{tpu_custom_call.1} parent=11 // pred_fallthru
          _
        // Predicated region
        $region49: #{tpu_custom_call.1} parent=11 // pred_check
          %p547 = pneg %p360
        $region50: #{tpu_custom_call.1} parent=11 // pred_check_branch
          %549 = sbr.rel (%p547) target = $region52
        $region51: #{tpu_custom_call.1} parent=11 // pred_region
          _
        $region52: #{tpu_custom_call.1} parent=11 // pred_fallthru
          _
        // Predicated region
        $region53: #{tpu_custom_call.1} parent=11 // pred_check
          %p550 = pneg %p381
        $region54: #{tpu_custom_call.1} parent=11 // pred_check_branch
          %552 = sbr.rel (%p550) target = $region56
        $region55: #{tpu_custom_call.1} parent=11 // pred_region
          _
        $region56: #{tpu_custom_call.1} parent=11 // pred_fallthru
          _
        // Predicated region
        $region57: #{tpu_custom_call.1} parent=11 // pred_check
          %p553 = pneg %p402
        $region58: #{tpu_custom_call.1} parent=11 // pred_check_branch
          %555 = sbr.rel (%p553) target = $region60
        $region59: #{tpu_custom_call.1} parent=11 // pred_region
          _
        $region60: #{tpu_custom_call.1} parent=11 // pred_fallthru
          _
        // Predicated region
        $region61: #{tpu_custom_call.1} parent=11 // pred_check
          %p556 = pneg %p423
        $region62: #{tpu_custom_call.1} parent=11 // pred_check_branch
          %558 = sbr.rel (%p556) target = $region64
        $region63: #{tpu_custom_call.1} parent=11 // pred_region
          _
        $region64: #{tpu_custom_call.1} parent=11 // pred_fallthru
          _
      $region12: #{tpu_custom_call.1} parent=5 // pred_fallthru
        _
      %p559 = scmp.lt.s32.totalorder %s32, 2
      // Predicated region
      $region65: #{tpu_custom_call.1} parent=5 // pred_check
        %p560 = pneg %p559
      $region66: #{tpu_custom_call.1} parent=5 // pred_check_branch
        %562 = sbr.rel (%p560) target = $region68
      $region67: #{tpu_custom_call.1} parent=5 // pred_region
        // Predicated region
        $region69: #{tpu_custom_call.1} parent=67 // pred_check
          %p563 = pneg %p66
        $region70: #{tpu_custom_call.1} parent=67 // pred_check_branch
          %565 = sbr.rel (%p563) target = $region72
        $region71: #{tpu_custom_call.1} parent=67 // pred_region
          %s566 = smul.u32 2, %s40
          %p567 = scmp.lt.s32.totalorder %s39, 1
          %s568 = scalar_select %p567, %s39, 1
          %p569 = scmp.lt.s32.totalorder %s566, 1
          %s570 = scalar_select %p569, %s566, 1
          %s571 = smul.addr %s568, 6
          %s572 = sadd.s32 %s570, %s571
          %s573 = smul.addr %s572, 4
          %s574 = scalar_lea.vmem %s0, %s573
          %s575 = smul.u32 2, %s40
        $region72: #{tpu_custom_call.1} parent=67 // pred_fallthru
          _
        // Predicated region
        $region73: #{tpu_custom_call.1} parent=67 // pred_check
          %p576 = pneg %p92
        $region74: #{tpu_custom_call.1} parent=67 // pred_check_branch
          %578 = sbr.rel (%p576) target = $region76
        $region75: #{tpu_custom_call.1} parent=67 // pred_region
          %p579 = scmp.lt.s32.totalorder %s39, 1
          %s580 = scalar_select %p579, %s39, 1
          %s581 = smul.addr %s580, 12
          %s582 = smul.addr %s581, 8
          %s583 = scalar_lea.vmem %s1, %s582
        $region76: #{tpu_custom_call.1} parent=67 // pred_fallthru
          _
        // Predicated region
        $region77: #{tpu_custom_call.1} parent=67 // pred_check
          %p584 = pneg %p118
        $region78: #{tpu_custom_call.1} parent=67 // pred_check_branch
          %586 = sbr.rel (%p584) target = $region80
        $region79: #{tpu_custom_call.1} parent=67 // pred_region
          %p587 = scmp.lt.s32.totalorder %s39, 1
          %s588 = scalar_select %p587, %s39, 1
          %s589 = smul.addr %s588, 12
          %s590 = smul.addr %s589, 8
          %s591 = scalar_lea.vmem %s2, %s590
        $region80: #{tpu_custom_call.1} parent=67 // pred_fallthru
          _
        // Predicated region
        $region81: #{tpu_custom_call.1} parent=67 // pred_check
          %p592 = pneg %p144
        $region82: #{tpu_custom_call.1} parent=67 // pred_check_branch
          %594 = sbr.rel (%p592) target = $region84
        $region83: #{tpu_custom_call.1} parent=67 // pred_region
          %p595 = scmp.lt.s32.totalorder %s39, 1
          %s596 = scalar_select %p595, %s39, 1
          %s597 = smul.addr %s596, 4
          %s598 = smul.addr %s597, 8
          %s599 = scalar_lea.vmem %s3, %s598
        $region84: #{tpu_custom_call.1} parent=67 // pred_fallthru
          _
      $region68: #{tpu_custom_call.1} parent=5 // pred_fallthru
        _
      %p600 = scmp.le.s32.totalorder 1, %s32
      %p601 = scmp.lt.s32.totalorder %s32, 3
      %p602 = pnand %p600, %p601
      %p603 = pneg %p602
      // Predicated region
      $region85: #{tpu_custom_call.1} parent=5 // pred_check
        _
      $region86: #{tpu_custom_call.1} parent=5 // pred_check_branch
        %605 = sbr.rel (%p602) target = $region88
      $region87: #{tpu_custom_call.1} parent=5 // pred_region
        %s606 = ssub.s32 %s32, 1
        %s607 = smul.u32 2, %s42
        %p608 = scmp.lt.s32.totalorder %s41, 1
        %s609 = scalar_select %p608, %s41, 1
        %p610 = scmp.lt.s32.totalorder %s607, 1
        %s611 = scalar_select %p610, %s607, 1
        %s612 = smul.addr %s609, 6
        %s613 = sadd.s32 %s611, %s612
        %s614 = smul.addr %s613, 4
        %s615 = scalar_lea.vmem %s0, %s614
        %p616 = pneg %p72
        %p617 = pneg %p69
        %p618 = scmp.lt.s32.totalorder %s41, 1
        %s619 = scalar_select %p618, %s41, 1
        %s620 = smul.addr %s619, 12
        %s621 = smul.addr %s620, 8
        %s622 = scalar_lea.vmem %s1, %s621
        %p623 = pneg %p98
        %p624 = pneg %p95
        %p625 = scmp.lt.s32.totalorder %s41, 1
        %s626 = scalar_select %p625, %s41, 1
        %s627 = smul.addr %s626, 12
        %s628 = smul.addr %s627, 8
        %s629 = scalar_lea.vmem %s2, %s628
        %p630 = pneg %p124
        %p631 = pneg %p121
        %p632 = scmp.lt.s32.totalorder %s41, 1
        %s633 = scalar_select %p632, %s41, 1
        %s634 = smul.addr %s633, 4
        %s635 = smul.addr %s634, 8
        %s636 = scalar_lea.vmem %s3, %s635
        %p637 = pneg %p150
        %p638 = pneg %p147
        %p639 = pneg %p171
        %p640 = pneg %p168
        %p641 = pneg %p192
        %p642 = pneg %p189
        %p643 = pneg %p213
        %p644 = pneg %p210
        %p645 = pneg %p234
        %p646 = pneg %p231
        %p647 = pneg %p255
        %p648 = pneg %p252
        %p649 = pneg %p276
        %p650 = pneg %p273
        %p651 = pneg %p297
        %p652 = pneg %p294
        %p653 = pneg %p318
        %p654 = pneg %p315
        %p655 = pneg %p339
        %p656 = pneg %p336
        %p657 = pneg %p360
        %p658 = pneg %p357
        %p659 = pneg %p381
        %p660 = pneg %p378
        %p661 = pneg %p402
        %p662 = pneg %p399
        %p663 = pneg %p423
        %p664 = pneg %p420
        %p665 = pneg %p451
        %p666 = pneg %p448
        %s667 = sand.u32 %s438, 1
        %s668 = scalar_lea.sflag [#allocation3], %s667
        %s669 = sand.u32 %s438, 1
        %s670 = smul.addr %s669, 192
        %s671 = scalar_lea.vmem [#allocation2], %s670
        %p672 = pneg %p479
        %p673 = pneg %p476
        %s674 = sand.u32 %s466, 1
        %s675 = scalar_lea.sflag [#allocation5], %s674
        %s676 = sand.u32 %s466, 1
        %s677 = smul.addr %s676, 48
        %s678 = scalar_lea.vmem [#allocation4], %s677
        %p679 = pneg %p505
        %p680 = pneg %p502
        %p681 = scmp.lt.s32.totalorder %s41, 1
        %s682 = scalar_select %p681, %s41, 1
        %s683 = smul.addr %s682, 12
        %s684 = smul.addr %s683, 8
        %s685 = scalar_lea.vmem %s19, %s684
        %s686 = smul.u32 2, %s42
        %p687 = scmp.lt.s32.totalorder %s41, 1
        %s688 = scalar_select %p687, %s41, 1
        %p689 = scmp.lt.s32.totalorder %s686, 1
        %s690 = scalar_select %p689, %s686, 1
        %s691 = smul.addr %s688, 6
        %s692 = sadd.s32 %s690, %s691
        %s693 = smul.addr %s692, 4
        %s694 = scalar_lea.vmem %s0, %s693
        %s695 = smul.u32 2, %s42
        %p696 = scmp.lt.s32.totalorder %s41, 1
        %s697 = scalar_select %p696, %s41, 1
        %s698 = smul.addr %s697, 12
        %s699 = smul.addr %s698, 8
        %s700 = scalar_lea.vmem %s1, %s699
        %p701 = scmp.lt.s32.totalorder %s41, 1
        %s702 = scalar_select %p701, %s41, 1
        %s703 = smul.addr %s702, 12
        %s704 = smul.addr %s703, 8
        %s705 = scalar_lea.vmem %s2, %s704
        %p706 = scmp.lt.s32.totalorder %s41, 1
        %s707 = scalar_select %p706, %s41, 1
        %s708 = smul.addr %s707, 4
        %s709 = smul.addr %s708, 8
        %s710 = scalar_lea.vmem %s3, %s709
        %s711 = smul.u32 2, %s42
        %s712 = smul.u32 2, %s42
        %p713 = scmp.lt.s32.totalorder %s41, 1
        %s714 = scalar_select %p713, %s41, 1
        %s715 = smul.addr %s714, 12
        %s716 = smul.addr %s715, 8
        %s717 = scalar_lea.vmem %s19, %s716
        %p718 = scmp.eq.s32.totalorder %s42, 0
        // Predicated region
        $region89: #{tpu_custom_call.1} parent=87 // pred_check
          %p719 = pneg %p718
        $region90: #{tpu_custom_call.1} parent=87 // pred_check_branch
          %721 = sbr.rel (%p719) target = $region92
        $region91: #{tpu_custom_call.1} parent=87 // pred_region
          %vm722 = vcmask 7168
          %723 = vst.msk [vmem:[%s717] sm:$0xff] %vm722, 0.0
          %724 = vst.msk [vmem:[%s717 + $0x8] sm:$0xff] %vm722, 0.0
          %725 = vst.msk [vmem:[%s717 + $0x10] sm:$0xff] %vm722, 0.0
          %726 = vst.msk [vmem:[%s717 + $0x18] sm:$0xff] %vm722, 0.0
          %727 = vst.msk [vmem:[%s717 + $0x20] sm:$0xff] %vm722, 0.0
          %728 = vst.msk [vmem:[%s717 + $0x28] sm:$0xff] %vm722, 0.0
          %729 = vst.msk [vmem:[%s717 + $0x30] sm:$0xff] %vm722, 0.0
          %730 = vst.msk [vmem:[%s717 + $0x38] sm:$0xff] %vm722, 0.0
          %731 = vst.msk [vmem:[%s717 + $0x40] sm:$0xff] %vm722, 0.0
          %732 = vst.msk [vmem:[%s717 + $0x48] sm:$0xff] %vm722, 0.0
          %733 = vst.msk [vmem:[%s717 + $0x50] sm:$0xff] %vm722, 0.0
          %734 = vst.msk [vmem:[%s717 + $0x58] sm:$0xff] %vm722, 0.0
        $region92: #{tpu_custom_call.1} parent=87 // pred_fallthru
          _
        %v735 = vld [vmem:[%s694] sm:$0x77]
        %v736 = vld [vmem:[%s694 + $0x8] sm:$0x77]
        %v737 = vld [vmem:[%s694 + $0x10] sm:$0x77]
        %v739 = vcombine.high %v735, %v735
        %v741 = vcombine.high %v736, %v736
        %v743 = vcombine.high %v737, %v737
        %v744 = vld [vmem:[%s4] sm:$0xff]
        %v745 = vld [vmem:[%s4 + $0x8] sm:$0xff]
        %v746 = vld [vmem:[%s4 + $0x10] sm:$0xff]
        %v747 = vld [vmem:[%s4 + $0x18] sm:$0xff]
        %vm748 = vcmask 23552
        %v750 = vsel %vm748, %v744, 0
        %v753 = vsel %vm748, %v745, 0
        %v756 = vsel %vm748, %v746, 0
        %v759 = vsel %vm748, %v747, 0
        %vm761 = vcmask 1042432
        %v762 = vsel %vm761, %v735, 0
        %v764 = vsel %vm761, %v739, 0
        %v766 = vsel %vm761, %v736, 0
        %v768 = vsel %vm761, %v741, 0
        %v770 = vsel %vm761, %v737, 0
        %v772 = vsel %vm761, %v743, 0
        %774 = vmatprep.subr.mxu0 %v764
        %775 = vmatpush1.msra.mxu0 %v762
        %776 = vmatprep.subr.mxu0 0.0
        %777 = vmatpush1.msra.mxu0 0.0
        %778 = vmatprep.subr.mxu0 0.0
        %779 = vmatpush1.msra.mxu0 0.0
        %780 = vmatprep.subr.mxu0 0.0
        %781 = vmatpush1.msra.mxu0 0.0
        %782 = vmatprep.subr.mxu0 0.0
        %783 = vmatpush1.msra.mxu0 0.0
        %784 = vmatprep.subr.mxu0 0.0
        %785 = vmatpush1.msra.mxu0 0.0
        %786 = vmatprep.subr.mxu0 0.0
        %787 = vmatpush1.msra.mxu0 0.0
        %788 = vmatprep.subr.mxu0 0.0
        %789 = vmatpush1.msra.mxu0 0.0
        %790 = vmatprep.subr.mxu0 0.0
        %791 = vmatpush1.msra.mxu0 0.0
        %792 = vmatprep.subr.mxu0 0.0
        %793 = vmatpush1.msra.mxu0 0.0
        %794 = vmatprep.subr.mxu0 0.0
        %795 = vmatpush1.msra.mxu0 0.0
        %796 = vmatprep.subr.mxu0 0.0
        %797 = vmatpush1.msra.mxu0 0.0
        %798 = vmatprep.subr.mxu0 0.0
        %799 = vmatpush1.msra.mxu0 0.0
        %800 = vmatprep.subr.mxu0 0.0
        %801 = vmatpush1.msra.mxu0 0.0
        %802 = vmatprep.subr.mxu0 0.0
        %803 = vmatpush1.msra.mxu0 0.0
        %804 = vmatprep.subr.mxu0 0.0
        %805 = vmatpush1.msra.mxu0 0.0
        %806 = vmatprep.subr.mxu0 0.0
        %807 = vmatpush1.msra.mxu0 0.0
        %808 = vmatprep.subr.mxu0 0.0
        %809 = vmatpush1.msra.mxu0 0.0
        %810 = vmatprep.subr.mxu0 0.0
        %811 = vmatpush1.msra.mxu0 0.0
        %812 = vmatprep.subr.mxu0 0.0
        %813 = vmatpush1.msra.mxu0 0.0
        %814 = vmatprep.subr.mxu0 0.0
        %815 = vmatpush1.msra.mxu0 0.0
        %816 = vmatprep.subr.mxu0 0.0
        %817 = vmatpush1.msra.mxu0 0.0
        %818 = vmatprep.subr.mxu0 0.0
        %819 = vmatpush1.msra.mxu0 0.0
        %820 = vmatprep.subr.mxu0 0.0
        %821 = vmatpush1.msra.mxu0 0.0
        %822 = vmatprep.subr.mxu0 0.0
        %823 = vmatpush1.msra.mxu0 0.0
        %824 = vmatprep.subr.mxu0 0.0
        %825 = vmatpush1.msra.mxu0 0.0
        %826 = vmatprep.subr.mxu0 0.0
        %827 = vmatpush1.msra.mxu0 0.0
        %828 = vmatprep.subr.mxu0 0.0
        %829 = vmatpush1.msra.mxu0 0.0
        %830 = vmatprep.subr.mxu0 0.0
        %831 = vmatpush1.msra.mxu0 0.0
        %832 = vmatprep.subr.mxu0 0.0
        %833 = vmatpush1.msra.mxu0 0.0
        %834 = vmatprep.subr.mxu0 0.0
        %835 = vmatpush1.msra.mxu0 0.0
        %836 = vmatprep.subr.mxu0 0.0
        %837 = vmatpush1.msra.mxu0 0.0
        %838 = vmatprep.mubr.f32.mxu0 0.0
        %839 = vmatmul.mubr.f32.gmra.mrb[0].mxu0 %v750
        %v840 = vpop.f32.mrb[0].mxu0
        %v841 = vadd.f32 0.0, %v840
        %v842 = vpop.f32.mrb[0].mxu0
        %v843 = vadd.f32 0.0, %v842
        %844 = vmatprep.mubr.f32.mxu0 0.0
        %845 = vmatmul.mubr.f32.gmra.mrb[0].mxu0 %v753
        %v846 = vpop.f32.mrb[0].mxu0
        %v847 = vadd.f32 0.0, %v846
        %v848 = vpop.f32.mrb[0].mxu0
        %v849 = vadd.f32 0.0, %v848
        %850 = vmatprep.mubr.f32.mxu0 0.0
        %851 = vmatmul.mubr.f32.gmra.mrb[0].mxu0 %v756
        %v852 = vpop.f32.mrb[0].mxu0
        %v853 = vadd.f32 0.0, %v852
        %v854 = vpop.f32.mrb[0].mxu0
        %v855 = vadd.f32 0.0, %v854
        %856 = vmatprep.mubr.f32.mxu0 0.0
        %857 = vmatmul.mubr.f32.gmra.mrb[0].mxu0 %v759
        %v858 = vpop.f32.mrb[0].mxu0
        %v859 = vadd.f32 0.0, %v858
        %v860 = vpop.f32.mrb[0].mxu0
        %v861 = vadd.f32 0.0, %v860
        %862 = vdwg.mxu0
        %863 = vmatprep.subr.mxu0 %v768
        %864 = vmatpush1.msra.mxu0 %v766
        %865 = vmatprep.subr.mxu0 0.0
        %866 = vmatpush1.msra.mxu0 0.0
        %867 = vmatprep.subr.mxu0 0.0
        %868 = vmatpush1.msra.mxu0 0.0
        %869 = vmatprep.subr.mxu0 0.0
        %870 = vmatpush1.msra.mxu0 0.0
        %871 = vmatprep.subr.mxu0 0.0
        %872 = vmatpush1.msra.mxu0 0.0
        %873 = vmatprep.subr.mxu0 0.0
        %874 = vmatpush1.msra.mxu0 0.0
        %875 = vmatprep.subr.mxu0 0.0
        %876 = vmatpush1.msra.mxu0 0.0
        %877 = vmatprep.subr.mxu0 0.0
        %878 = vmatpush1.msra.mxu0 0.0
        %879 = vmatprep.subr.mxu0 0.0
        %880 = vmatpush1.msra.mxu0 0.0
        %881 = vmatprep.subr.mxu0 0.0
        %882 = vmatpush1.msra.mxu0 0.0
        %883 = vmatprep.subr.mxu0 0.0
        %884 = vmatpush1.msra.mxu0 0.0
        %885 = vmatprep.subr.mxu0 0.0
        %886 = vmatpush1.msra.mxu0 0.0
        %887 = vmatprep.subr.mxu0 0.0
        %888 = vmatpush1.msra.mxu0 0.0
        %889 = vmatprep.subr.mxu0 0.0
        %890 = vmatpush1.msra.mxu0 0.0
        %891 = vmatprep.subr.mxu0 0.0
        %892 = vmatpush1.msra.mxu0 0.0
        %893 = vmatprep.subr.mxu0 0.0
        %894 = vmatpush1.msra.mxu0 0.0
        %895 = vmatprep.subr.mxu0 0.0
        %896 = vmatpush1.msra.mxu0 0.0
        %897 = vmatprep.subr.mxu0 0.0
        %898 = vmatpush1.msra.mxu0 0.0
        %899 = vmatprep.subr.mxu0 0.0
        %900 = vmatpush1.msra.mxu0 0.0
        %901 = vmatprep.subr.mxu0 0.0
        %902 = vmatpush1.msra.mxu0 0.0
        %903 = vmatprep.subr.mxu0 0.0
        %904 = vmatpush1.msra.mxu0 0.0
        %905 = vmatprep.subr.mxu0 0.0
        %906 = vmatpush1.msra.mxu0 0.0
        %907 = vmatprep.subr.mxu0 0.0
        %908 = vmatpush1.msra.mxu0 0.0
        %909 = vmatprep.subr.mxu0 0.0
        %910 = vmatpush1.msra.mxu0 0.0
        %911 = vmatprep.subr.mxu0 0.0
        %912 = vmatpush1.msra.mxu0 0.0
        %913 = vmatprep.subr.mxu0 0.0
        %914 = vmatpush1.msra.mxu0 0.0
        %915 = vmatprep.subr.mxu0 0.0
        %916 = vmatpush1.msra.mxu0 0.0
        %917 = vmatprep.subr.mxu0 0.0
        %918 = vmatpush1.msra.mxu0 0.0
        %919 = vmatprep.subr.mxu0 0.0
        %920 = vmatpush1.msra.mxu0 0.0
        %921 = vmatprep.subr.mxu0 0.0
        %922 = vmatpush1.msra.mxu0 0.0
        %923 = vmatprep.subr.mxu0 0.0
        %924 = vmatpush1.msra.mxu0 0.0
        %925 = vmatprep.subr.mxu0 0.0
        %926 = vmatpush1.msra.mxu0 0.0
        %927 = vmatprep.mubr.f32.mxu0 0.0
        %928 = vmatmul.mubr.f32.gmra.mrb[0].mxu0 %v750
        %v929 = vpop.f32.mrb[0].mxu0
        %v930 = vadd.f32 0.0, %v929
        %v931 = vpop.f32.mrb[0].mxu0
        %v932 = vadd.f32 0.0, %v931
        %933 = vmatprep.mubr.f32.mxu0 0.0
        %934 = vmatmul.mubr.f32.gmra.mrb[0].mxu0 %v753
        %v935 = vpop.f32.mrb[0].mxu0
        %v936 = vadd.f32 0.0, %v935
        %v937 = vpop.f32.mrb[0].mxu0
        %v938 = vadd.f32 0.0, %v937
        %939 = vmatprep.mubr.f32.mxu0 0.0
        %940 = vmatmul.mubr.f32.gmra.mrb[0].mxu0 %v756
        %v941 = vpop.f32.mrb[0].mxu0
        %v942 = vadd.f32 0.0, %v941
        %v943 = vpop.f32.mrb[0].mxu0
        %v944 = vadd.f32 0.0, %v943
        %945 = vmatprep.mubr.f32.mxu0 0.0
        %946 = vmatmul.mubr.f32.gmra.mrb[0].mxu0 %v759
        %v947 = vpop.f32.mrb[0].mxu0
        %v948 = vadd.f32 0.0, %v947
        %v949 = vpop.f32.mrb[0].mxu0
        %v950 = vadd.f32 0.0, %v949
        %951 = vdwg.mxu0
        %952 = vmatprep.subr.mxu0 %v772
        %953 = vmatpush1.msra.mxu0 %v770
        %954 = vmatprep.subr.mxu0 0.0
        %955 = vmatpush1.msra.mxu0 0.0
        %956 = vmatprep.subr.mxu0 0.0
        %957 = vmatpush1.msra.mxu0 0.0
        %958 = vmatprep.subr.mxu0 0.0
        %959 = vmatpush1.msra.mxu0 0.0
        %960 = vmatprep.subr.mxu0 0.0
        %961 = vmatpush1.msra.mxu0 0.0
        %962 = vmatprep.subr.mxu0 0.0
        %963 = vmatpush1.msra.mxu0 0.0
        %964 = vmatprep.subr.mxu0 0.0
        %965 = vmatpush1.msra.mxu0 0.0
        %966 = vmatprep.subr.mxu0 0.0
        %967 = vmatpush1.msra.mxu0 0.0
        %968 = vmatprep.subr.mxu0 0.0
        %969 = vmatpush1.msra.mxu0 0.0
        %970 = vmatprep.subr.mxu0 0.0
        %971 = vmatpush1.msra.mxu0 0.0
        %972 = vmatprep.subr.mxu0 0.0
        %973 = vmatpush1.msra.mxu0 0.0
        %974 = vmatprep.subr.mxu0 0.0
        %975 = vmatpush1.msra.mxu0 0.0
        %976 = vmatprep.subr.mxu0 0.0
        %977 = vmatpush1.msra.mxu0 0.0
        %978 = vmatprep.subr.mxu0 0.0
        %979 = vmatpush1.msra.mxu0 0.0
        %980 = vmatprep.subr.mxu0 0.0
        %981 = vmatpush1.msra.mxu0 0.0
        %982 = vmatprep.subr.mxu0 0.0
        %983 = vmatpush1.msra.mxu0 0.0
        %984 = vmatprep.subr.mxu0 0.0
        %985 = vmatpush1.msra.mxu0 0.0
        %986 = vmatprep.subr.mxu0 0.0
        %987 = vmatpush1.msra.mxu0 0.0
        %988 = vmatprep.subr.mxu0 0.0
        %989 = vmatpush1.msra.mxu0 0.0
        %990 = vmatprep.subr.mxu0 0.0
        %991 = vmatpush1.msra.mxu0 0.0
        %992 = vmatprep.subr.mxu0 0.0
        %993 = vmatpush1.msra.mxu0 0.0
        %994 = vmatprep.subr.mxu0 0.0
        %995 = vmatpush1.msra.mxu0 0.0
        %996 = vmatprep.subr.mxu0 0.0
        %997 = vmatpush1.msra.mxu0 0.0
        %998 = vmatprep.subr.mxu0 0.0
        %999 = vmatpush1.msra.mxu0 0.0
        %1000 = vmatprep.subr.mxu0 0.0
        %1001 = vmatpush1.msra.mxu0 0.0
        %1002 = vmatprep.subr.mxu0 0.0
        %1003 = vmatpush1.msra.mxu0 0.0
        %1004 = vmatprep.subr.mxu0 0.0
        %1005 = vmatpush1.msra.mxu0 0.0
        %1006 = vmatprep.subr.mxu0 0.0
        %1007 = vmatpush1.msra.mxu0 0.0
        %1008 = vmatprep.subr.mxu0 0.0
        %1009 = vmatpush1.msra.mxu0 0.0
        %1010 = vmatprep.subr.mxu0 0.0
        %1011 = vmatpush1.msra.mxu0 0.0
        %1012 = vmatprep.subr.mxu0 0.0
        %1013 = vmatpush1.msra.mxu0 0.0
        %1014 = vmatprep.subr.mxu0 0.0
        %1015 = vmatpush1.msra.mxu0 0.0
        %1016 = vmatprep.mubr.f32.mxu0 0.0
        %1017 = vmatmul.mubr.f32.gmra.mrb[0].mxu0 %v750
        %v1018 = vpop.f32.mrb[0].mxu0
        %v1019 = vadd.f32 0.0, %v1018
        %v1020 = vpop.f32.mrb[0].mxu0
        %v1021 = vadd.f32 0.0, %v1020
        %1022 = vmatprep.mubr.f32.mxu0 0.0
        %1023 = vmatmul.mubr.f32.gmra.mrb[0].mxu0 %v753
        %v1024 = vpop.f32.mrb[0].mxu0
        %v1025 = vadd.f32 0.0, %v1024
        %v1026 = vpop.f32.mrb[0].mxu0
        %v1027 = vadd.f32 0.0, %v1026
        %1028 = vmatprep.mubr.f32.mxu0 0.0
        %1029 = vmatmul.mubr.f32.gmra.mrb[0].mxu0 %v756
        %v1030 = vpop.f32.mrb[0].mxu0
        %v1031 = vadd.f32 0.0, %v1030
        %v1032 = vpop.f32.mrb[0].mxu0
        %v1033 = vadd.f32 0.0, %v1032
        %1034 = vmatprep.mubr.f32.mxu0 0.0
        %1035 = vmatmul.mubr.f32.gmra.mrb[0].mxu0 %v759
        %v1036 = vpop.f32.mrb[0].mxu0
        %v1037 = vadd.f32 0.0, %v1036
        %v1038 = vpop.f32.mrb[0].mxu0
        %v1039 = vadd.f32 0.0, %v1038
        %1040 = vdwg.mxu0
        %v1041 = vld [vmem:[%s5] sm:$0xff]
        %v1042 = vld [vmem:[%s5 + $0x8] sm:$0xff]
        %v1043 = vld [vmem:[%s5 + $0x10] sm:$0xff]
        %v1044 = vld [vmem:[%s5 + $0x18] sm:$0xff]
        %v1045 = vld [vmem:[%s6] sm:$0xff]
        %v1046 = vld [vmem:[%s6 + $0x8] sm:$0xff]
        %v1047 = vld [vmem:[%s6 + $0x10] sm:$0xff]
        %v1048 = vld [vmem:[%s6 + $0x18] sm:$0xff]
        %v1049 = vmul.f32 %v841, %v841
        %v1050 = vmul.f32 %v843, %v843
        %v1051 = vmul.f32 %v847, %v847
        %v1052 = vmul.f32 %v849, %v849
        %v1053 = vmul.f32 %v853, %v853
        %v1054 = vmul.f32 %v855, %v855
        %v1055 = vmul.f32 %v859, %v859
        %v1056 = vmul.f32 %v861, %v861
        %v1057 = vmul.f32 %v930, %v930
        %v1058 = vmul.f32 %v932, %v932
        %v1059 = vmul.f32 %v936, %v936
        %v1060 = vmul.f32 %v938, %v938
        %v1061 = vmul.f32 %v942, %v942
        %v1062 = vmul.f32 %v944, %v944
        %v1063 = vmul.f32 %v948, %v948
        %v1064 = vmul.f32 %v950, %v950
        %v1065 = vadd.f32 %v1049, %v1057
        %v1066 = vadd.f32 %v1050, %v1058
        %v1067 = vadd.f32 %v1051, %v1059
        %v1068 = vadd.f32 %v1052, %v1060
        %v1069 = vadd.f32 %v1053, %v1061
        %v1070 = vadd.f32 %v1054, %v1062
        %v1071 = vadd.f32 %v1055, %v1063
        %v1072 = vadd.f32 %v1056, %v1064
        %v1073 = vmul.f32 %v1019, %v1019
        %v1074 = vmul.f32 %v1021, %v1021
        %v1075 = vmul.f32 %v1025, %v1025
        %v1076 = vmul.f32 %v1027, %v1027
        %v1077 = vmul.f32 %v1031, %v1031
        %v1078 = vmul.f32 %v1033, %v1033
        %v1079 = vmul.f32 %v1037, %v1037
        %v1080 = vmul.f32 %v1039, %v1039
        %v1081 = vadd.f32 %v1065, %v1073
        %v1082 = vadd.f32 %v1066, %v1074
        %v1083 = vadd.f32 %v1067, %v1075
        %v1084 = vadd.f32 %v1068, %v1076
        %v1085 = vadd.f32 %v1069, %v1077
        %v1086 = vadd.f32 %v1070, %v1078
        %v1087 = vadd.f32 %v1071, %v1079
        %v1088 = vadd.f32 %v1072, %v1080
        %v1089 = vadd.f32 %v1081, 1e-06
        %v1090 = vadd.f32 %v1082, 1e-06
        %v1091 = vadd.f32 %v1083, 1e-06
        %v1092 = vadd.f32 %v1084, 1e-06
        %v1093 = vadd.f32 %v1085, 1e-06
        %v1094 = vadd.f32 %v1086, 1e-06
        %v1095 = vadd.f32 %v1087, 1e-06
        %v1096 = vadd.f32 %v1088, 1e-06
        %v1097 = vrsqrt.pop %v1089
        %v1098 = vmul.f32 %v1089, %v1097
        %vm1099 = vcmp.eq.f32.partialorder %v1089, inf
        %v1100 = vsel %vm1099, %v1089, %v1098
        %vm1101 = vcmp.eq.f32.partialorder %v1089, 0.0
        %v1102 = vand.u32 %v1089, 2147483648
        %v1103 = vsel %vm1101, %v1102, %v1100
        %v1104 = vrsqrt.pop %v1090
        %v1105 = vmul.f32 %v1090, %v1104
        %vm1106 = vcmp.eq.f32.partialorder %v1090, inf
        %v1107 = vsel %vm1106, %v1090, %v1105
        %vm1108 = vcmp.eq.f32.partialorder %v1090, 0.0
        %v1109 = vand.u32 %v1090, 2147483648
        %v1110 = vsel %vm1108, %v1109, %v1107
        %v1111 = vrsqrt.pop %v1091
        %v1112 = vmul.f32 %v1091, %v1111
        %vm1113 = vcmp.eq.f32.partialorder %v1091, inf
        %v1114 = vsel %vm1113, %v1091, %v1112
        %vm1115 = vcmp.eq.f32.partialorder %v1091, 0.0
        %v1116 = vand.u32 %v1091, 2147483648
        %v1117 = vsel %vm1115, %v1116, %v1114
        %v1118 = vrsqrt.pop %v1092
        %v1119 = vmul.f32 %v1092, %v1118
        %vm1120 = vcmp.eq.f32.partialorder %v1092, inf
        %v1121 = vsel %vm1120, %v1092, %v1119
        %vm1122 = vcmp.eq.f32.partialorder %v1092, 0.0
        %v1123 = vand.u32 %v1092, 2147483648
        %v1124 = vsel %vm1122, %v1123, %v1121
        %v1125 = vrsqrt.pop %v1093
        %v1126 = vmul.f32 %v1093, %v1125
        %vm1127 = vcmp.eq.f32.partialorder %v1093, inf
        %v1128 = vsel %vm1127, %v1093, %v1126
        %vm1129 = vcmp.eq.f32.partialorder %v1093, 0.0
        %v1130 = vand.u32 %v1093, 2147483648
        %v1131 = vsel %vm1129, %v1130, %v1128
        %v1132 = vrsqrt.pop %v1094
        %v1133 = vmul.f32 %v1094, %v1132
        %vm1134 = vcmp.eq.f32.partialorder %v1094, inf
        %v1135 = vsel %vm1134, %v1094, %v1133
        %vm1136 = vcmp.eq.f32.partialorder %v1094, 0.0
        %v1137 = vand.u32 %v1094, 2147483648
        %v1138 = vsel %vm1136, %v1137, %v1135
        %v1139 = vrsqrt.pop %v1095
        %v1140 = vmul.f32 %v1095, %v1139
        %vm1141 = vcmp.eq.f32.partialorder %v1095, inf
        %v1142 = vsel %vm1141, %v1095, %v1140
        %vm1143 = vcmp.eq.f32.partialorder %v1095, 0.0
        %v1144 = vand.u32 %v1095, 2147483648
        %v1145 = vsel %vm1143, %v1144, %v1142
        %v1146 = vrsqrt.pop %v1096
        %v1147 = vmul.f32 %v1096, %v1146
        %vm1148 = vcmp.eq.f32.partialorder %v1096, inf
        %v1149 = vsel %vm1148, %v1096, %v1147
        %vm1150 = vcmp.eq.f32.partialorder %v1096, 0.0
        %v1151 = vand.u32 %v1096, 2147483648
        %v1152 = vsel %vm1150, %v1151, %v1149
        %v1153 = vadd.f32 %v1103, %v1117
        %v1154 = vadd.f32 %v1153, %v1131
        %v1155 = vadd.f32 %v1154, %v1145
        %v1156 = vrot.slane %v1155, 4
        %v1157 = vadd.f32 %v1155, %v1156
        %v1158 = vrot.slane %v1157, 2
        %v1159 = vadd.f32 %v1157, %v1158
        %v1160 = vrot.slane %v1159, 1
        %v1161 = vadd.f32 %v1159, %v1160
        %v1162 = vadd.f32 %v1110, %v1124
        %v1163 = vadd.f32 %v1162, %v1138
        %v1164 = vadd.f32 %v1163, %v1152
        %v1165 = vrot.slane %v1164, 4
        %v1166 = vadd.f32 %v1164, %v1165
        %v1167 = vrot.slane %v1166, 2
        %v1168 = vadd.f32 %v1166, %v1167
        %v1169 = vrot.slane %v1168, 1
        %v1170 = vadd.f32 %v1168, %v1169
        %v1171 = vrcp.pop 32.0
        %v1172 = vmul.f32 %v1161, %v1171
        %v1173 = vmul.f32 %v1170, %v1171
        %v1174 = vadd.f32 %v1089, %v1091
        %v1175 = vadd.f32 %v1174, %v1093
        %v1176 = vadd.f32 %v1175, %v1095
        %v1177 = vrot.slane %v1176, 4
        %v1178 = vadd.f32 %v1176, %v1177
        %v1179 = vrot.slane %v1178, 2
        %v1180 = vadd.f32 %v1178, %v1179
        %v1181 = vrot.slane %v1180, 1
        %v1182 = vadd.f32 %v1180, %v1181
        %v1183 = vadd.f32 %v1090, %v1092
        %v1184 = vadd.f32 %v1183, %v1094
        %v1185 = vadd.f32 %v1184, %v1096
        %v1186 = vrot.slane %v1185, 4
        %v1187 = vadd.f32 %v1185, %v1186
        %v1188 = vrot.slane %v1187, 2
        %v1189 = vadd.f32 %v1187, %v1188
        %v1190 = vrot.slane %v1189, 1
        %v1191 = vadd.f32 %v1189, %v1190
        %v1192 = vmul.f32 %v1182, %v1171
        %v1193 = vmul.f32 %v1191, %v1171
        %v1194 = vmul.f32 %v1172, %v1172
        %v1195 = vmul.f32 %v1173, %v1173
        %v1196 = vsub.f32 %v1192, %v1194
        %v1197 = vsub.f32 %v1193, %v1195
        %v1198 = vmax.f32 %v1196, 0.0
        %v1199 = vmax.f32 %v1197, 0.0
        %v1200 = vsub.f32 %v1103, %v1172
        %v1201 = vsub.f32 %v1110, %v1173
        %v1202 = vsub.f32 %v1117, %v1172
        %v1203 = vsub.f32 %v1124, %v1173
        %v1204 = vsub.f32 %v1131, %v1172
        %v1205 = vsub.f32 %v1138, %v1173
        %v1206 = vsub.f32 %v1145, %v1172
        %v1207 = vsub.f32 %v1152, %v1173
        %v1208 = vadd.f32 %v1198, 1e-06
        %v1209 = vadd.f32 %v1199, 1e-06
        %v1210 = vrsqrt.pop %v1208
        %v1211 = vrsqrt.pop %v1209
        %v1212 = vmul.f32 %v1200, %v1210
        %v1213 = vmul.f32 %v1201, %v1211
        %v1214 = vmul.f32 %v1202, %v1210
        %v1215 = vmul.f32 %v1203, %v1211
        %v1216 = vmul.f32 %v1204, %v1210
        %v1217 = vmul.f32 %v1205, %v1211
        %v1218 = vmul.f32 %v1206, %v1210
        %v1219 = vmul.f32 %v1207, %v1211
        %1221 = vset.pattern.permute.xlu0 0
        %1222 = vperm.xlu0 %1221, %v1041
        %v1223 = vpop.permute.xlu0 %1222
        %1226 = vset.pattern.permute.xlu0 0
        %1227 = vperm.xlu0 %1226, %v1042
        %v1228 = vpop.permute.xlu0 %1227
        %1231 = vset.pattern.permute.xlu0 0
        %1232 = vperm.xlu0 %1231, %v1043
        %v1233 = vpop.permute.xlu0 %1232
        %1236 = vset.pattern.permute.xlu0 0
        %1237 = vperm.xlu0 %1236, %v1044
        %v1238 = vpop.permute.xlu0 %1237
        %v1240 = vmul.f32 %v1212, %v1223
        %v1241 = vmul.f32 %v1213, %v1223
        %v1242 = vmul.f32 %v1214, %v1228
        %v1243 = vmul.f32 %v1215, %v1228
        %v1244 = vmul.f32 %v1216, %v1233
        %v1245 = vmul.f32 %v1217, %v1233
        %v1246 = vmul.f32 %v1218, %v1238
        %v1247 = vmul.f32 %v1219, %v1238
        %1249 = vset.pattern.permute.xlu0 0
        %1250 = vperm.xlu0 %1249, %v1045
        %v1251 = vpop.permute.xlu0 %1250
        %1254 = vset.pattern.permute.xlu0 0
        %1255 = vperm.xlu0 %1254, %v1046
        %v1256 = vpop.permute.xlu0 %1255
        %1259 = vset.pattern.permute.xlu0 0
        %1260 = vperm.xlu0 %1259, %v1047
        %v1261 = vpop.permute.xlu0 %1260
        %1264 = vset.pattern.permute.xlu0 0
        %1265 = vperm.xlu0 %1264, %v1048
        %v1266 = vpop.permute.xlu0 %1265
        %v1268 = vadd.f32 %v1240, %v1251
        %v1269 = vadd.f32 %v1241, %v1251
        %v1270 = vadd.f32 %v1242, %v1256
        %v1271 = vadd.f32 %v1243, %v1256
        %v1272 = vadd.f32 %v1244, %v1261
        %v1273 = vadd.f32 %v1245, %v1261
        %v1274 = vadd.f32 %v1246, %v1266
        %v1275 = vadd.f32 %v1247, %v1266
        %v1276 = vrcp.pop %v1103
        %v1277 = vrcp.pop %v1110
        %v1278 = vrcp.pop %v1117
        %v1279 = vrcp.pop %v1124
        %v1280 = vrcp.pop %v1131
        %v1281 = vrcp.pop %v1138
        %v1282 = vrcp.pop %v1145
        %v1283 = vrcp.pop %v1152
        %v1284 = vmul.f32 %v1268, %v1276
        %v1285 = vmul.f32 %v1269, %v1277
        %v1286 = vmul.f32 %v1270, %v1278
        %v1287 = vmul.f32 %v1271, %v1279
        %v1288 = vmul.f32 %v1272, %v1280
        %v1289 = vmul.f32 %v1273, %v1281
        %v1290 = vmul.f32 %v1274, %v1282
        %v1291 = vmul.f32 %v1275, %v1283
        %v1292 = vmul.f32 %v841, %v1284
        %v1293 = vmul.f32 %v843, %v1285
        %v1294 = vmul.f32 %v930, %v1284
        %v1295 = vmul.f32 %v932, %v1285
        %v1296 = vmul.f32 %v1019, %v1284
        %v1297 = vmul.f32 %v1021, %v1285
        %v1298 = vmul.f32 %v847, %v1286
        %v1299 = vmul.f32 %v849, %v1287
        %v1300 = vmul.f32 %v936, %v1286
        %v1301 = vmul.f32 %v938, %v1287
        %v1302 = vmul.f32 %v1025, %v1286
        %v1303 = vmul.f32 %v1027, %v1287
        %v1304 = vmul.f32 %v853, %v1288
        %v1305 = vmul.f32 %v855, %v1289
        %v1306 = vmul.f32 %v942, %v1288
        %v1307 = vmul.f32 %v944, %v1289
        %v1308 = vmul.f32 %v1031, %v1288
        %v1309 = vmul.f32 %v1033, %v1289
        %v1310 = vmul.f32 %v859, %v1290
        %v1311 = vmul.f32 %v861, %v1291
        %v1312 = vmul.f32 %v948, %v1290
        %v1313 = vmul.f32 %v950, %v1291
        %v1314 = vmul.f32 %v1037, %v1290
        %v1315 = vmul.f32 %v1039, %v1291
        %v1316 = vld [vmem:[%s7] sm:$0xff]
        %v1317 = vld [vmem:[%s7 + $0x8] sm:$0xff]
        %v1318 = vld [vmem:[%s7 + $0x10] sm:$0xff]
        %v1319 = vld [vmem:[%s7 + $0x18] sm:$0xff]
        %vm1320 = vcmask 261120
        %v1322 = vsel %vm1320, %v1316, 0
        %v1325 = vsel %vm1320, %v1317, 0
        %v1328 = vsel %vm1320, %v1318, 0
        %v1331 = vsel %vm1320, %v1319, 0
        %1333 = vmatprep.subr.mxu0 %v1293
        %1334 = vmatpush1.msra.mxu0 %v1292
        %1335 = vmatprep.subr.mxu0 %v1299
        %1336 = vmatpush1.msra.mxu0 %v1298
        %1337 = vmatprep.subr.mxu0 %v1305
        %1338 = vmatpush1.msra.mxu0 %v1304
        %1339 = vmatprep.subr.mxu0 %v1311
        %1340 = vmatpush1.msra.mxu0 %v1310
        %1341 = vmatprep.subr.mxu0 0.0
        %1342 = vmatpush1.msra.mxu0 0.0
        %1343 = vmatprep.subr.mxu0 0.0
        %1344 = vmatpush1.msra.mxu0 0.0
        %1345 = vmatprep.subr.mxu0 0.0
        %1346 = vmatpush1.msra.mxu0 0.0
        %1347 = vmatprep.subr.mxu0 0.0
        %1348 = vmatpush1.msra.mxu0 0.0
        %1349 = vmatprep.subr.mxu0 0.0
        %1350 = vmatpush1.msra.mxu0 0.0
        %1351 = vmatprep.subr.mxu0 0.0
        %1352 = vmatpush1.msra.mxu0 0.0
        %1353 = vmatprep.subr.mxu0 0.0
        %1354 = vmatpush1.msra.mxu0 0.0
        %1355 = vmatprep.subr.mxu0 0.0
        %1356 = vmatpush1.msra.mxu0 0.0
        %1357 = vmatprep.subr.mxu0 0.0
        %1358 = vmatpush1.msra.mxu0 0.0
        %1359 = vmatprep.subr.mxu0 0.0
        %1360 = vmatpush1.msra.mxu0 0.0
        %1361 = vmatprep.subr.mxu0 0.0
        %1362 = vmatpush1.msra.mxu0 0.0
        %1363 = vmatprep.subr.mxu0 0.0
        %1364 = vmatpush1.msra.mxu0 0.0
        %1365 = vmatprep.subr.mxu0 0.0
        %1366 = vmatpush1.msra.mxu0 0.0
        %1367 = vmatprep.subr.mxu0 0.0
        %1368 = vmatpush1.msra.mxu0 0.0
        %1369 = vmatprep.subr.mxu0 0.0
        %1370 = vmatpush1.msra.mxu0 0.0
        %1371 = vmatprep.subr.mxu0 0.0
        %1372 = vmatpush1.msra.mxu0 0.0
        %1373 = vmatprep.subr.mxu0 0.0
        %1374 = vmatpush1.msra.mxu0 0.0
        %1375 = vmatprep.subr.mxu0 0.0
        %1376 = vmatpush1.msra.mxu0 0.0
        %1377 = vmatprep.subr.mxu0 0.0
        %1378 = vmatpush1.msra.mxu0 0.0
        %1379 = vmatprep.subr.mxu0 0.0
        %1380 = vmatpush1.msra.mxu0 0.0
        %1381 = vmatprep.subr.mxu0 0.0
        %1382 = vmatpush1.msra.mxu0 0.0
        %1383 = vmatprep.subr.mxu0 0.0
        %1384 = vmatpush1.msra.mxu0 0.0
        %1385 = vmatprep.subr.mxu0 0.0
        %1386 = vmatpush1.msra.mxu0 0.0
        %1387 = vmatprep.subr.mxu0 0.0
        %1388 = vmatpush1.msra.mxu0 0.0
        %1389 = vmatprep.subr.mxu0 0.0
        %1390 = vmatpush1.msra.mxu0 0.0
        %1391 = vmatprep.subr.mxu0 0.0
        %1392 = vmatpush1.msra.mxu0 0.0
        %1393 = vmatprep.subr.mxu0 0.0
        %1394 = vmatpush1.msra.mxu0 0.0
        %1395 = vmatprep.subr.mxu0 0.0
        %1396 = vmatpush1.msra.mxu0 0.0
        %1397 = vmatprep.mubr.f32.mxu0 0.0
        %1398 = vmatmul.mubr.f32.gmra.mrb[0].mxu0 %v1322
        %v1399 = vpop.f32.mrb[0].mxu0
        %v1400 = vadd.f32 0.0, %v1399
        %v1401 = vpop.f32.mrb[0].mxu0
        %v1402 = vadd.f32 0.0, %v1401
        %1403 = vmatprep.mubr.f32.mxu0 0.0
        %1404 = vmatmul.mubr.f32.gmra.mrb[0].mxu0 %v1325
        %v1405 = vpop.f32.mrb[0].mxu0
        %v1406 = vadd.f32 0.0, %v1405
        %v1407 = vpop.f32.mrb[0].mxu0
        %v1408 = vadd.f32 0.0, %v1407
        %1409 = vmatprep.mubr.f32.mxu0 0.0
        %1410 = vmatmul.mubr.f32.gmra.mrb[0].mxu0 %v1328
        %v1411 = vpop.f32.mrb[0].mxu0
        %v1412 = vadd.f32 0.0, %v1411
        %v1413 = vpop.f32.mrb[0].mxu0
        %v1414 = vadd.f32 0.0, %v1413
        %1415 = vmatprep.mubr.f32.mxu0 0.0
        %1416 = vmatmul.mubr.f32.gmra.mrb[0].mxu0 %v1331
        %v1417 = vpop.f32.mrb[0].mxu0
        %v1418 = vadd.f32 0.0, %v1417
        %v1419 = vpop.f32.mrb[0].mxu0
        %v1420 = vadd.f32 0.0, %v1419
        %1421 = vdwg.mxu0
        %1422 = vmatprep.subr.mxu0 %v1295
        %1423 = vmatpush1.msra.mxu0 %v1294
        %1424 = vmatprep.subr.mxu0 %v1301
        %1425 = vmatpush1.msra.mxu0 %v1300
        %1426 = vmatprep.subr.mxu0 %v1307
        %1427 = vmatpush1.msra.mxu0 %v1306
        %1428 = vmatprep.subr.mxu0 %v1313
        %1429 = vmatpush1.msra.mxu0 %v1312
        %1430 = vmatprep.subr.mxu0 0.0
        %1431 = vmatpush1.msra.mxu0 0.0
        %1432 = vmatprep.subr.mxu0 0.0
        %1433 = vmatpush1.msra.mxu0 0.0
        %1434 = vmatprep.subr.mxu0 0.0
        %1435 = vmatpush1.msra.mxu0 0.0
        %1436 = vmatprep.subr.mxu0 0.0
        %1437 = vmatpush1.msra.mxu0 0.0
        %1438 = vmatprep.subr.mxu0 0.0
        %1439 = vmatpush1.msra.mxu0 0.0
        %1440 = vmatprep.subr.mxu0 0.0
        %1441 = vmatpush1.msra.mxu0 0.0
        %1442 = vmatprep.subr.mxu0 0.0
        %1443 = vmatpush1.msra.mxu0 0.0
        %1444 = vmatprep.subr.mxu0 0.0
        %1445 = vmatpush1.msra.mxu0 0.0
        %1446 = vmatprep.subr.mxu0 0.0
        %1447 = vmatpush1.msra.mxu0 0.0
        %1448 = vmatprep.subr.mxu0 0.0
        %1449 = vmatpush1.msra.mxu0 0.0
        %1450 = vmatprep.subr.mxu0 0.0
        %1451 = vmatpush1.msra.mxu0 0.0
        %1452 = vmatprep.subr.mxu0 0.0
        %1453 = vmatpush1.msra.mxu0 0.0
        %1454 = vmatprep.subr.mxu0 0.0
        %1455 = vmatpush1.msra.mxu0 0.0
        %1456 = vmatprep.subr.mxu0 0.0
        %1457 = vmatpush1.msra.mxu0 0.0
        %1458 = vmatprep.subr.mxu0 0.0
        %1459 = vmatpush1.msra.mxu0 0.0
        %1460 = vmatprep.subr.mxu0 0.0
        %1461 = vmatpush1.msra.mxu0 0.0
        %1462 = vmatprep.subr.mxu0 0.0
        %1463 = vmatpush1.msra.mxu0 0.0
        %1464 = vmatprep.subr.mxu0 0.0
        %1465 = vmatpush1.msra.mxu0 0.0
        %1466 = vmatprep.subr.mxu0 0.0
        %1467 = vmatpush1.msra.mxu0 0.0
        %1468 = vmatprep.subr.mxu0 0.0
        %1469 = vmatpush1.msra.mxu0 0.0
        %1470 = vmatprep.subr.mxu0 0.0
        %1471 = vmatpush1.msra.mxu0 0.0
        %1472 = vmatprep.subr.mxu0 0.0
        %1473 = vmatpush1.msra.mxu0 0.0
        %1474 = vmatprep.subr.mxu0 0.0
        %1475 = vmatpush1.msra.mxu0 0.0
        %1476 = vmatprep.subr.mxu0 0.0
        %1477 = vmatpush1.msra.mxu0 0.0
        %1478 = vmatprep.subr.mxu0 0.0
        %1479 = vmatpush1.msra.mxu0 0.0
        %1480 = vmatprep.subr.mxu0 0.0
        %1481 = vmatpush1.msra.mxu0 0.0
        %1482 = vmatprep.subr.mxu0 0.0
        %1483 = vmatpush1.msra.mxu0 0.0
        %1484 = vmatprep.subr.mxu0 0.0
        %1485 = vmatpush1.msra.mxu0 0.0
        %1486 = vmatprep.mubr.f32.mxu0 0.0
        %1487 = vmatmul.mubr.f32.gmra.mrb[0].mxu0 %v1322
        %v1488 = vpop.f32.mrb[0].mxu0
        %v1489 = vadd.f32 0.0, %v1488
        %v1490 = vpop.f32.mrb[0].mxu0
        %v1491 = vadd.f32 0.0, %v1490
        %1492 = vmatprep.mubr.f32.mxu0 0.0
        %1493 = vmatmul.mubr.f32.gmra.mrb[0].mxu0 %v1325
        %v1494 = vpop.f32.mrb[0].mxu0
        %v1495 = vadd.f32 0.0, %v1494
        %v1496 = vpop.f32.mrb[0].mxu0
        %v1497 = vadd.f32 0.0, %v1496
        %1498 = vmatprep.mubr.f32.mxu0 0.0
        %1499 = vmatmul.mubr.f32.gmra.mrb[0].mxu0 %v1328
        %v1500 = vpop.f32.mrb[0].mxu0
        %v1501 = vadd.f32 0.0, %v1500
        %v1502 = vpop.f32.mrb[0].mxu0
        %v1503 = vadd.f32 0.0, %v1502
        %1504 = vmatprep.mubr.f32.mxu0 0.0
        %1505 = vmatmul.mubr.f32.gmra.mrb[0].mxu0 %v1331
        %v1506 = vpop.f32.mrb[0].mxu0
        %v1507 = vadd.f32 0.0, %v1506
        %v1508 = vpop.f32.mrb[0].mxu0
        %v1509 = vadd.f32 0.0, %v1508
        %1510 = vdwg.mxu0
        %1511 = vmatprep.subr.mxu0 %v1297
        %1512 = vmatpush1.msra.mxu0 %v1296
        %1513 = vmatprep.subr.mxu0 %v1303
        %1514 = vmatpush1.msra.mxu0 %v1302
        %1515 = vmatprep.subr.mxu0 %v1309
        %1516 = vmatpush1.msra.mxu0 %v1308
        %1517 = vmatprep.subr.mxu0 %v1315
        %1518 = vmatpush1.msra.mxu0 %v1314
        %1519 = vmatprep.subr.mxu0 0.0
        %1520 = vmatpush1.msra.mxu0 0.0
        %1521 = vmatprep.subr.mxu0 0.0
        %1522 = vmatpush1.msra.mxu0 0.0
        %1523 = vmatprep.subr.mxu0 0.0
        %1524 = vmatpush1.msra.mxu0 0.0
        %1525 = vmatprep.subr.mxu0 0.0
        %1526 = vmatpush1.msra.mxu0 0.0
        %1527 = vmatprep.subr.mxu0 0.0
        %1528 = vmatpush1.msra.mxu0 0.0
        %1529 = vmatprep.subr.mxu0 0.0
        %1530 = vmatpush1.msra.mxu0 0.0
        %1531 = vmatprep.subr.mxu0 0.0
        %1532 = vmatpush1.msra.mxu0 0.0
        %1533 = vmatprep.subr.mxu0 0.0
        %1534 = vmatpush1.msra.mxu0 0.0
        %1535 = vmatprep.subr.mxu0 0.0
        %1536 = vmatpush1.msra.mxu0 0.0
        %1537 = vmatprep.subr.mxu0 0.0
        %1538 = vmatpush1.msra.mxu0 0.0
        %1539 = vmatprep.subr.mxu0 0.0
        %1540 = vmatpush1.msra.mxu0 0.0
        %1541 = vmatprep.subr.mxu0 0.0
        %1542 = vmatpush1.msra.mxu0 0.0
        %1543 = vmatprep.subr.mxu0 0.0
        %1544 = vmatpush1.msra.mxu0 0.0
        %1545 = vmatprep.subr.mxu0 0.0
        %1546 = vmatpush1.msra.mxu0 0.0
        %1547 = vmatprep.subr.mxu0 0.0
        %1548 = vmatpush1.msra.mxu0 0.0
        %1549 = vmatprep.subr.mxu0 0.0
        %1550 = vmatpush1.msra.mxu0 0.0
        %1551 = vmatprep.subr.mxu0 0.0
        %1552 = vmatpush1.msra.mxu0 0.0
        %1553 = vmatprep.subr.mxu0 0.0
        %1554 = vmatpush1.msra.mxu0 0.0
        %1555 = vmatprep.subr.mxu0 0.0
        %1556 = vmatpush1.msra.mxu0 0.0
        %1557 = vmatprep.subr.mxu0 0.0
        %1558 = vmatpush1.msra.mxu0 0.0
        %1559 = vmatprep.subr.mxu0 0.0
        %1560 = vmatpush1.msra.mxu0 0.0
        %1561 = vmatprep.subr.mxu0 0.0
        %1562 = vmatpush1.msra.mxu0 0.0
        %1563 = vmatprep.subr.mxu0 0.0
        %1564 = vmatpush1.msra.mxu0 0.0
        %1565 = vmatprep.subr.mxu0 0.0
        %1566 = vmatpush1.msra.mxu0 0.0
        %1567 = vmatprep.subr.mxu0 0.0
        %1568 = vmatpush1.msra.mxu0 0.0
        %1569 = vmatprep.subr.mxu0 0.0
        %1570 = vmatpush1.msra.mxu0 0.0
        %1571 = vmatprep.subr.mxu0 0.0
        %1572 = vmatpush1.msra.mxu0 0.0
        %1573 = vmatprep.subr.mxu0 0.0
        %1574 = vmatpush1.msra.mxu0 0.0
        %1575 = vmatprep.mubr.f32.mxu0 0.0
        %1576 = vmatmul.mubr.f32.gmra.mrb[0].mxu0 %v1322
        %v1577 = vpop.f32.mrb[0].mxu0
        %v1578 = vadd.f32 0.0, %v1577
        %v1579 = vpop.f32.mrb[0].mxu0
        %v1580 = vadd.f32 0.0, %v1579
        %1581 = vmatprep.mubr.f32.mxu0 0.0
        %1582 = vmatmul.mubr.f32.gmra.mrb[0].mxu0 %v1325
        %v1583 = vpop.f32.mrb[0].mxu0
        %v1584 = vadd.f32 0.0, %v1583
        %v1585 = vpop.f32.mrb[0].mxu0
        %v1586 = vadd.f32 0.0, %v1585
        %1587 = vmatprep.mubr.f32.mxu0 0.0
        %1588 = vmatmul.mubr.f32.gmra.mrb[0].mxu0 %v1328
        %v1589 = vpop.f32.mrb[0].mxu0
        %v1590 = vadd.f32 0.0, %v1589
        %v1591 = vpop.f32.mrb[0].mxu0
        %v1592 = vadd.f32 0.0, %v1591
        %1593 = vmatprep.mubr.f32.mxu0 0.0
        %1594 = vmatmul.mubr.f32.gmra.mrb[0].mxu0 %v1331
        %v1595 = vpop.f32.mrb[0].mxu0
        %v1596 = vadd.f32 0.0, %v1595
        %v1597 = vpop.f32.mrb[0].mxu0
        %v1598 = vadd.f32 0.0, %v1597
        %1599 = vdwg.mxu0
        %v1600 = vmul.f32 %v1292, %v1400
        %v1601 = vmul.f32 %v1293, %v1402
        %v1602 = vmul.f32 %v1298, %v1406
        %v1603 = vmul.f32 %v1299, %v1408
        %v1604 = vmul.f32 %v1304, %v1412
        %v1605 = vmul.f32 %v1305, %v1414
        %v1606 = vmul.f32 %v1310, %v1418
        %v1607 = vmul.f32 %v1311, %v1420
        %v1608 = vmul.f32 %v1294, %v1489
        %v1609 = vmul.f32 %v1295, %v1491
        %v1610 = vmul.f32 %v1300, %v1495
        %v1611 = vmul.f32 %v1301, %v1497
        %v1612 = vmul.f32 %v1306, %v1501
        %v1613 = vmul.f32 %v1307, %v1503
        %v1614 = vmul.f32 %v1312, %v1507
        %v1615 = vmul.f32 %v1313, %v1509
        %v1616 = vadd.f32 %v1600, %v1608
        %v1617 = vadd.f32 %v1601, %v1609
        %v1618 = vadd.f32 %v1602, %v1610
        %v1619 = vadd.f32 %v1603, %v1611
        %v1620 = vadd.f32 %v1604, %v1612
        %v1621 = vadd.f32 %v1605, %v1613
        %v1622 = vadd.f32 %v1606, %v1614
        %v1623 = vadd.f32 %v1607, %v1615
        %v1624 = vmul.f32 %v1296, %v1578
        %v1625 = vmul.f32 %v1297, %v1580
        %v1626 = vmul.f32 %v1302, %v1584
        %v1627 = vmul.f32 %v1303, %v1586
        %v1628 = vmul.f32 %v1308, %v1590
        %v1629 = vmul.f32 %v1309, %v1592
        %v1630 = vmul.f32 %v1314, %v1596
        %v1631 = vmul.f32 %v1315, %v1598
        %v1632 = vadd.f32 %v1616, %v1624
        %v1633 = vadd.f32 %v1617, %v1625
        %v1634 = vadd.f32 %v1618, %v1626
        %v1635 = vadd.f32 %v1619, %v1627
        %v1636 = vadd.f32 %v1620, %v1628
        %v1637 = vadd.f32 %v1621, %v1629
        %v1638 = vadd.f32 %v1622, %v1630
        %v1639 = vadd.f32 %v1623, %v1631
        %v1640 = vmul.f32 %v1400, %v1400
        %v1641 = vmul.f32 %v1402, %v1402
        %v1642 = vmul.f32 %v1406, %v1406
        %v1643 = vmul.f32 %v1408, %v1408
        %v1644 = vmul.f32 %v1412, %v1412
        %v1645 = vmul.f32 %v1414, %v1414
        %v1646 = vmul.f32 %v1418, %v1418
        %v1647 = vmul.f32 %v1420, %v1420
        %v1648 = vmul.f32 %v1489, %v1489
        %v1649 = vmul.f32 %v1491, %v1491
        %v1650 = vmul.f32 %v1495, %v1495
        %v1651 = vmul.f32 %v1497, %v1497
        %v1652 = vmul.f32 %v1501, %v1501
        %v1653 = vmul.f32 %v1503, %v1503
        %v1654 = vmul.f32 %v1507, %v1507
        %v1655 = vmul.f32 %v1509, %v1509
        %v1656 = vadd.f32 %v1640, %v1648
        %v1657 = vadd.f32 %v1641, %v1649
        %v1658 = vadd.f32 %v1642, %v1650
        %v1659 = vadd.f32 %v1643, %v1651
        %v1660 = vadd.f32 %v1644, %v1652
        %v1661 = vadd.f32 %v1645, %v1653
        %v1662 = vadd.f32 %v1646, %v1654
        %v1663 = vadd.f32 %v1647, %v1655
        %v1664 = vmul.f32 %v1578, %v1578
        %v1665 = vmul.f32 %v1580, %v1580
        %v1666 = vmul.f32 %v1584, %v1584
        %v1667 = vmul.f32 %v1586, %v1586
        %v1668 = vmul.f32 %v1590, %v1590
        %v1669 = vmul.f32 %v1592, %v1592
        %v1670 = vmul.f32 %v1596, %v1596
        %v1671 = vmul.f32 %v1598, %v1598
        %v1672 = vadd.f32 %v1656, %v1664
        %v1673 = vadd.f32 %v1657, %v1665
        %v1674 = vadd.f32 %v1658, %v1666
        %v1675 = vadd.f32 %v1659, %v1667
        %v1676 = vadd.f32 %v1660, %v1668
        %v1677 = vadd.f32 %v1661, %v1669
        %v1678 = vadd.f32 %v1662, %v1670
        %v1679 = vadd.f32 %v1663, %v1671
        %v1680 = vadd.f32 %v1672, 1e-06
        %v1681 = vadd.f32 %v1673, 1e-06
        %v1682 = vadd.f32 %v1674, 1e-06
        %v1683 = vadd.f32 %v1675, 1e-06
        %v1684 = vadd.f32 %v1676, 1e-06
        %v1685 = vadd.f32 %v1677, 1e-06
        %v1686 = vadd.f32 %v1678, 1e-06
        %v1687 = vadd.f32 %v1679, 1e-06
        %v1688 = vmin.f32 %v1632, 0.0
        %v1689 = vmin.f32 %v1633, 0.0
        %v1690 = vmin.f32 %v1634, 0.0
        %v1691 = vmin.f32 %v1635, 0.0
        %v1692 = vmin.f32 %v1636, 0.0
        %v1693 = vmin.f32 %v1637, 0.0
        %v1694 = vmin.f32 %v1638, 0.0
        %v1695 = vmin.f32 %v1639, 0.0
        %v1696 = vrcp.pop %v1680
        %v1697 = vrcp.pop %v1681
        %v1698 = vrcp.pop %v1682
        %v1699 = vrcp.pop %v1683
        %v1700 = vrcp.pop %v1684
        %v1701 = vrcp.pop %v1685
        %v1702 = vrcp.pop %v1686
        %v1703 = vrcp.pop %v1687
        %v1704 = vmul.f32 %v1688, %v1696
        %v1705 = vmul.f32 %v1689, %v1697
        %v1706 = vmul.f32 %v1690, %v1698
        %v1707 = vmul.f32 %v1691, %v1699
        %v1708 = vmul.f32 %v1692, %v1700
        %v1709 = vmul.f32 %v1693, %v1701
        %v1710 = vmul.f32 %v1694, %v1702
        %v1711 = vmul.f32 %v1695, %v1703
        %v1712 = vmul.f32 %v1704, %v1400
        %v1713 = vmul.f32 %v1705, %v1402
        %v1714 = vmul.f32 %v1704, %v1489
        %v1715 = vmul.f32 %v1705, %v1491
        %v1716 = vmul.f32 %v1704, %v1578
        %v1717 = vmul.f32 %v1705, %v1580
        %v1718 = vmul.f32 %v1706, %v1406
        %v1719 = vmul.f32 %v1707, %v1408
        %v1720 = vmul.f32 %v1706, %v1495
        %v1721 = vmul.f32 %v1707, %v1497
        %v1722 = vmul.f32 %v1706, %v1584
        %v1723 = vmul.f32 %v1707, %v1586
        %v1724 = vmul.f32 %v1708, %v1412
        %v1725 = vmul.f32 %v1709, %v1414
        %v1726 = vmul.f32 %v1708, %v1501
        %v1727 = vmul.f32 %v1709, %v1503
        %v1728 = vmul.f32 %v1708, %v1590
        %v1729 = vmul.f32 %v1709, %v1592
        %v1730 = vmul.f32 %v1710, %v1418
        %v1731 = vmul.f32 %v1711, %v1420
        %v1732 = vmul.f32 %v1710, %v1507
        %v1733 = vmul.f32 %v1711, %v1509
        %v1734 = vmul.f32 %v1710, %v1596
        %v1735 = vmul.f32 %v1711, %v1598
        %v1736 = vsub.f32 %v1292, %v1712
        %v1737 = vsub.f32 %v1293, %v1713
        %v1738 = vsub.f32 %v1294, %v1714
        %v1739 = vsub.f32 %v1295, %v1715
        %v1740 = vsub.f32 %v1296, %v1716
        %v1741 = vsub.f32 %v1297, %v1717
        %v1742 = vsub.f32 %v1298, %v1718
        %v1743 = vsub.f32 %v1299, %v1719
        %v1744 = vsub.f32 %v1300, %v1720
        %v1745 = vsub.f32 %v1301, %v1721
        %v1746 = vsub.f32 %v1302, %v1722
        %v1747 = vsub.f32 %v1303, %v1723
        %v1748 = vsub.f32 %v1304, %v1724
        %v1749 = vsub.f32 %v1305, %v1725
        %v1750 = vsub.f32 %v1306, %v1726
        %v1751 = vsub.f32 %v1307, %v1727
        %v1752 = vsub.f32 %v1308, %v1728
        %v1753 = vsub.f32 %v1309, %v1729
        %v1754 = vsub.f32 %v1310, %v1730
        %v1755 = vsub.f32 %v1311, %v1731
        %v1756 = vsub.f32 %v1312, %v1732
        %v1757 = vsub.f32 %v1313, %v1733
        %v1758 = vsub.f32 %v1314, %v1734
        %v1759 = vsub.f32 %v1315, %v1735
        %1760 = vst [vmem:[%s671] sm:$0xff] %v1736
        %1761 = vst [vmem:[%s671 + $0x8] sm:$0xff] %v1737
        %1762 = vst [vmem:[%s671 + $0x10] sm:$0xff] %v1742
        %1763 = vst [vmem:[%s671 + $0x18] sm:$0xff] %v1743
        %1764 = vst [vmem:[%s671 + $0x20] sm:$0xff] %v1748
        %1765 = vst [vmem:[%s671 + $0x28] sm:$0xff] %v1749
        %1766 = vst [vmem:[%s671 + $0x30] sm:$0xff] %v1754
        %1767 = vst [vmem:[%s671 + $0x38] sm:$0xff] %v1755
        %v1768 = vld [vmem:[%s717] sm:$0xff]
        %v1769 = vld [vmem:[%s717 + $0x8] sm:$0xff]
        %v1770 = vld [vmem:[%s717 + $0x10] sm:$0xff]
        %v1771 = vld [vmem:[%s717 + $0x18] sm:$0xff]
        %v1772 = vadd.f32 %v1736, %v1737
        %1773 = vadd.xlane.f32.xlu0 %v1772
        %v1774 = vpop.xlane.xlu0 %1773
        %v1775 = vadd.f32 %v1742, %v1743
        %1776 = vadd.xlane.f32.xlu0 %v1775
        %v1777 = vpop.xlane.xlu0 %1776
        %v1778 = vadd.f32 %v1748, %v1749
        %1779 = vadd.xlane.f32.xlu0 %v1778
        %v1780 = vpop.xlane.xlu0 %1779
        %v1781 = vadd.f32 %v1754, %v1755
        %1782 = vadd.xlane.f32.xlu0 %v1781
        %v1783 = vpop.xlane.xlu0 %1782
        %v1784 = vadd.f32 %v1768, %v1774
        %v1785 = vadd.f32 %v1769, %v1777
        %v1786 = vadd.f32 %v1770, %v1780
        %v1787 = vadd.f32 %v1771, %v1783
        %vm1788 = vcmask 7168
        %1789 = vst.msk [vmem:[%s717] sm:$0xff] %vm1788, %v1784
        %1790 = vst.msk [vmem:[%s717 + $0x8] sm:$0xff] %vm1788, %v1785
        %1791 = vst.msk [vmem:[%s717 + $0x10] sm:$0xff] %vm1788, %v1786
        %1792 = vst.msk [vmem:[%s717 + $0x18] sm:$0xff] %vm1788, %v1787
        %s1793 = scalar_lea.vmem %s671, 64 [#allocation2]
        %1794 = vst [vmem:[%s1793] sm:$0xff] %v1738
        %1795 = vst [vmem:[%s1793 + $0x8] sm:$0xff] %v1739
        %1796 = vst [vmem:[%s1793 + $0x10] sm:$0xff] %v1744
        %1797 = vst [vmem:[%s1793 + $0x18] sm:$0xff] %v1745
        %1798 = vst [vmem:[%s1793 + $0x20] sm:$0xff] %v1750
        %1799 = vst [vmem:[%s1793 + $0x28] sm:$0xff] %v1751
        %1800 = vst [vmem:[%s1793 + $0x30] sm:$0xff] %v1756
        %1801 = vst [vmem:[%s1793 + $0x38] sm:$0xff] %v1757
        %s1802 = scalar_lea.vmem %s717, 32
        %v1803 = vld [vmem:[%s1802] sm:$0xff]
        %v1804 = vld [vmem:[%s1802 + $0x8] sm:$0xff]
        %v1805 = vld [vmem:[%s1802 + $0x10] sm:$0xff]
        %v1806 = vld [vmem:[%s1802 + $0x18] sm:$0xff]
        %v1807 = vadd.f32 %v1738, %v1739
        %1808 = vadd.xlane.f32.xlu0 %v1807
        %v1809 = vpop.xlane.xlu0 %1808
        %v1810 = vadd.f32 %v1744, %v1745
        %1811 = vadd.xlane.f32.xlu0 %v1810
        %v1812 = vpop.xlane.xlu0 %1811
        %v1813 = vadd.f32 %v1750, %v1751
        %1814 = vadd.xlane.f32.xlu0 %v1813
        %v1815 = vpop.xlane.xlu0 %1814
        %v1816 = vadd.f32 %v1756, %v1757
        %1817 = vadd.xlane.f32.xlu0 %v1816
        %v1818 = vpop.xlane.xlu0 %1817
        %v1819 = vadd.f32 %v1803, %v1809
        %v1820 = vadd.f32 %v1804, %v1812
        %v1821 = vadd.f32 %v1805, %v1815
        %v1822 = vadd.f32 %v1806, %v1818
        %1823 = vst.msk [vmem:[%s1802] sm:$0xff] %vm1788, %v1819
        %1824 = vst.msk [vmem:[%s1802 + $0x8] sm:$0xff] %vm1788, %v1820
        %1825 = vst.msk [vmem:[%s1802 + $0x10] sm:$0xff] %vm1788, %v1821
        %1826 = vst.msk [vmem:[%s1802 + $0x18] sm:$0xff] %vm1788, %v1822
        %s1827 = scalar_lea.vmem %s671, 128 [#allocation2]
        %1828 = vst [vmem:[%s1827] sm:$0xff] %v1740
        %1829 = vst [vmem:[%s1827 + $0x8] sm:$0xff] %v1741
        %1830 = vst [vmem:[%s1827 + $0x10] sm:$0xff] %v1746
        %1831 = vst [vmem:[%s1827 + $0x18] sm:$0xff] %v1747
        %1832 = vst [vmem:[%s1827 + $0x20] sm:$0xff] %v1752
        %1833 = vst [vmem:[%s1827 + $0x28] sm:$0xff] %v1753
        %1834 = vst [vmem:[%s1827 + $0x30] sm:$0xff] %v1758
        %1835 = vst [vmem:[%s1827 + $0x38] sm:$0xff] %v1759
        %s1836 = scalar_lea.vmem %s717, 64
        %v1837 = vld [vmem:[%s1836] sm:$0xff]
        %v1838 = vld [vmem:[%s1836 + $0x8] sm:$0xff]
        %v1839 = vld [vmem:[%s1836 + $0x10] sm:$0xff]
        %v1840 = vld [vmem:[%s1836 + $0x18] sm:$0xff]
        %v1841 = vadd.f32 %v1740, %v1741
        %1842 = vadd.xlane.f32.xlu0 %v1841
        %v1843 = vpop.xlane.xlu0 %1842
        %v1844 = vadd.f32 %v1746, %v1747
        %1845 = vadd.xlane.f32.xlu0 %v1844
        %v1846 = vpop.xlane.xlu0 %1845
        %v1847 = vadd.f32 %v1752, %v1753
        %1848 = vadd.xlane.f32.xlu0 %v1847
        %v1849 = vpop.xlane.xlu0 %1848
        %v1850 = vadd.f32 %v1758, %v1759
        %1851 = vadd.xlane.f32.xlu0 %v1850
        %v1852 = vpop.xlane.xlu0 %1851
        %v1853 = vadd.f32 %v1837, %v1843
        %v1854 = vadd.f32 %v1838, %v1846
        %v1855 = vadd.f32 %v1839, %v1849
        %v1856 = vadd.f32 %v1840, %v1852
        %1857 = vst.msk [vmem:[%s1836] sm:$0xff] %vm1788, %v1853
        %1858 = vst.msk [vmem:[%s1836 + $0x8] sm:$0xff] %vm1788, %v1854
        %1859 = vst.msk [vmem:[%s1836 + $0x10] sm:$0xff] %vm1788, %v1855
        %1860 = vst.msk [vmem:[%s1836 + $0x18] sm:$0xff] %vm1788, %v1856
        %v1861 = vld [vmem:[%s8] sm:$0xff]
        %v1862 = vld [vmem:[%s8 + $0x8] sm:$0xff]
        %v1863 = vld [vmem:[%s8 + $0x10] sm:$0xff]
        %v1864 = vld [vmem:[%s8 + $0x18] sm:$0xff]
        %v1865 = vld [vmem:[%s8 + $0x20] sm:$0xff]
        %v1866 = vld [vmem:[%s8 + $0x28] sm:$0xff]
        %v1867 = vld [vmem:[%s8 + $0x30] sm:$0xff]
        %v1868 = vld [vmem:[%s8 + $0x38] sm:$0xff]
        %v1870 = vsel %vm1320, %v1861, 0
        %v1873 = vsel %vm1320, %v1862, 0
        %v1876 = vsel %vm1320, %v1863, 0
        %v1879 = vsel %vm1320, %v1864, 0
        %v1882 = vsel %vm1320, %v1865, 0
        %v1885 = vsel %vm1320, %v1866, 0
        %v1888 = vsel %vm1320, %v1867, 0
        %v1891 = vsel %vm1320, %v1868, 0
        %1893 = vmatprep.subr.mxu0 %v1737
        %1894 = vmatpush1.msra.mxu0 %v1736
        %1895 = vmatprep.subr.mxu0 %v1743
        %1896 = vmatpush1.msra.mxu0 %v1742
        %1897 = vmatprep.subr.mxu0 %v1749
        %1898 = vmatpush1.msra.mxu0 %v1748
        %1899 = vmatprep.subr.mxu0 %v1755
        %1900 = vmatpush1.msra.mxu0 %v1754
        %1901 = vmatprep.subr.mxu0 0.0
        %1902 = vmatpush1.msra.mxu0 0.0
        %1903 = vmatprep.subr.mxu0 0.0
        %1904 = vmatpush1.msra.mxu0 0.0
        %1905 = vmatprep.subr.mxu0 0.0
        %1906 = vmatpush1.msra.mxu0 0.0
        %1907 = vmatprep.subr.mxu0 0.0
        %1908 = vmatpush1.msra.mxu0 0.0
        %1909 = vmatprep.subr.mxu0 0.0
        %1910 = vmatpush1.msra.mxu0 0.0
        %1911 = vmatprep.subr.mxu0 0.0
        %1912 = vmatpush1.msra.mxu0 0.0
        %1913 = vmatprep.subr.mxu0 0.0
        %1914 = vmatpush1.msra.mxu0 0.0
        %1915 = vmatprep.subr.mxu0 0.0
        %1916 = vmatpush1.msra.mxu0 0.0
        %1917 = vmatprep.subr.mxu0 0.0
        %1918 = vmatpush1.msra.mxu0 0.0
        %1919 = vmatprep.subr.mxu0 0.0
        %1920 = vmatpush1.msra.mxu0 0.0
        %1921 = vmatprep.subr.mxu0 0.0
        %1922 = vmatpush1.msra.mxu0 0.0
        %1923 = vmatprep.subr.mxu0 0.0
        %1924 = vmatpush1.msra.mxu0 0.0
        %1925 = vmatprep.subr.mxu0 0.0
        %1926 = vmatpush1.msra.mxu0 0.0
        %1927 = vmatprep.subr.mxu0 0.0
        %1928 = vmatpush1.msra.mxu0 0.0
        %1929 = vmatprep.subr.mxu0 0.0
        %1930 = vmatpush1.msra.mxu0 0.0
        %1931 = vmatprep.subr.mxu0 0.0
        %1932 = vmatpush1.msra.mxu0 0.0
        %1933 = vmatprep.subr.mxu0 0.0
        %1934 = vmatpush1.msra.mxu0 0.0
        %1935 = vmatprep.subr.mxu0 0.0
        %1936 = vmatpush1.msra.mxu0 0.0
        %1937 = vmatprep.subr.mxu0 0.0
        %1938 = vmatpush1.msra.mxu0 0.0
        %1939 = vmatprep.subr.mxu0 0.0
        %1940 = vmatpush1.msra.mxu0 0.0
        %1941 = vmatprep.subr.mxu0 0.0
        %1942 = vmatpush1.msra.mxu0 0.0
        %1943 = vmatprep.subr.mxu0 0.0
        %1944 = vmatpush1.msra.mxu0 0.0
        %1945 = vmatprep.subr.mxu0 0.0
        %1946 = vmatpush1.msra.mxu0 0.0
        %1947 = vmatprep.subr.mxu0 0.0
        %1948 = vmatpush1.msra.mxu0 0.0
        %1949 = vmatprep.subr.mxu0 0.0
        %1950 = vmatpush1.msra.mxu0 0.0
        %1951 = vmatprep.subr.mxu0 0.0
        %1952 = vmatpush1.msra.mxu0 0.0
        %1953 = vmatprep.subr.mxu0 0.0
        %1954 = vmatpush1.msra.mxu0 0.0
        %1955 = vmatprep.subr.mxu0 0.0
        %1956 = vmatpush1.msra.mxu0 0.0
        %1957 = vmatprep.mubr.f32.mxu0 0.0
        %1958 = vmatmul.mubr.f32.gmra.mrb[0].mxu0 %v1870
        %v1959 = vpop.f32.mrb[0].mxu0
        %v1960 = vadd.f32 0.0, %v1959
        %v1961 = vpop.f32.mrb[0].mxu0
        %v1962 = vadd.f32 0.0, %v1961
        %1963 = vmatprep.mubr.f32.mxu0 0.0
        %1964 = vmatmul.mubr.f32.gmra.mrb[0].mxu0 %v1873
        %v1965 = vpop.f32.mrb[0].mxu0
        %v1966 = vadd.f32 0.0, %v1965
        %v1967 = vpop.f32.mrb[0].mxu0
        %v1968 = vadd.f32 0.0, %v1967
        %1969 = vmatprep.mubr.f32.mxu0 0.0
        %1970 = vmatmul.mubr.f32.gmra.mrb[0].mxu0 %v1876
        %v1971 = vpop.f32.mrb[0].mxu0
        %v1972 = vadd.f32 0.0, %v1971
        %v1973 = vpop.f32.mrb[0].mxu0
        %v1974 = vadd.f32 0.0, %v1973
        %1975 = vmatprep.mubr.f32.mxu0 0.0
        %1976 = vmatmul.mubr.f32.gmra.mrb[0].mxu0 %v1879
        %v1977 = vpop.f32.mrb[0].mxu0
        %v1978 = vadd.f32 0.0, %v1977
        %v1979 = vpop.f32.mrb[0].mxu0
        %v1980 = vadd.f32 0.0, %v1979
        %1981 = vmatprep.mubr.f32.mxu0 0.0
        %1982 = vmatmul.mubr.f32.gmra.mrb[0].mxu0 %v1882
        %v1983 = vpop.f32.mrb[0].mxu0
        %v1984 = vadd.f32 0.0, %v1983
        %v1985 = vpop.f32.mrb[0].mxu0
        %v1986 = vadd.f32 0.0, %v1985
        %1987 = vmatprep.mubr.f32.mxu0 0.0
        %1988 = vmatmul.mubr.f32.gmra.mrb[0].mxu0 %v1885
        %v1989 = vpop.f32.mrb[0].mxu0
        %v1990 = vadd.f32 0.0, %v1989
        %v1991 = vpop.f32.mrb[0].mxu0
        %v1992 = vadd.f32 0.0, %v1991
        %1993 = vmatprep.mubr.f32.mxu0 0.0
        %1994 = vmatmul.mubr.f32.gmra.mrb[0].mxu0 %v1888
        %v1995 = vpop.f32.mrb[0].mxu0
        %v1996 = vadd.f32 0.0, %v1995
        %v1997 = vpop.f32.mrb[0].mxu0
        %v1998 = vadd.f32 0.0, %v1997
        %1999 = vmatprep.mubr.f32.mxu0 0.0
        %2000 = vmatmul.mubr.f32.gmra.mrb[0].mxu0 %v1891
        %v2001 = vpop.f32.mrb[0].mxu0
        %v2002 = vadd.f32 0.0, %v2001
        %v2003 = vpop.f32.mrb[0].mxu0
        %v2004 = vadd.f32 0.0, %v2003
        %2005 = vdwg.mxu0
        %2006 = vmatprep.subr.mxu0 %v1739
        %2007 = vmatpush1.msra.mxu0 %v1738
        %2008 = vmatprep.subr.mxu0 %v1745
        %2009 = vmatpush1.msra.mxu0 %v1744
        %2010 = vmatprep.subr.mxu0 %v1751
        %2011 = vmatpush1.msra.mxu0 %v1750
        %2012 = vmatprep.subr.mxu0 %v1757
        %2013 = vmatpush1.msra.mxu0 %v1756
        %2014 = vmatprep.subr.mxu0 0.0
        %2015 = vmatpush1.msra.mxu0 0.0
        %2016 = vmatprep.subr.mxu0 0.0
        %2017 = vmatpush1.msra.mxu0 0.0
        %2018 = vmatprep.subr.mxu0 0.0
        %2019 = vmatpush1.msra.mxu0 0.0
        %2020 = vmatprep.subr.mxu0 0.0
        %2021 = vmatpush1.msra.mxu0 0.0
        %2022 = vmatprep.subr.mxu0 0.0
        %2023 = vmatpush1.msra.mxu0 0.0
        %2024 = vmatprep.subr.mxu0 0.0
        %2025 = vmatpush1.msra.mxu0 0.0
        %2026 = vmatprep.subr.mxu0 0.0
        %2027 = vmatpush1.msra.mxu0 0.0
        %2028 = vmatprep.subr.mxu0 0.0
        %2029 = vmatpush1.msra.mxu0 0.0
        %2030 = vmatprep.subr.mxu0 0.0
        %2031 = vmatpush1.msra.mxu0 0.0
        %2032 = vmatprep.subr.mxu0 0.0
        %2033 = vmatpush1.msra.mxu0 0.0
        %2034 = vmatprep.subr.mxu0 0.0
        %2035 = vmatpush1.msra.mxu0 0.0
        %2036 = vmatprep.subr.mxu0 0.0
        %2037 = vmatpush1.msra.mxu0 0.0
        %2038 = vmatprep.subr.mxu0 0.0
        %2039 = vmatpush1.msra.mxu0 0.0
        %2040 = vmatprep.subr.mxu0 0.0
        %2041 = vmatpush1.msra.mxu0 0.0
        %2042 = vmatprep.subr.mxu0 0.0
        %2043 = vmatpush1.msra.mxu0 0.0
        %2044 = vmatprep.subr.mxu0 0.0
        %2045 = vmatpush1.msra.mxu0 0.0
        %2046 = vmatprep.subr.mxu0 0.0
        %2047 = vmatpush1.msra.mxu0 0.0
        %2048 = vmatprep.subr.mxu0 0.0
        %2049 = vmatpush1.msra.mxu0 0.0
        %2050 = vmatprep.subr.mxu0 0.0
        %2051 = vmatpush1.msra.mxu0 0.0
        %2052 = vmatprep.subr.mxu0 0.0
        %2053 = vmatpush1.msra.mxu0 0.0
        %2054 = vmatprep.subr.mxu0 0.0
        %2055 = vmatpush1.msra.mxu0 0.0
        %2056 = vmatprep.subr.mxu0 0.0
        %2057 = vmatpush1.msra.mxu0 0.0
        %2058 = vmatprep.subr.mxu0 0.0
        %2059 = vmatpush1.msra.mxu0 0.0
        %2060 = vmatprep.subr.mxu0 0.0
        %2061 = vmatpush1.msra.mxu0 0.0
        %2062 = vmatprep.subr.mxu0 0.0
        %2063 = vmatpush1.msra.mxu0 0.0
        %2064 = vmatprep.subr.mxu0 0.0
        %2065 = vmatpush1.msra.mxu0 0.0
        %2066 = vmatprep.subr.mxu0 0.0
        %2067 = vmatpush1.msra.mxu0 0.0
        %2068 = vmatprep.subr.mxu0 0.0
        %2069 = vmatpush1.msra.mxu0 0.0
        %2070 = vmatprep.mubr.f32.mxu0 0.0
        %2071 = vmatmul.mubr.f32.gmra.mrb[0].mxu0 %v1870
        %v2072 = vpop.f32.mrb[0].mxu0
        %v2073 = vadd.f32 0.0, %v2072
        %v2074 = vpop.f32.mrb[0].mxu0
        %v2075 = vadd.f32 0.0, %v2074
        %2076 = vmatprep.mubr.f32.mxu0 0.0
        %2077 = vmatmul.mubr.f32.gmra.mrb[0].mxu0 %v1873
        %v2078 = vpop.f32.mrb[0].mxu0
        %v2079 = vadd.f32 0.0, %v2078
        %v2080 = vpop.f32.mrb[0].mxu0
        %v2081 = vadd.f32 0.0, %v2080
        %2082 = vmatprep.mubr.f32.mxu0 0.0
        %2083 = vmatmul.mubr.f32.gmra.mrb[0].mxu0 %v1876
        %v2084 = vpop.f32.mrb[0].mxu0
        %v2085 = vadd.f32 0.0, %v2084
        %v2086 = vpop.f32.mrb[0].mxu0
        %v2087 = vadd.f32 0.0, %v2086
        %2088 = vmatprep.mubr.f32.mxu0 0.0
        %2089 = vmatmul.mubr.f32.gmra.mrb[0].mxu0 %v1879
        %v2090 = vpop.f32.mrb[0].mxu0
        %v2091 = vadd.f32 0.0, %v2090
        %v2092 = vpop.f32.mrb[0].mxu0
        %v2093 = vadd.f32 0.0, %v2092
        %2094 = vmatprep.mubr.f32.mxu0 0.0
        %2095 = vmatmul.mubr.f32.gmra.mrb[0].mxu0 %v1882
        %v2096 = vpop.f32.mrb[0].mxu0
        %v2097 = vadd.f32 0.0, %v2096
        %v2098 = vpop.f32.mrb[0].mxu0
        %v2099 = vadd.f32 0.0, %v2098
        %2100 = vmatprep.mubr.f32.mxu0 0.0
        %2101 = vmatmul.mubr.f32.gmra.mrb[0].mxu0 %v1885
        %v2102 = vpop.f32.mrb[0].mxu0
        %v2103 = vadd.f32 0.0, %v2102
        %v2104 = vpop.f32.mrb[0].mxu0
        %v2105 = vadd.f32 0.0, %v2104
        %2106 = vmatprep.mubr.f32.mxu0 0.0
        %2107 = vmatmul.mubr.f32.gmra.mrb[0].mxu0 %v1888
        %v2108 = vpop.f32.mrb[0].mxu0
        %v2109 = vadd.f32 0.0, %v2108
        %v2110 = vpop.f32.mrb[0].mxu0
        %v2111 = vadd.f32 0.0, %v2110
        %2112 = vmatprep.mubr.f32.mxu0 0.0
        %2113 = vmatmul.mubr.f32.gmra.mrb[0].mxu0 %v1891
        %v2114 = vpop.f32.mrb[0].mxu0
        %v2115 = vadd.f32 0.0, %v2114
        %v2116 = vpop.f32.mrb[0].mxu0
        %v2117 = vadd.f32 0.0, %v2116
        %2118 = vdwg.mxu0
        %2119 = vmatprep.subr.mxu0 %v1741
        %2120 = vmatpush1.msra.mxu0 %v1740
        %2121 = vmatprep.subr.mxu0 %v1747
        %2122 = vmatpush1.msra.mxu0 %v1746
        %2123 = vmatprep.subr.mxu0 %v1753
        %2124 = vmatpush1.msra.mxu0 %v1752
        %2125 = vmatprep.subr.mxu0 %v1759
        %2126 = vmatpush1.msra.mxu0 %v1758
        %2127 = vmatprep.subr.mxu0 0.0
        %2128 = vmatpush1.msra.mxu0 0.0
        %2129 = vmatprep.subr.mxu0 0.0
        %2130 = vmatpush1.msra.mxu0 0.0
        %2131 = vmatprep.subr.mxu0 0.0
        %2132 = vmatpush1.msra.mxu0 0.0
        %2133 = vmatprep.subr.mxu0 0.0
        %2134 = vmatpush1.msra.mxu0 0.0
        %2135 = vmatprep.subr.mxu0 0.0
        %2136 = vmatpush1.msra.mxu0 0.0
        %2137 = vmatprep.subr.mxu0 0.0
        %2138 = vmatpush1.msra.mxu0 0.0
        %2139 = vmatprep.subr.mxu0 0.0
        %2140 = vmatpush1.msra.mxu0 0.0
        %2141 = vmatprep.subr.mxu0 0.0
        %2142 = vmatpush1.msra.mxu0 0.0
        %2143 = vmatprep.subr.mxu0 0.0
        %2144 = vmatpush1.msra.mxu0 0.0
        %2145 = vmatprep.subr.mxu0 0.0
        %2146 = vmatpush1.msra.mxu0 0.0
        %2147 = vmatprep.subr.mxu0 0.0
        %2148 = vmatpush1.msra.mxu0 0.0
        %2149 = vmatprep.subr.mxu0 0.0
        %2150 = vmatpush1.msra.mxu0 0.0
        %2151 = vmatprep.subr.mxu0 0.0
        %2152 = vmatpush1.msra.mxu0 0.0
        %2153 = vmatprep.subr.mxu0 0.0
        %2154 = vmatpush1.msra.mxu0 0.0
        %2155 = vmatprep.subr.mxu0 0.0
        %2156 = vmatpush1.msra.mxu0 0.0
        %2157 = vmatprep.subr.mxu0 0.0
        %2158 = vmatpush1.msra.mxu0 0.0
        %2159 = vmatprep.subr.mxu0 0.0
        %2160 = vmatpush1.msra.mxu0 0.0
        %2161 = vmatprep.subr.mxu0 0.0
        %2162 = vmatpush1.msra.mxu0 0.0
        %2163 = vmatprep.subr.mxu0 0.0
        %2164 = vmatpush1.msra.mxu0 0.0
        %2165 = vmatprep.subr.mxu0 0.0
        %2166 = vmatpush1.msra.mxu0 0.0
        %2167 = vmatprep.subr.mxu0 0.0
        %2168 = vmatpush1.msra.mxu0 0.0
        %2169 = vmatprep.subr.mxu0 0.0
        %2170 = vmatpush1.msra.mxu0 0.0
        %2171 = vmatprep.subr.mxu0 0.0
        %2172 = vmatpush1.msra.mxu0 0.0
        %2173 = vmatprep.subr.mxu0 0.0
        %2174 = vmatpush1.msra.mxu0 0.0
        %2175 = vmatprep.subr.mxu0 0.0
        %2176 = vmatpush1.msra.mxu0 0.0
        %2177 = vmatprep.subr.mxu0 0.0
        %2178 = vmatpush1.msra.mxu0 0.0
        %2179 = vmatprep.subr.mxu0 0.0
        %2180 = vmatpush1.msra.mxu0 0.0
        %2181 = vmatprep.subr.mxu0 0.0
        %2182 = vmatpush1.msra.mxu0 0.0
        %2183 = vmatprep.mubr.f32.mxu0 0.0
        %2184 = vmatmul.mubr.f32.gmra.mrb[0].mxu0 %v1870
        %v2185 = vpop.f32.mrb[0].mxu0
        %v2186 = vadd.f32 0.0, %v2185
        %v2187 = vpop.f32.mrb[0].mxu0
        %v2188 = vadd.f32 0.0, %v2187
        %2189 = vmatprep.mubr.f32.mxu0 0.0
        %2190 = vmatmul.mubr.f32.gmra.mrb[0].mxu0 %v1873
        %v2191 = vpop.f32.mrb[0].mxu0
        %v2192 = vadd.f32 0.0, %v2191
        %v2193 = vpop.f32.mrb[0].mxu0
        %v2194 = vadd.f32 0.0, %v2193
        %2195 = vmatprep.mubr.f32.mxu0 0.0
        %2196 = vmatmul.mubr.f32.gmra.mrb[0].mxu0 %v1876
        %v2197 = vpop.f32.mrb[0].mxu0
        %v2198 = vadd.f32 0.0, %v2197
        %v2199 = vpop.f32.mrb[0].mxu0
        %v2200 = vadd.f32 0.0, %v2199
        %2201 = vmatprep.mubr.f32.mxu0 0.0
        %2202 = vmatmul.mubr.f32.gmra.mrb[0].mxu0 %v1879
        %v2203 = vpop.f32.mrb[0].mxu0
        %v2204 = vadd.f32 0.0, %v2203
        %v2205 = vpop.f32.mrb[0].mxu0
        %v2206 = vadd.f32 0.0, %v2205
        %2207 = vmatprep.mubr.f32.mxu0 0.0
        %2208 = vmatmul.mubr.f32.gmra.mrb[0].mxu0 %v1882
        %v2209 = vpop.f32.mrb[0].mxu0
        %v2210 = vadd.f32 0.0, %v2209
        %v2211 = vpop.f32.mrb[0].mxu0
        %v2212 = vadd.f32 0.0, %v2211
        %2213 = vmatprep.mubr.f32.mxu0 0.0
        %2214 = vmatmul.mubr.f32.gmra.mrb[0].mxu0 %v1885
        %v2215 = vpop.f32.mrb[0].mxu0
        %v2216 = vadd.f32 0.0, %v2215
        %v2217 = vpop.f32.mrb[0].mxu0
        %v2218 = vadd.f32 0.0, %v2217
        %2219 = vmatprep.mubr.f32.mxu0 0.0
        %2220 = vmatmul.mubr.f32.gmra.mrb[0].mxu0 %v1888
        %v2221 = vpop.f32.mrb[0].mxu0
        %v2222 = vadd.f32 0.0, %v2221
        %v2223 = vpop.f32.mrb[0].mxu0
        %v2224 = vadd.f32 0.0, %v2223
        %2225 = vmatprep.mubr.f32.mxu0 0.0
        %2226 = vmatmul.mubr.f32.gmra.mrb[0].mxu0 %v1891
        %v2227 = vpop.f32.mrb[0].mxu0
        %v2228 = vadd.f32 0.0, %v2227
        %v2229 = vpop.f32.mrb[0].mxu0
        %v2230 = vadd.f32 0.0, %v2229
        %2231 = vdwg.mxu0
        %v2232 = vld [vmem:[%s700] sm:$0xff]
        %v2233 = vld [vmem:[%s700 + $0x8] sm:$0xff]
        %v2234 = vld [vmem:[%s700 + $0x10] sm:$0xff]
        %v2235 = vld [vmem:[%s700 + $0x18] sm:$0xff]
        %2237 = vset.pattern.permute.xlu0 0
        %2238 = vperm.xlu0 %2237, %v2232
        %v2239 = vpop.permute.xlu0 %2238
        %2242 = vset.pattern.permute.xlu0 0
        %2243 = vperm.xlu0 %2242, %v2233
        %v2244 = vpop.permute.xlu0 %2243
        %2247 = vset.pattern.permute.xlu0 0
        %2248 = vperm.xlu0 %2247, %v2234
        %v2249 = vpop.permute.xlu0 %2248
        %2252 = vset.pattern.permute.xlu0 0
        %2253 = vperm.xlu0 %2252, %v2235
        %v2254 = vpop.permute.xlu0 %2253
        %v2256 = vadd.f32 %v1960, %v2239
        %v2257 = vadd.f32 %v1962, %v2239
        %v2258 = vadd.f32 %v1966, %v2244
        %v2259 = vadd.f32 %v1968, %v2244
        %v2260 = vadd.f32 %v1972, %v2249
        %v2261 = vadd.f32 %v1974, %v2249
        %v2262 = vadd.f32 %v1978, %v2254
        %v2263 = vadd.f32 %v1980, %v2254
        %v2264 = vld [vmem:[%s705] sm:$0xff]
        %v2265 = vld [vmem:[%s705 + $0x8] sm:$0xff]
        %v2266 = vld [vmem:[%s705 + $0x10] sm:$0xff]
        %v2267 = vld [vmem:[%s705 + $0x18] sm:$0xff]
        %2269 = vset.pattern.permute.xlu0 0
        %2270 = vperm.xlu0 %2269, %v2264
        %v2271 = vpop.permute.xlu0 %2270
        %2274 = vset.pattern.permute.xlu0 0
        %2275 = vperm.xlu0 %2274, %v2265
        %v2276 = vpop.permute.xlu0 %2275
        %2279 = vset.pattern.permute.xlu0 0
        %2280 = vperm.xlu0 %2279, %v2266
        %v2281 = vpop.permute.xlu0 %2280
        %2284 = vset.pattern.permute.xlu0 0
        %2285 = vperm.xlu0 %2284, %v2267
        %v2286 = vpop.permute.xlu0 %2285
        %v2288 = vadd.f32 %v1984, %v2271
        %v2289 = vadd.f32 %v1986, %v2271
        %v2290 = vadd.f32 %v1990, %v2276
        %v2291 = vadd.f32 %v1992, %v2276
        %v2292 = vadd.f32 %v1996, %v2281
        %v2293 = vadd.f32 %v1998, %v2281
        %v2294 = vadd.f32 %v2002, %v2286
        %v2295 = vadd.f32 %v2004, %v2286
        %s2296 = scalar_lea.vmem %s700, 32
        %v2297 = vld [vmem:[%s2296] sm:$0xff]
        %v2298 = vld [vmem:[%s2296 + $0x8] sm:$0xff]
        %v2299 = vld [vmem:[%s2296 + $0x10] sm:$0xff]
        %v2300 = vld [vmem:[%s2296 + $0x18] sm:$0xff]
        %2302 = vset.pattern.permute.xlu0 0
        %2303 = vperm.xlu0 %2302, %v2297
        %v2304 = vpop.permute.xlu0 %2303
        %2307 = vset.pattern.permute.xlu0 0
        %2308 = vperm.xlu0 %2307, %v2298
        %v2309 = vpop.permute.xlu0 %2308
        %2312 = vset.pattern.permute.xlu0 0
        %2313 = vperm.xlu0 %2312, %v2299
        %v2314 = vpop.permute.xlu0 %2313
        %2317 = vset.pattern.permute.xlu0 0
        %2318 = vperm.xlu0 %2317, %v2300
        %v2319 = vpop.permute.xlu0 %2318
        %v2321 = vadd.f32 %v2073, %v2304
        %v2322 = vadd.f32 %v2075, %v2304
        %v2323 = vadd.f32 %v2079, %v2309
        %v2324 = vadd.f32 %v2081, %v2309
        %v2325 = vadd.f32 %v2085, %v2314
        %v2326 = vadd.f32 %v2087, %v2314
        %v2327 = vadd.f32 %v2091, %v2319
        %v2328 = vadd.f32 %v2093, %v2319
        %s2329 = scalar_lea.vmem %s705, 32
        %v2330 = vld [vmem:[%s2329] sm:$0xff]
        %v2331 = vld [vmem:[%s2329 + $0x8] sm:$0xff]
        %v2332 = vld [vmem:[%s2329 + $0x10] sm:$0xff]
        %v2333 = vld [vmem:[%s2329 + $0x18] sm:$0xff]
        %2335 = vset.pattern.permute.xlu0 0
        %2336 = vperm.xlu0 %2335, %v2330
        %v2337 = vpop.permute.xlu0 %2336
        %2340 = vset.pattern.permute.xlu0 0
        %2341 = vperm.xlu0 %2340, %v2331
        %v2342 = vpop.permute.xlu0 %2341
        %2345 = vset.pattern.permute.xlu0 0
        %2346 = vperm.xlu0 %2345, %v2332
        %v2347 = vpop.permute.xlu0 %2346
        %2350 = vset.pattern.permute.xlu0 0
        %2351 = vperm.xlu0 %2350, %v2333
        %v2352 = vpop.permute.xlu0 %2351
        %v2354 = vadd.f32 %v2097, %v2337
        %v2355 = vadd.f32 %v2099, %v2337
        %v2356 = vadd.f32 %v2103, %v2342
        %v2357 = vadd.f32 %v2105, %v2342
        %v2358 = vadd.f32 %v2109, %v2347
        %v2359 = vadd.f32 %v2111, %v2347
        %v2360 = vadd.f32 %v2115, %v2352
        %v2361 = vadd.f32 %v2117, %v2352
        %s2362 = scalar_lea.vmem %s700, 64
        %v2363 = vld [vmem:[%s2362] sm:$0xff]
        %v2364 = vld [vmem:[%s2362 + $0x8] sm:$0xff]
        %v2365 = vld [vmem:[%s2362 + $0x10] sm:$0xff]
        %v2366 = vld [vmem:[%s2362 + $0x18] sm:$0xff]
        %2368 = vset.pattern.permute.xlu0 0
        %2369 = vperm.xlu0 %2368, %v2363
        %v2370 = vpop.permute.xlu0 %2369
        %2373 = vset.pattern.permute.xlu0 0
        %2374 = vperm.xlu0 %2373, %v2364
        %v2375 = vpop.permute.xlu0 %2374
        %2378 = vset.pattern.permute.xlu0 0
        %2379 = vperm.xlu0 %2378, %v2365
        %v2380 = vpop.permute.xlu0 %2379
        %2383 = vset.pattern.permute.xlu0 0
        %2384 = vperm.xlu0 %2383, %v2366
        %v2385 = vpop.permute.xlu0 %2384
        %v2387 = vadd.f32 %v2186, %v2370
        %v2388 = vadd.f32 %v2188, %v2370
        %v2389 = vadd.f32 %v2192, %v2375
        %v2390 = vadd.f32 %v2194, %v2375
        %v2391 = vadd.f32 %v2198, %v2380
        %v2392 = vadd.f32 %v2200, %v2380
        %v2393 = vadd.f32 %v2204, %v2385
        %v2394 = vadd.f32 %v2206, %v2385
        %s2395 = scalar_lea.vmem %s705, 64
        %v2396 = vld [vmem:[%s2395] sm:$0xff]
        %v2397 = vld [vmem:[%s2395 + $0x8] sm:$0xff]
        %v2398 = vld [vmem:[%s2395 + $0x10] sm:$0xff]
        %v2399 = vld [vmem:[%s2395 + $0x18] sm:$0xff]
        %2401 = vset.pattern.permute.xlu0 0
        %2402 = vperm.xlu0 %2401, %v2396
        %v2403 = vpop.permute.xlu0 %2402
        %2406 = vset.pattern.permute.xlu0 0
        %2407 = vperm.xlu0 %2406, %v2397
        %v2408 = vpop.permute.xlu0 %2407
        %2411 = vset.pattern.permute.xlu0 0
        %2412 = vperm.xlu0 %2411, %v2398
        %v2413 = vpop.permute.xlu0 %2412
        %2416 = vset.pattern.permute.xlu0 0
        %2417 = vperm.xlu0 %2416, %v2399
        %v2418 = vpop.permute.xlu0 %2417
        %v2420 = vadd.f32 %v2210, %v2403
        %v2421 = vadd.f32 %v2212, %v2403
        %v2422 = vadd.f32 %v2216, %v2408
        %v2423 = vadd.f32 %v2218, %v2408
        %v2424 = vadd.f32 %v2222, %v2413
        %v2425 = vadd.f32 %v2224, %v2413
        %v2426 = vadd.f32 %v2228, %v2418
        %v2427 = vadd.f32 %v2230, %v2418
        %v2428 = vmul.f32 %v2288, %v2288
        %v2429 = vmul.f32 %v2289, %v2289
        %v2430 = vmul.f32 %v2290, %v2290
        %v2431 = vmul.f32 %v2291, %v2291
        %v2432 = vmul.f32 %v2292, %v2292
        %v2433 = vmul.f32 %v2293, %v2293
        %v2434 = vmul.f32 %v2294, %v2294
        %v2435 = vmul.f32 %v2295, %v2295
        %v2436 = vmul.f32 %v2354, %v2354
        %v2437 = vmul.f32 %v2355, %v2355
        %v2438 = vmul.f32 %v2356, %v2356
        %v2439 = vmul.f32 %v2357, %v2357
        %v2440 = vmul.f32 %v2358, %v2358
        %v2441 = vmul.f32 %v2359, %v2359
        %v2442 = vmul.f32 %v2360, %v2360
        %v2443 = vmul.f32 %v2361, %v2361
        %v2444 = vadd.f32 %v2428, %v2436
        %v2445 = vadd.f32 %v2429, %v2437
        %v2446 = vadd.f32 %v2430, %v2438
        %v2447 = vadd.f32 %v2431, %v2439
        %v2448 = vadd.f32 %v2432, %v2440
        %v2449 = vadd.f32 %v2433, %v2441
        %v2450 = vadd.f32 %v2434, %v2442
        %v2451 = vadd.f32 %v2435, %v2443
        %v2452 = vmul.f32 %v2420, %v2420
        %v2453 = vmul.f32 %v2421, %v2421
        %v2454 = vmul.f32 %v2422, %v2422
        %v2455 = vmul.f32 %v2423, %v2423
        %v2456 = vmul.f32 %v2424, %v2424
        %v2457 = vmul.f32 %v2425, %v2425
        %v2458 = vmul.f32 %v2426, %v2426
        %v2459 = vmul.f32 %v2427, %v2427
        %v2460 = vadd.f32 %v2444, %v2452
        %v2461 = vadd.f32 %v2445, %v2453
        %v2462 = vadd.f32 %v2446, %v2454
        %v2463 = vadd.f32 %v2447, %v2455
        %v2464 = vadd.f32 %v2448, %v2456
        %v2465 = vadd.f32 %v2449, %v2457
        %v2466 = vadd.f32 %v2450, %v2458
        %v2467 = vadd.f32 %v2451, %v2459
        %v2468 = vadd.f32 %v2460, 1e-06
        %v2469 = vadd.f32 %v2461, 1e-06
        %v2470 = vadd.f32 %v2462, 1e-06
        %v2471 = vadd.f32 %v2463, 1e-06
        %v2472 = vadd.f32 %v2464, 1e-06
        %v2473 = vadd.f32 %v2465, 1e-06
        %v2474 = vadd.f32 %v2466, 1e-06
        %v2475 = vadd.f32 %v2467, 1e-06
        %v2476 = vrsqrt.pop %v2468
        %v2477 = vrsqrt.pop %v2469
        %v2478 = vrsqrt.pop %v2470
        %v2479 = vrsqrt.pop %v2471
        %v2480 = vrsqrt.pop %v2472
        %v2481 = vrsqrt.pop %v2473
        %v2482 = vrsqrt.pop %v2474
        %v2483 = vrsqrt.pop %v2475
        %v2484 = vld [vmem:[%s710] sm:$0xff]
        %v2485 = vld [vmem:[%s710 + $0x8] sm:$0xff]
        %v2486 = vld [vmem:[%s710 + $0x10] sm:$0xff]
        %v2487 = vld [vmem:[%s710 + $0x18] sm:$0xff]
        %2489 = vset.pattern.permute.xlu0 0
        %2490 = vperm.xlu0 %2489, %v2484
        %v2491 = vpop.permute.xlu0 %2490
        %2494 = vset.pattern.permute.xlu0 0
        %2495 = vperm.xlu0 %2494, %v2485
        %v2496 = vpop.permute.xlu0 %2495
        %2499 = vset.pattern.permute.xlu0 0
        %2500 = vperm.xlu0 %2499, %v2486
        %v2501 = vpop.permute.xlu0 %2500
        %2504 = vset.pattern.permute.xlu0 0
        %2505 = vperm.xlu0 %2504, %v2487
        %v2506 = vpop.permute.xlu0 %2505
        %v2508 = vmul.f32 %v2491, %v2288
        %v2509 = vmul.f32 %v2491, %v2289
        %v2510 = vmul.f32 %v2496, %v2290
        %v2511 = vmul.f32 %v2496, %v2291
        %v2512 = vmul.f32 %v2501, %v2292
        %v2513 = vmul.f32 %v2501, %v2293
        %v2514 = vmul.f32 %v2506, %v2294
        %v2515 = vmul.f32 %v2506, %v2295
        %v2516 = vmul.f32 %v2508, %v2476
        %v2517 = vmul.f32 %v2509, %v2477
        %v2518 = vmul.f32 %v2510, %v2478
        %v2519 = vmul.f32 %v2511, %v2479
        %v2520 = vmul.f32 %v2512, %v2480
        %v2521 = vmul.f32 %v2513, %v2481
        %v2522 = vmul.f32 %v2514, %v2482
        %v2523 = vmul.f32 %v2515, %v2483
        %v2524 = vadd.f32 %v2256, %v2516
        %v2525 = vadd.f32 %v2257, %v2517
        %v2526 = vadd.f32 %v2258, %v2518
        %v2527 = vadd.f32 %v2259, %v2519
        %v2528 = vadd.f32 %v2260, %v2520
        %v2529 = vadd.f32 %v2261, %v2521
        %v2530 = vadd.f32 %v2262, %v2522
        %v2531 = vadd.f32 %v2263, %v2523
        %v2532 = vmul.f32 %v2491, %v2354
        %v2533 = vmul.f32 %v2491, %v2355
        %v2534 = vmul.f32 %v2496, %v2356
        %v2535 = vmul.f32 %v2496, %v2357
        %v2536 = vmul.f32 %v2501, %v2358
        %v2537 = vmul.f32 %v2501, %v2359
        %v2538 = vmul.f32 %v2506, %v2360
        %v2539 = vmul.f32 %v2506, %v2361
        %v2540 = vmul.f32 %v2532, %v2476
        %v2541 = vmul.f32 %v2533, %v2477
        %v2542 = vmul.f32 %v2534, %v2478
        %v2543 = vmul.f32 %v2535, %v2479
        %v2544 = vmul.f32 %v2536, %v2480
        %v2545 = vmul.f32 %v2537, %v2481
        %v2546 = vmul.f32 %v2538, %v2482
        %v2547 = vmul.f32 %v2539, %v2483
        %v2548 = vadd.f32 %v2321, %v2540
        %v2549 = vadd.f32 %v2322, %v2541
        %v2550 = vadd.f32 %v2323, %v2542
        %v2551 = vadd.f32 %v2324, %v2543
        %v2552 = vadd.f32 %v2325, %v2544
        %v2553 = vadd.f32 %v2326, %v2545
        %v2554 = vadd.f32 %v2327, %v2546
        %v2555 = vadd.f32 %v2328, %v2547
        %v2556 = vmul.f32 %v2491, %v2420
        %v2557 = vmul.f32 %v2491, %v2421
        %v2558 = vmul.f32 %v2496, %v2422
        %v2559 = vmul.f32 %v2496, %v2423
        %v2560 = vmul.f32 %v2501, %v2424
        %v2561 = vmul.f32 %v2501, %v2425
        %v2562 = vmul.f32 %v2506, %v2426
        %v2563 = vmul.f32 %v2506, %v2427
        %v2564 = vmul.f32 %v2556, %v2476
        %v2565 = vmul.f32 %v2557, %v2477
        %v2566 = vmul.f32 %v2558, %v2478
        %v2567 = vmul.f32 %v2559, %v2479
        %v2568 = vmul.f32 %v2560, %v2480
        %v2569 = vmul.f32 %v2561, %v2481
        %v2570 = vmul.f32 %v2562, %v2482
        %v2571 = vmul.f32 %v2563, %v2483
        %v2572 = vadd.f32 %v2387, %v2564
        %v2573 = vadd.f32 %v2388, %v2565
        %v2574 = vadd.f32 %v2389, %v2566
        %v2575 = vadd.f32 %v2390, %v2567
        %v2576 = vadd.f32 %v2391, %v2568
        %v2577 = vadd.f32 %v2392, %v2569
        %v2578 = vadd.f32 %v2393, %v2570
        %v2579 = vadd.f32 %v2394, %v2571
        %v2580 = vld [vmem:[%s9] sm:$0xff]
        %v2581 = vld [vmem:[%s9 + $0x8] sm:$0xff]
        %v2582 = vld [vmem:[%s9 + $0x10] sm:$0xff]
        %v2583 = vld [vmem:[%s9 + $0x18] sm:$0xff]
        %v2584 = vld [vmem:[%s10] sm:$0xff]
        %v2585 = vld [vmem:[%s10 + $0x8] sm:$0xff]
        %v2586 = vld [vmem:[%s10 + $0x10] sm:$0xff]
        %v2587 = vld [vmem:[%s10 + $0x18] sm:$0xff]
        %v2588 = vmul.f32 %v2524, %v2524
        %v2589 = vmul.f32 %v2525, %v2525
        %v2590 = vmul.f32 %v2526, %v2526
        %v2591 = vmul.f32 %v2527, %v2527
        %v2592 = vmul.f32 %v2528, %v2528
        %v2593 = vmul.f32 %v2529, %v2529
        %v2594 = vmul.f32 %v2530, %v2530
        %v2595 = vmul.f32 %v2531, %v2531
        %v2596 = vmul.f32 %v2548, %v2548
        %v2597 = vmul.f32 %v2549, %v2549
        %v2598 = vmul.f32 %v2550, %v2550
        %v2599 = vmul.f32 %v2551, %v2551
        %v2600 = vmul.f32 %v2552, %v2552
        %v2601 = vmul.f32 %v2553, %v2553
        %v2602 = vmul.f32 %v2554, %v2554
        %v2603 = vmul.f32 %v2555, %v2555
        %v2604 = vadd.f32 %v2588, %v2596
        %v2605 = vadd.f32 %v2589, %v2597
        %v2606 = vadd.f32 %v2590, %v2598
        %v2607 = vadd.f32 %v2591, %v2599
        %v2608 = vadd.f32 %v2592, %v2600
        %v2609 = vadd.f32 %v2593, %v2601
        %v2610 = vadd.f32 %v2594, %v2602
        %v2611 = vadd.f32 %v2595, %v2603
        %v2612 = vmul.f32 %v2572, %v2572
        %v2613 = vmul.f32 %v2573, %v2573
        %v2614 = vmul.f32 %v2574, %v2574
        %v2615 = vmul.f32 %v2575, %v2575
        %v2616 = vmul.f32 %v2576, %v2576
        %v2617 = vmul.f32 %v2577, %v2577
        %v2618 = vmul.f32 %v2578, %v2578
        %v2619 = vmul.f32 %v2579, %v2579
        %v2620 = vadd.f32 %v2604, %v2612
        %v2621 = vadd.f32 %v2605, %v2613
        %v2622 = vadd.f32 %v2606, %v2614
        %v2623 = vadd.f32 %v2607, %v2615
        %v2624 = vadd.f32 %v2608, %v2616
        %v2625 = vadd.f32 %v2609, %v2617
        %v2626 = vadd.f32 %v2610, %v2618
        %v2627 = vadd.f32 %v2611, %v2619
        %v2628 = vadd.f32 %v2620, 1e-06
        %v2629 = vadd.f32 %v2621, 1e-06
        %v2630 = vadd.f32 %v2622, 1e-06
        %v2631 = vadd.f32 %v2623, 1e-06
        %v2632 = vadd.f32 %v2624, 1e-06
        %v2633 = vadd.f32 %v2625, 1e-06
        %v2634 = vadd.f32 %v2626, 1e-06
        %v2635 = vadd.f32 %v2627, 1e-06
        %v2636 = vrsqrt.pop %v2628
        %v2637 = vmul.f32 %v2628, %v2636
        %vm2638 = vcmp.eq.f32.partialorder %v2628, inf
        %v2639 = vsel %vm2638, %v2628, %v2637
        %vm2640 = vcmp.eq.f32.partialorder %v2628, 0.0
        %v2641 = vand.u32 %v2628, 2147483648
        %v2642 = vsel %vm2640, %v2641, %v2639
        %v2643 = vrsqrt.pop %v2629
        %v2644 = vmul.f32 %v2629, %v2643
        %vm2645 = vcmp.eq.f32.partialorder %v2629, inf
        %v2646 = vsel %vm2645, %v2629, %v2644
        %vm2647 = vcmp.eq.f32.partialorder %v2629, 0.0
        %v2648 = vand.u32 %v2629, 2147483648
        %v2649 = vsel %vm2647, %v2648, %v2646
        %v2650 = vrsqrt.pop %v2630
        %v2651 = vmul.f32 %v2630, %v2650
        %vm2652 = vcmp.eq.f32.partialorder %v2630, inf
        %v2653 = vsel %vm2652, %v2630, %v2651
        %vm2654 = vcmp.eq.f32.partialorder %v2630, 0.0
        %v2655 = vand.u32 %v2630, 2147483648
        %v2656 = vsel %vm2654, %v2655, %v2653
        %v2657 = vrsqrt.pop %v2631
        %v2658 = vmul.f32 %v2631, %v2657
        %vm2659 = vcmp.eq.f32.partialorder %v2631, inf
        %v2660 = vsel %vm2659, %v2631, %v2658
        %vm2661 = vcmp.eq.f32.partialorder %v2631, 0.0
        %v2662 = vand.u32 %v2631, 2147483648
        %v2663 = vsel %vm2661, %v2662, %v2660
        %v2664 = vrsqrt.pop %v2632
        %v2665 = vmul.f32 %v2632, %v2664
        %vm2666 = vcmp.eq.f32.partialorder %v2632, inf
        %v2667 = vsel %vm2666, %v2632, %v2665
        %vm2668 = vcmp.eq.f32.partialorder %v2632, 0.0
        %v2669 = vand.u32 %v2632, 2147483648
        %v2670 = vsel %vm2668, %v2669, %v2667
        %v2671 = vrsqrt.pop %v2633
        %v2672 = vmul.f32 %v2633, %v2671
        %vm2673 = vcmp.eq.f32.partialorder %v2633, inf
        %v2674 = vsel %vm2673, %v2633, %v2672
        %vm2675 = vcmp.eq.f32.partialorder %v2633, 0.0
        %v2676 = vand.u32 %v2633, 2147483648
        %v2677 = vsel %vm2675, %v2676, %v2674
        %v2678 = vrsqrt.pop %v2634
        %v2679 = vmul.f32 %v2634, %v2678
        %vm2680 = vcmp.eq.f32.partialorder %v2634, inf
        %v2681 = vsel %vm2680, %v2634, %v2679
        %vm2682 = vcmp.eq.f32.partialorder %v2634, 0.0
        %v2683 = vand.u32 %v2634, 2147483648
        %v2684 = vsel %vm2682, %v2683, %v2681
        %v2685 = vrsqrt.pop %v2635
        %v2686 = vmul.f32 %v2635, %v2685
        %vm2687 = vcmp.eq.f32.partialorder %v2635, inf
        %v2688 = vsel %vm2687, %v2635, %v2686
        %vm2689 = vcmp.eq.f32.partialorder %v2635, 0.0
        %v2690 = vand.u32 %v2635, 2147483648
        %v2691 = vsel %vm2689, %v2690, %v2688
        %v2692 = vadd.f32 %v2642, %v2656
        %v2693 = vadd.f32 %v2692, %v2670
        %v2694 = vadd.f32 %v2693, %v2684
        %v2695 = vrot.slane %v2694, 4
        %v2696 = vadd.f32 %v2694, %v2695
        %v2697 = vrot.slane %v2696, 2
        %v2698 = vadd.f32 %v2696, %v2697
        %v2699 = vrot.slane %v2698, 1
        %v2700 = vadd.f32 %v2698, %v2699
        %v2701 = vadd.f32 %v2649, %v2663
        %v2702 = vadd.f32 %v2701, %v2677
        %v2703 = vadd.f32 %v2702, %v2691
        %v2704 = vrot.slane %v2703, 4
        %v2705 = vadd.f32 %v2703, %v2704
        %v2706 = vrot.slane %v2705, 2
        %v2707 = vadd.f32 %v2705, %v2706
        %v2708 = vrot.slane %v2707, 1
        %v2709 = vadd.f32 %v2707, %v2708
        %v2710 = vmul.f32 %v2700, %v1171
        %v2711 = vmul.f32 %v2709, %v1171
        %v2712 = vadd.f32 %v2628, %v2630
        %v2713 = vadd.f32 %v2712, %v2632
        %v2714 = vadd.f32 %v2713, %v2634
        %v2715 = vrot.slane %v2714, 4
        %v2716 = vadd.f32 %v2714, %v2715
        %v2717 = vrot.slane %v2716, 2
        %v2718 = vadd.f32 %v2716, %v2717
        %v2719 = vrot.slane %v2718, 1
        %v2720 = vadd.f32 %v2718, %v2719
        %v2721 = vadd.f32 %v2629, %v2631
        %v2722 = vadd.f32 %v2721, %v2633
        %v2723 = vadd.f32 %v2722, %v2635
        %v2724 = vrot.slane %v2723, 4
        %v2725 = vadd.f32 %v2723, %v2724
        %v2726 = vrot.slane %v2725, 2
        %v2727 = vadd.f32 %v2725, %v2726
        %v2728 = vrot.slane %v2727, 1
        %v2729 = vadd.f32 %v2727, %v2728
        %v2730 = vmul.f32 %v2720, %v1171
        %v2731 = vmul.f32 %v2729, %v1171
        %v2732 = vmul.f32 %v2710, %v2710
        %v2733 = vmul.f32 %v2711, %v2711
        %v2734 = vsub.f32 %v2730, %v2732
        %v2735 = vsub.f32 %v2731, %v2733
        %v2736 = vmax.f32 %v2734, 0.0
        %v2737 = vmax.f32 %v2735, 0.0
        %v2738 = vsub.f32 %v2642, %v2710
        %v2739 = vsub.f32 %v2649, %v2711
        %v2740 = vsub.f32 %v2656, %v2710
        %v2741 = vsub.f32 %v2663, %v2711
        %v2742 = vsub.f32 %v2670, %v2710
        %v2743 = vsub.f32 %v2677, %v2711
        %v2744 = vsub.f32 %v2684, %v2710
        %v2745 = vsub.f32 %v2691, %v2711
        %v2746 = vadd.f32 %v2736, 1e-06
        %v2747 = vadd.f32 %v2737, 1e-06
        %v2748 = vrsqrt.pop %v2746
        %v2749 = vrsqrt.pop %v2747
        %v2750 = vmul.f32 %v2738, %v2748
        %v2751 = vmul.f32 %v2739, %v2749
        %v2752 = vmul.f32 %v2740, %v2748
        %v2753 = vmul.f32 %v2741, %v2749
        %v2754 = vmul.f32 %v2742, %v2748
        %v2755 = vmul.f32 %v2743, %v2749
        %v2756 = vmul.f32 %v2744, %v2748
        %v2757 = vmul.f32 %v2745, %v2749
        %2759 = vset.pattern.permute.xlu0 0
        %2760 = vperm.xlu0 %2759, %v2580
        %v2761 = vpop.permute.xlu0 %2760
        %2764 = vset.pattern.permute.xlu0 0
        %2765 = vperm.xlu0 %2764, %v2581
        %v2766 = vpop.permute.xlu0 %2765
        %2769 = vset.pattern.permute.xlu0 0
        %2770 = vperm.xlu0 %2769, %v2582
        %v2771 = vpop.permute.xlu0 %2770
        %2774 = vset.pattern.permute.xlu0 0
        %2775 = vperm.xlu0 %2774, %v2583
        %v2776 = vpop.permute.xlu0 %2775
        %v2778 = vmul.f32 %v2750, %v2761
        %v2779 = vmul.f32 %v2751, %v2761
        %v2780 = vmul.f32 %v2752, %v2766
        %v2781 = vmul.f32 %v2753, %v2766
        %v2782 = vmul.f32 %v2754, %v2771
        %v2783 = vmul.f32 %v2755, %v2771
        %v2784 = vmul.f32 %v2756, %v2776
        %v2785 = vmul.f32 %v2757, %v2776
        %2787 = vset.pattern.permute.xlu0 0
        %2788 = vperm.xlu0 %2787, %v2584
        %v2789 = vpop.permute.xlu0 %2788
        %2792 = vset.pattern.permute.xlu0 0
        %2793 = vperm.xlu0 %2792, %v2585
        %v2794 = vpop.permute.xlu0 %2793
        %2797 = vset.pattern.permute.xlu0 0
        %2798 = vperm.xlu0 %2797, %v2586
        %v2799 = vpop.permute.xlu0 %2798
        %2802 = vset.pattern.permute.xlu0 0
        %2803 = vperm.xlu0 %2802, %v2587
        %v2804 = vpop.permute.xlu0 %2803
        %v2806 = vadd.f32 %v2778, %v2789
        %v2807 = vadd.f32 %v2779, %v2789
        %v2808 = vadd.f32 %v2780, %v2794
        %v2809 = vadd.f32 %v2781, %v2794
        %v2810 = vadd.f32 %v2782, %v2799
        %v2811 = vadd.f32 %v2783, %v2799
        %v2812 = vadd.f32 %v2784, %v2804
        %v2813 = vadd.f32 %v2785, %v2804
        %v2814 = vrcp.pop %v2642
        %v2815 = vrcp.pop %v2649
        %v2816 = vrcp.pop %v2656
        %v2817 = vrcp.pop %v2663
        %v2818 = vrcp.pop %v2670
        %v2819 = vrcp.pop %v2677
        %v2820 = vrcp.pop %v2684
        %v2821 = vrcp.pop %v2691
        %v2822 = vmul.f32 %v2806, %v2814
        %v2823 = vmul.f32 %v2807, %v2815
        %v2824 = vmul.f32 %v2808, %v2816
        %v2825 = vmul.f32 %v2809, %v2817
        %v2826 = vmul.f32 %v2810, %v2818
        %v2827 = vmul.f32 %v2811, %v2819
        %v2828 = vmul.f32 %v2812, %v2820
        %v2829 = vmul.f32 %v2813, %v2821
        %v2830 = vmul.f32 %v2524, %v2822
        %v2831 = vmul.f32 %v2525, %v2823
        %v2832 = vmul.f32 %v2548, %v2822
        %v2833 = vmul.f32 %v2549, %v2823
        %v2834 = vmul.f32 %v2572, %v2822
        %v2835 = vmul.f32 %v2573, %v2823
        %v2836 = vmul.f32 %v2526, %v2824
        %v2837 = vmul.f32 %v2527, %v2825
        %v2838 = vmul.f32 %v2550, %v2824
        %v2839 = vmul.f32 %v2551, %v2825
        %v2840 = vmul.f32 %v2574, %v2824
        %v2841 = vmul.f32 %v2575, %v2825
        %v2842 = vmul.f32 %v2528, %v2826
        %v2843 = vmul.f32 %v2529, %v2827
        %v2844 = vmul.f32 %v2552, %v2826
        %v2845 = vmul.f32 %v2553, %v2827
        %v2846 = vmul.f32 %v2576, %v2826
        %v2847 = vmul.f32 %v2577, %v2827
        %v2848 = vmul.f32 %v2530, %v2828
        %v2849 = vmul.f32 %v2531, %v2829
        %v2850 = vmul.f32 %v2554, %v2828
        %v2851 = vmul.f32 %v2555, %v2829
        %v2852 = vmul.f32 %v2578, %v2828
        %v2853 = vmul.f32 %v2579, %v2829
        %v2854 = vld [vmem:[%s11] sm:$0xff]
        %v2855 = vld [vmem:[%s11 + $0x8] sm:$0xff]
        %v2856 = vld [vmem:[%s11 + $0x10] sm:$0xff]
        %v2857 = vld [vmem:[%s11 + $0x18] sm:$0xff]
        %v2859 = vsel %vm1320, %v2854, 0
        %v2862 = vsel %vm1320, %v2855, 0
        %v2865 = vsel %vm1320, %v2856, 0
        %v2868 = vsel %vm1320, %v2857, 0
        %2870 = vmatprep.subr.mxu0 %v2831
        %2871 = vmatpush1.msra.mxu0 %v2830
        %2872 = vmatprep.subr.mxu0 %v2837
        %2873 = vmatpush1.msra.mxu0 %v2836
        %2874 = vmatprep.subr.mxu0 %v2843
        %2875 = vmatpush1.msra.mxu0 %v2842
        %2876 = vmatprep.subr.mxu0 %v2849
        %2877 = vmatpush1.msra.mxu0 %v2848
        %2878 = vmatprep.subr.mxu0 0.0
        %2879 = vmatpush1.msra.mxu0 0.0
        %2880 = vmatprep.subr.mxu0 0.0
        %2881 = vmatpush1.msra.mxu0 0.0
        %2882 = vmatprep.subr.mxu0 0.0
        %2883 = vmatpush1.msra.mxu0 0.0
        %2884 = vmatprep.subr.mxu0 0.0
        %2885 = vmatpush1.msra.mxu0 0.0
        %2886 = vmatprep.subr.mxu0 0.0
        %2887 = vmatpush1.msra.mxu0 0.0
        %2888 = vmatprep.subr.mxu0 0.0
        %2889 = vmatpush1.msra.mxu0 0.0
        %2890 = vmatprep.subr.mxu0 0.0
        %2891 = vmatpush1.msra.mxu0 0.0
        %2892 = vmatprep.subr.mxu0 0.0
        %2893 = vmatpush1.msra.mxu0 0.0
        %2894 = vmatprep.subr.mxu0 0.0
        %2895 = vmatpush1.msra.mxu0 0.0
        %2896 = vmatprep.subr.mxu0 0.0
        %2897 = vmatpush1.msra.mxu0 0.0
        %2898 = vmatprep.subr.mxu0 0.0
        %2899 = vmatpush1.msra.mxu0 0.0
        %2900 = vmatprep.subr.mxu0 0.0
        %2901 = vmatpush1.msra.mxu0 0.0
        %2902 = vmatprep.subr.mxu0 0.0
        %2903 = vmatpush1.msra.mxu0 0.0
        %2904 = vmatprep.subr.mxu0 0.0
        %2905 = vmatpush1.msra.mxu0 0.0
        %2906 = vmatprep.subr.mxu0 0.0
        %2907 = vmatpush1.msra.mxu0 0.0
        %2908 = vmatprep.subr.mxu0 0.0
        %2909 = vmatpush1.msra.mxu0 0.0
        %2910 = vmatprep.subr.mxu0 0.0
        %2911 = vmatpush1.msra.mxu0 0.0
        %2912 = vmatprep.subr.mxu0 0.0
        %2913 = vmatpush1.msra.mxu0 0.0
        %2914 = vmatprep.subr.mxu0 0.0
        %2915 = vmatpush1.msra.mxu0 0.0
        %2916 = vmatprep.subr.mxu0 0.0
        %2917 = vmatpush1.msra.mxu0 0.0
        %2918 = vmatprep.subr.mxu0 0.0
        %2919 = vmatpush1.msra.mxu0 0.0
        %2920 = vmatprep.subr.mxu0 0.0
        %2921 = vmatpush1.msra.mxu0 0.0
        %2922 = vmatprep.subr.mxu0 0.0
        %2923 = vmatpush1.msra.mxu0 0.0
        %2924 = vmatprep.subr.mxu0 0.0
        %2925 = vmatpush1.msra.mxu0 0.0
        %2926 = vmatprep.subr.mxu0 0.0
        %2927 = vmatpush1.msra.mxu0 0.0
        %2928 = vmatprep.subr.mxu0 0.0
        %2929 = vmatpush1.msra.mxu0 0.0
        %2930 = vmatprep.subr.mxu0 0.0
        %2931 = vmatpush1.msra.mxu0 0.0
        %2932 = vmatprep.subr.mxu0 0.0
        %2933 = vmatpush1.msra.mxu0 0.0
        %2934 = vmatprep.mubr.f32.mxu0 0.0
        %2935 = vmatmul.mubr.f32.gmra.mrb[0].mxu0 %v2859
        %v2936 = vpop.f32.mrb[0].mxu0
        %v2937 = vadd.f32 0.0, %v2936
        %v2938 = vpop.f32.mrb[0].mxu0
        %v2939 = vadd.f32 0.0, %v2938
        %2940 = vmatprep.mubr.f32.mxu0 0.0
        %2941 = vmatmul.mubr.f32.gmra.mrb[0].mxu0 %v2862
        %v2942 = vpop.f32.mrb[0].mxu0
        %v2943 = vadd.f32 0.0, %v2942
        %v2944 = vpop.f32.mrb[0].mxu0
        %v2945 = vadd.f32 0.0, %v2944
        %2946 = vmatprep.mubr.f32.mxu0 0.0
        %2947 = vmatmul.mubr.f32.gmra.mrb[0].mxu0 %v2865
        %v2948 = vpop.f32.mrb[0].mxu0
        %v2949 = vadd.f32 0.0, %v2948
        %v2950 = vpop.f32.mrb[0].mxu0
        %v2951 = vadd.f32 0.0, %v2950
        %2952 = vmatprep.mubr.f32.mxu0 0.0
        %2953 = vmatmul.mubr.f32.gmra.mrb[0].mxu0 %v2868
        %v2954 = vpop.f32.mrb[0].mxu0
        %v2955 = vadd.f32 0.0, %v2954
        %v2956 = vpop.f32.mrb[0].mxu0
        %v2957 = vadd.f32 0.0, %v2956
        %2958 = vdwg.mxu0
        %2959 = vmatprep.subr.mxu0 %v2833
        %2960 = vmatpush1.msra.mxu0 %v2832
        %2961 = vmatprep.subr.mxu0 %v2839
        %2962 = vmatpush1.msra.mxu0 %v2838
        %2963 = vmatprep.subr.mxu0 %v2845
        %2964 = vmatpush1.msra.mxu0 %v2844
        %2965 = vmatprep.subr.mxu0 %v2851
        %2966 = vmatpush1.msra.mxu0 %v2850
        %2967 = vmatprep.subr.mxu0 0.0
        %2968 = vmatpush1.msra.mxu0 0.0
        %2969 = vmatprep.subr.mxu0 0.0
        %2970 = vmatpush1.msra.mxu0 0.0
        %2971 = vmatprep.subr.mxu0 0.0
        %2972 = vmatpush1.msra.mxu0 0.0
        %2973 = vmatprep.subr.mxu0 0.0
        %2974 = vmatpush1.msra.mxu0 0.0
        %2975 = vmatprep.subr.mxu0 0.0
        %2976 = vmatpush1.msra.mxu0 0.0
        %2977 = vmatprep.subr.mxu0 0.0
        %2978 = vmatpush1.msra.mxu0 0.0
        %2979 = vmatprep.subr.mxu0 0.0
        %2980 = vmatpush1.msra.mxu0 0.0
        %2981 = vmatprep.subr.mxu0 0.0
        %2982 = vmatpush1.msra.mxu0 0.0
        %2983 = vmatprep.subr.mxu0 0.0
        %2984 = vmatpush1.msra.mxu0 0.0
        %2985 = vmatprep.subr.mxu0 0.0
        %2986 = vmatpush1.msra.mxu0 0.0
        %2987 = vmatprep.subr.mxu0 0.0
        %2988 = vmatpush1.msra.mxu0 0.0
        %2989 = vmatprep.subr.mxu0 0.0
        %2990 = vmatpush1.msra.mxu0 0.0
        %2991 = vmatprep.subr.mxu0 0.0
        %2992 = vmatpush1.msra.mxu0 0.0
        %2993 = vmatprep.subr.mxu0 0.0
        %2994 = vmatpush1.msra.mxu0 0.0
        %2995 = vmatprep.subr.mxu0 0.0
        %2996 = vmatpush1.msra.mxu0 0.0
        %2997 = vmatprep.subr.mxu0 0.0
        %2998 = vmatpush1.msra.mxu0 0.0
        %2999 = vmatprep.subr.mxu0 0.0
        %3000 = vmatpush1.msra.mxu0 0.0
        %3001 = vmatprep.subr.mxu0 0.0
        %3002 = vmatpush1.msra.mxu0 0.0
        %3003 = vmatprep.subr.mxu0 0.0
        %3004 = vmatpush1.msra.mxu0 0.0
        %3005 = vmatprep.subr.mxu0 0.0
        %3006 = vmatpush1.msra.mxu0 0.0
        %3007 = vmatprep.subr.mxu0 0.0
        %3008 = vmatpush1.msra.mxu0 0.0
        %3009 = vmatprep.subr.mxu0 0.0
        %3010 = vmatpush1.msra.mxu0 0.0
        %3011 = vmatprep.subr.mxu0 0.0
        %3012 = vmatpush1.msra.mxu0 0.0
        %3013 = vmatprep.subr.mxu0 0.0
        %3014 = vmatpush1.msra.mxu0 0.0
        %3015 = vmatprep.subr.mxu0 0.0
        %3016 = vmatpush1.msra.mxu0 0.0
        %3017 = vmatprep.subr.mxu0 0.0
        %3018 = vmatpush1.msra.mxu0 0.0
        %3019 = vmatprep.subr.mxu0 0.0
        %3020 = vmatpush1.msra.mxu0 0.0
        %3021 = vmatprep.subr.mxu0 0.0
        %3022 = vmatpush1.msra.mxu0 0.0
        %3023 = vmatprep.mubr.f32.mxu0 0.0
        %3024 = vmatmul.mubr.f32.gmra.mrb[0].mxu0 %v2859
        %v3025 = vpop.f32.mrb[0].mxu0
        %v3026 = vadd.f32 0.0, %v3025
        %v3027 = vpop.f32.mrb[0].mxu0
        %v3028 = vadd.f32 0.0, %v3027
        %3029 = vmatprep.mubr.f32.mxu0 0.0
        %3030 = vmatmul.mubr.f32.gmra.mrb[0].mxu0 %v2862
        %v3031 = vpop.f32.mrb[0].mxu0
        %v3032 = vadd.f32 0.0, %v3031
        %v3033 = vpop.f32.mrb[0].mxu0
        %v3034 = vadd.f32 0.0, %v3033
        %3035 = vmatprep.mubr.f32.mxu0 0.0
        %3036 = vmatmul.mubr.f32.gmra.mrb[0].mxu0 %v2865
        %v3037 = vpop.f32.mrb[0].mxu0
        %v3038 = vadd.f32 0.0, %v3037
        %v3039 = vpop.f32.mrb[0].mxu0
        %v3040 = vadd.f32 0.0, %v3039
        %3041 = vmatprep.mubr.f32.mxu0 0.0
        %3042 = vmatmul.mubr.f32.gmra.mrb[0].mxu0 %v2868
        %v3043 = vpop.f32.mrb[0].mxu0
        %v3044 = vadd.f32 0.0, %v3043
        %v3045 = vpop.f32.mrb[0].mxu0
        %v3046 = vadd.f32 0.0, %v3045
        %3047 = vdwg.mxu0
        %3048 = vmatprep.subr.mxu0 %v2835
        %3049 = vmatpush1.msra.mxu0 %v2834
        %3050 = vmatprep.subr.mxu0 %v2841
        %3051 = vmatpush1.msra.mxu0 %v2840
        %3052 = vmatprep.subr.mxu0 %v2847
        %3053 = vmatpush1.msra.mxu0 %v2846
        %3054 = vmatprep.subr.mxu0 %v2853
        %3055 = vmatpush1.msra.mxu0 %v2852
        %3056 = vmatprep.subr.mxu0 0.0
        %3057 = vmatpush1.msra.mxu0 0.0
        %3058 = vmatprep.subr.mxu0 0.0
        %3059 = vmatpush1.msra.mxu0 0.0
        %3060 = vmatprep.subr.mxu0 0.0
        %3061 = vmatpush1.msra.mxu0 0.0
        %3062 = vmatprep.subr.mxu0 0.0
        %3063 = vmatpush1.msra.mxu0 0.0
        %3064 = vmatprep.subr.mxu0 0.0
        %3065 = vmatpush1.msra.mxu0 0.0
        %3066 = vmatprep.subr.mxu0 0.0
        %3067 = vmatpush1.msra.mxu0 0.0
        %3068 = vmatprep.subr.mxu0 0.0
        %3069 = vmatpush1.msra.mxu0 0.0
        %3070 = vmatprep.subr.mxu0 0.0
        %3071 = vmatpush1.msra.mxu0 0.0
        %3072 = vmatprep.subr.mxu0 0.0
        %3073 = vmatpush1.msra.mxu0 0.0
        %3074 = vmatprep.subr.mxu0 0.0
        %3075 = vmatpush1.msra.mxu0 0.0
        %3076 = vmatprep.subr.mxu0 0.0
        %3077 = vmatpush1.msra.mxu0 0.0
        %3078 = vmatprep.subr.mxu0 0.0
        %3079 = vmatpush1.msra.mxu0 0.0
        %3080 = vmatprep.subr.mxu0 0.0
        %3081 = vmatpush1.msra.mxu0 0.0
        %3082 = vmatprep.subr.mxu0 0.0
        %3083 = vmatpush1.msra.mxu0 0.0
        %3084 = vmatprep.subr.mxu0 0.0
        %3085 = vmatpush1.msra.mxu0 0.0
        %3086 = vmatprep.subr.mxu0 0.0
        %3087 = vmatpush1.msra.mxu0 0.0
        %3088 = vmatprep.subr.mxu0 0.0
        %3089 = vmatpush1.msra.mxu0 0.0
        %3090 = vmatprep.subr.mxu0 0.0
        %3091 = vmatpush1.msra.mxu0 0.0
        %3092 = vmatprep.subr.mxu0 0.0
        %3093 = vmatpush1.msra.mxu0 0.0
        %3094 = vmatprep.subr.mxu0 0.0
        %3095 = vmatpush1.msra.mxu0 0.0
        %3096 = vmatprep.subr.mxu0 0.0
        %3097 = vmatpush1.msra.mxu0 0.0
        %3098 = vmatprep.subr.mxu0 0.0
        %3099 = vmatpush1.msra.mxu0 0.0
        %3100 = vmatprep.subr.mxu0 0.0
        %3101 = vmatpush1.msra.mxu0 0.0
        %3102 = vmatprep.subr.mxu0 0.0
        %3103 = vmatpush1.msra.mxu0 0.0
        %3104 = vmatprep.subr.mxu0 0.0
        %3105 = vmatpush1.msra.mxu0 0.0
        %3106 = vmatprep.subr.mxu0 0.0
        %3107 = vmatpush1.msra.mxu0 0.0
        %3108 = vmatprep.subr.mxu0 0.0
        %3109 = vmatpush1.msra.mxu0 0.0
        %3110 = vmatprep.subr.mxu0 0.0
        %3111 = vmatpush1.msra.mxu0 0.0
        %3112 = vmatprep.mubr.f32.mxu0 0.0
        %3113 = vmatmul.mubr.f32.gmra.mrb[0].mxu0 %v2859
        %v3114 = vpop.f32.mrb[0].mxu0
        %v3115 = vadd.f32 0.0, %v3114
        %v3116 = vpop.f32.mrb[0].mxu0
        %v3117 = vadd.f32 0.0, %v3116
        %3118 = vmatprep.mubr.f32.mxu0 0.0
        %3119 = vmatmul.mubr.f32.gmra.mrb[0].mxu0 %v2862
        %v3120 = vpop.f32.mrb[0].mxu0
        %v3121 = vadd.f32 0.0, %v3120
        %v3122 = vpop.f32.mrb[0].mxu0
        %v3123 = vadd.f32 0.0, %v3122
        %3124 = vmatprep.mubr.f32.mxu0 0.0
        %3125 = vmatmul.mubr.f32.gmra.mrb[0].mxu0 %v2865
        %v3126 = vpop.f32.mrb[0].mxu0
        %v3127 = vadd.f32 0.0, %v3126
        %v3128 = vpop.f32.mrb[0].mxu0
        %v3129 = vadd.f32 0.0, %v3128
        %3130 = vmatprep.mubr.f32.mxu0 0.0
        %3131 = vmatmul.mubr.f32.gmra.mrb[0].mxu0 %v2868
        %v3132 = vpop.f32.mrb[0].mxu0
        %v3133 = vadd.f32 0.0, %v3132
        %v3134 = vpop.f32.mrb[0].mxu0
        %v3135 = vadd.f32 0.0, %v3134
        %3136 = vdwg.mxu0
        %v3137 = vmul.f32 %v2830, %v2937
        %v3138 = vmul.f32 %v2831, %v2939
        %v3139 = vmul.f32 %v2836, %v2943
        %v3140 = vmul.f32 %v2837, %v2945
        %v3141 = vmul.f32 %v2842, %v2949
        %v3142 = vmul.f32 %v2843, %v2951
        %v3143 = vmul.f32 %v2848, %v2955
        %v3144 = vmul.f32 %v2849, %v2957
        %v3145 = vmul.f32 %v2832, %v3026
        %v3146 = vmul.f32 %v2833, %v3028
        %v3147 = vmul.f32 %v2838, %v3032
        %v3148 = vmul.f32 %v2839, %v3034
        %v3149 = vmul.f32 %v2844, %v3038
        %v3150 = vmul.f32 %v2845, %v3040
        %v3151 = vmul.f32 %v2850, %v3044
        %v3152 = vmul.f32 %v2851, %v3046
        %v3153 = vadd.f32 %v3137, %v3145
        %v3154 = vadd.f32 %v3138, %v3146
        %v3155 = vadd.f32 %v3139, %v3147
        %v3156 = vadd.f32 %v3140, %v3148
        %v3157 = vadd.f32 %v3141, %v3149
        %v3158 = vadd.f32 %v3142, %v3150
        %v3159 = vadd.f32 %v3143, %v3151
        %v3160 = vadd.f32 %v3144, %v3152
        %v3161 = vmul.f32 %v2834, %v3115
        %v3162 = vmul.f32 %v2835, %v3117
        %v3163 = vmul.f32 %v2840, %v3121
        %v3164 = vmul.f32 %v2841, %v3123
        %v3165 = vmul.f32 %v2846, %v3127
        %v3166 = vmul.f32 %v2847, %v3129
        %v3167 = vmul.f32 %v2852, %v3133
        %v3168 = vmul.f32 %v2853, %v3135
        %v3169 = vadd.f32 %v3153, %v3161
        %v3170 = vadd.f32 %v3154, %v3162
        %v3171 = vadd.f32 %v3155, %v3163
        %v3172 = vadd.f32 %v3156, %v3164
        %v3173 = vadd.f32 %v3157, %v3165
        %v3174 = vadd.f32 %v3158, %v3166
        %v3175 = vadd.f32 %v3159, %v3167
        %v3176 = vadd.f32 %v3160, %v3168
        %v3177 = vmul.f32 %v2937, %v2937
        %v3178 = vmul.f32 %v2939, %v2939
        %v3179 = vmul.f32 %v2943, %v2943
        %v3180 = vmul.f32 %v2945, %v2945
        %v3181 = vmul.f32 %v2949, %v2949
        %v3182 = vmul.f32 %v2951, %v2951
        %v3183 = vmul.f32 %v2955, %v2955
        %v3184 = vmul.f32 %v2957, %v2957
        %v3185 = vmul.f32 %v3026, %v3026
        %v3186 = vmul.f32 %v3028, %v3028
        %v3187 = vmul.f32 %v3032, %v3032
        %v3188 = vmul.f32 %v3034, %v3034
        %v3189 = vmul.f32 %v3038, %v3038
        %v3190 = vmul.f32 %v3040, %v3040
        %v3191 = vmul.f32 %v3044, %v3044
        %v3192 = vmul.f32 %v3046, %v3046
        %v3193 = vadd.f32 %v3177, %v3185
        %v3194 = vadd.f32 %v3178, %v3186
        %v3195 = vadd.f32 %v3179, %v3187
        %v3196 = vadd.f32 %v3180, %v3188
        %v3197 = vadd.f32 %v3181, %v3189
        %v3198 = vadd.f32 %v3182, %v3190
        %v3199 = vadd.f32 %v3183, %v3191
        %v3200 = vadd.f32 %v3184, %v3192
        %v3201 = vmul.f32 %v3115, %v3115
        %v3202 = vmul.f32 %v3117, %v3117
        %v3203 = vmul.f32 %v3121, %v3121
        %v3204 = vmul.f32 %v3123, %v3123
        %v3205 = vmul.f32 %v3127, %v3127
        %v3206 = vmul.f32 %v3129, %v3129
        %v3207 = vmul.f32 %v3133, %v3133
        %v3208 = vmul.f32 %v3135, %v3135
        %v3209 = vadd.f32 %v3193, %v3201
        %v3210 = vadd.f32 %v3194, %v3202
        %v3211 = vadd.f32 %v3195, %v3203
        %v3212 = vadd.f32 %v3196, %v3204
        %v3213 = vadd.f32 %v3197, %v3205
        %v3214 = vadd.f32 %v3198, %v3206
        %v3215 = vadd.f32 %v3199, %v3207
        %v3216 = vadd.f32 %v3200, %v3208
        %v3217 = vadd.f32 %v3209, 1e-06
        %v3218 = vadd.f32 %v3210, 1e-06
        %v3219 = vadd.f32 %v3211, 1e-06
        %v3220 = vadd.f32 %v3212, 1e-06
        %v3221 = vadd.f32 %v3213, 1e-06
        %v3222 = vadd.f32 %v3214, 1e-06
        %v3223 = vadd.f32 %v3215, 1e-06
        %v3224 = vadd.f32 %v3216, 1e-06
        %v3225 = vmin.f32 %v3169, 0.0
        %v3226 = vmin.f32 %v3170, 0.0
        %v3227 = vmin.f32 %v3171, 0.0
        %v3228 = vmin.f32 %v3172, 0.0
        %v3229 = vmin.f32 %v3173, 0.0
        %v3230 = vmin.f32 %v3174, 0.0
        %v3231 = vmin.f32 %v3175, 0.0
        %v3232 = vmin.f32 %v3176, 0.0
        %v3233 = vrcp.pop %v3217
        %v3234 = vrcp.pop %v3218
        %v3235 = vrcp.pop %v3219
        %v3236 = vrcp.pop %v3220
        %v3237 = vrcp.pop %v3221
        %v3238 = vrcp.pop %v3222
        %v3239 = vrcp.pop %v3223
        %v3240 = vrcp.pop %v3224
        %v3241 = vmul.f32 %v3225, %v3233
        %v3242 = vmul.f32 %v3226, %v3234
        %v3243 = vmul.f32 %v3227, %v3235
        %v3244 = vmul.f32 %v3228, %v3236
        %v3245 = vmul.f32 %v3229, %v3237
        %v3246 = vmul.f32 %v3230, %v3238
        %v3247 = vmul.f32 %v3231, %v3239
        %v3248 = vmul.f32 %v3232, %v3240
        %v3249 = vmul.f32 %v3241, %v2937
        %v3250 = vmul.f32 %v3242, %v2939
        %v3251 = vmul.f32 %v3241, %v3026
        %v3252 = vmul.f32 %v3242, %v3028
        %v3253 = vmul.f32 %v3241, %v3115
        %v3254 = vmul.f32 %v3242, %v3117
        %v3255 = vmul.f32 %v3243, %v2943
        %v3256 = vmul.f32 %v3244, %v2945
        %v3257 = vmul.f32 %v3243, %v3032
        %v3258 = vmul.f32 %v3244, %v3034
        %v3259 = vmul.f32 %v3243, %v3121
        %v3260 = vmul.f32 %v3244, %v3123
        %v3261 = vmul.f32 %v3245, %v2949
        %v3262 = vmul.f32 %v3246, %v2951
        %v3263 = vmul.f32 %v3245, %v3038
        %v3264 = vmul.f32 %v3246, %v3040
        %v3265 = vmul.f32 %v3245, %v3127
        %v3266 = vmul.f32 %v3246, %v3129
        %v3267 = vmul.f32 %v3247, %v2955
        %v3268 = vmul.f32 %v3248, %v2957
        %v3269 = vmul.f32 %v3247, %v3044
        %v3270 = vmul.f32 %v3248, %v3046
        %v3271 = vmul.f32 %v3247, %v3133
        %v3272 = vmul.f32 %v3248, %v3135
        %v3273 = vsub.f32 %v2830, %v3249
        %v3274 = vsub.f32 %v2831, %v3250
        %v3275 = vsub.f32 %v2832, %v3251
        %v3276 = vsub.f32 %v2833, %v3252
        %v3277 = vsub.f32 %v2834, %v3253
        %v3278 = vsub.f32 %v2835, %v3254
        %v3279 = vsub.f32 %v2836, %v3255
        %v3280 = vsub.f32 %v2837, %v3256
        %v3281 = vsub.f32 %v2838, %v3257
        %v3282 = vsub.f32 %v2839, %v3258
        %v3283 = vsub.f32 %v2840, %v3259
        %v3284 = vsub.f32 %v2841, %v3260
        %v3285 = vsub.f32 %v2842, %v3261
        %v3286 = vsub.f32 %v2843, %v3262
        %v3287 = vsub.f32 %v2844, %v3263
        %v3288 = vsub.f32 %v2845, %v3264
        %v3289 = vsub.f32 %v2846, %v3265
        %v3290 = vsub.f32 %v2847, %v3266
        %v3291 = vsub.f32 %v2848, %v3267
        %v3292 = vsub.f32 %v2849, %v3268
        %v3293 = vsub.f32 %v2850, %v3269
        %v3294 = vsub.f32 %v2851, %v3270
        %v3295 = vsub.f32 %v2852, %v3271
        %v3296 = vsub.f32 %v2853, %v3272
        %v3297 = vld [vmem:[%s12] sm:$0xff]
        %v3298 = vld [vmem:[%s12 + $0x8] sm:$0xff]
        %v3299 = vld [vmem:[%s12 + $0x10] sm:$0xff]
        %v3300 = vld [vmem:[%s12 + $0x18] sm:$0xff]
        %v3302 = vsel %vm1320, %v3297, 0
        %v3305 = vsel %vm1320, %v3298, 0
        %v3308 = vsel %vm1320, %v3299, 0
        %v3311 = vsel %vm1320, %v3300, 0
        %3313 = vmatprep.subr.mxu0 %v3274
        %3314 = vmatpush1.msra.mxu0 %v3273
        %3315 = vmatprep.subr.mxu0 %v3280
        %3316 = vmatpush1.msra.mxu0 %v3279
        %3317 = vmatprep.subr.mxu0 %v3286
        %3318 = vmatpush1.msra.mxu0 %v3285
        %3319 = vmatprep.subr.mxu0 %v3292
        %3320 = vmatpush1.msra.mxu0 %v3291
        %3321 = vmatprep.subr.mxu0 0.0
        %3322 = vmatpush1.msra.mxu0 0.0
        %3323 = vmatprep.subr.mxu0 0.0
        %3324 = vmatpush1.msra.mxu0 0.0
        %3325 = vmatprep.subr.mxu0 0.0
        %3326 = vmatpush1.msra.mxu0 0.0
        %3327 = vmatprep.subr.mxu0 0.0
        %3328 = vmatpush1.msra.mxu0 0.0
        %3329 = vmatprep.subr.mxu0 0.0
        %3330 = vmatpush1.msra.mxu0 0.0
        %3331 = vmatprep.subr.mxu0 0.0
        %3332 = vmatpush1.msra.mxu0 0.0
        %3333 = vmatprep.subr.mxu0 0.0
        %3334 = vmatpush1.msra.mxu0 0.0
        %3335 = vmatprep.subr.mxu0 0.0
        %3336 = vmatpush1.msra.mxu0 0.0
        %3337 = vmatprep.subr.mxu0 0.0
        %3338 = vmatpush1.msra.mxu0 0.0
        %3339 = vmatprep.subr.mxu0 0.0
        %3340 = vmatpush1.msra.mxu0 0.0
        %3341 = vmatprep.subr.mxu0 0.0
        %3342 = vmatpush1.msra.mxu0 0.0
        %3343 = vmatprep.subr.mxu0 0.0
        %3344 = vmatpush1.msra.mxu0 0.0
        %3345 = vmatprep.subr.mxu0 0.0
        %3346 = vmatpush1.msra.mxu0 0.0
        %3347 = vmatprep.subr.mxu0 0.0
        %3348 = vmatpush1.msra.mxu0 0.0
        %3349 = vmatprep.subr.mxu0 0.0
        %3350 = vmatpush1.msra.mxu0 0.0
        %3351 = vmatprep.subr.mxu0 0.0
        %3352 = vmatpush1.msra.mxu0 0.0
        %3353 = vmatprep.subr.mxu0 0.0
        %3354 = vmatpush1.msra.mxu0 0.0
        %3355 = vmatprep.subr.mxu0 0.0
        %3356 = vmatpush1.msra.mxu0 0.0
        %3357 = vmatprep.subr.mxu0 0.0
        %3358 = vmatpush1.msra.mxu0 0.0
        %3359 = vmatprep.subr.mxu0 0.0
        %3360 = vmatpush1.msra.mxu0 0.0
        %3361 = vmatprep.subr.mxu0 0.0
        %3362 = vmatpush1.msra.mxu0 0.0
        %3363 = vmatprep.subr.mxu0 0.0
        %3364 = vmatpush1.msra.mxu0 0.0
        %3365 = vmatprep.subr.mxu0 0.0
        %3366 = vmatpush1.msra.mxu0 0.0
        %3367 = vmatprep.subr.mxu0 0.0
        %3368 = vmatpush1.msra.mxu0 0.0
        %3369 = vmatprep.subr.mxu0 0.0
        %3370 = vmatpush1.msra.mxu0 0.0
        %3371 = vmatprep.subr.mxu0 0.0
        %3372 = vmatpush1.msra.mxu0 0.0
        %3373 = vmatprep.subr.mxu0 0.0
        %3374 = vmatpush1.msra.mxu0 0.0
        %3375 = vmatprep.subr.mxu0 0.0
        %3376 = vmatpush1.msra.mxu0 0.0
        %3377 = vmatprep.mubr.f32.mxu0 0.0
        %3378 = vmatmul.mubr.f32.gmra.mrb[0].mxu0 %v3302
        %v3379 = vpop.f32.mrb[0].mxu0
        %v3380 = vadd.f32 0.0, %v3379
        %v3381 = vpop.f32.mrb[0].mxu0
        %v3382 = vadd.f32 0.0, %v3381
        %3383 = vmatprep.mubr.f32.mxu0 0.0
        %3384 = vmatmul.mubr.f32.gmra.mrb[0].mxu0 %v3305
        %v3385 = vpop.f32.mrb[0].mxu0
        %v3386 = vadd.f32 0.0, %v3385
        %v3387 = vpop.f32.mrb[0].mxu0
        %v3388 = vadd.f32 0.0, %v3387
        %3389 = vmatprep.mubr.f32.mxu0 0.0
        %3390 = vmatmul.mubr.f32.gmra.mrb[0].mxu0 %v3308
        %v3391 = vpop.f32.mrb[0].mxu0
        %v3392 = vadd.f32 0.0, %v3391
        %v3393 = vpop.f32.mrb[0].mxu0
        %v3394 = vadd.f32 0.0, %v3393
        %3395 = vmatprep.mubr.f32.mxu0 0.0
        %3396 = vmatmul.mubr.f32.gmra.mrb[0].mxu0 %v3311
        %v3397 = vpop.f32.mrb[0].mxu0
        %v3398 = vadd.f32 0.0, %v3397
        %v3399 = vpop.f32.mrb[0].mxu0
        %v3400 = vadd.f32 0.0, %v3399
        %3401 = vdwg.mxu0
        %3402 = vmatprep.subr.mxu0 %v3276
        %3403 = vmatpush1.msra.mxu0 %v3275
        %3404 = vmatprep.subr.mxu0 %v3282
        %3405 = vmatpush1.msra.mxu0 %v3281
        %3406 = vmatprep.subr.mxu0 %v3288
        %3407 = vmatpush1.msra.mxu0 %v3287
        %3408 = vmatprep.subr.mxu0 %v3294
        %3409 = vmatpush1.msra.mxu0 %v3293
        %3410 = vmatprep.subr.mxu0 0.0
        %3411 = vmatpush1.msra.mxu0 0.0
        %3412 = vmatprep.subr.mxu0 0.0
        %3413 = vmatpush1.msra.mxu0 0.0
        %3414 = vmatprep.subr.mxu0 0.0
        %3415 = vmatpush1.msra.mxu0 0.0
        %3416 = vmatprep.subr.mxu0 0.0
        %3417 = vmatpush1.msra.mxu0 0.0
        %3418 = vmatprep.subr.mxu0 0.0
        %3419 = vmatpush1.msra.mxu0 0.0
        %3420 = vmatprep.subr.mxu0 0.0
        %3421 = vmatpush1.msra.mxu0 0.0
        %3422 = vmatprep.subr.mxu0 0.0
        %3423 = vmatpush1.msra.mxu0 0.0
        %3424 = vmatprep.subr.mxu0 0.0
        %3425 = vmatpush1.msra.mxu0 0.0
        %3426 = vmatprep.subr.mxu0 0.0
        %3427 = vmatpush1.msra.mxu0 0.0
        %3428 = vmatprep.subr.mxu0 0.0
        %3429 = vmatpush1.msra.mxu0 0.0
        %3430 = vmatprep.subr.mxu0 0.0
        %3431 = vmatpush1.msra.mxu0 0.0
        %3432 = vmatprep.subr.mxu0 0.0
        %3433 = vmatpush1.msra.mxu0 0.0
        %3434 = vmatprep.subr.mxu0 0.0
        %3435 = vmatpush1.msra.mxu0 0.0
        %3436 = vmatprep.subr.mxu0 0.0
        %3437 = vmatpush1.msra.mxu0 0.0
        %3438 = vmatprep.subr.mxu0 0.0
        %3439 = vmatpush1.msra.mxu0 0.0
        %3440 = vmatprep.subr.mxu0 0.0
        %3441 = vmatpush1.msra.mxu0 0.0
        %3442 = vmatprep.subr.mxu0 0.0
        %3443 = vmatpush1.msra.mxu0 0.0
        %3444 = vmatprep.subr.mxu0 0.0
        %3445 = vmatpush1.msra.mxu0 0.0
        %3446 = vmatprep.subr.mxu0 0.0
        %3447 = vmatpush1.msra.mxu0 0.0
        %3448 = vmatprep.subr.mxu0 0.0
        %3449 = vmatpush1.msra.mxu0 0.0
        %3450 = vmatprep.subr.mxu0 0.0
        %3451 = vmatpush1.msra.mxu0 0.0
        %3452 = vmatprep.subr.mxu0 0.0
        %3453 = vmatpush1.msra.mxu0 0.0
        %3454 = vmatprep.subr.mxu0 0.0
        %3455 = vmatpush1.msra.mxu0 0.0
        %3456 = vmatprep.subr.mxu0 0.0
        %3457 = vmatpush1.msra.mxu0 0.0
        %3458 = vmatprep.subr.mxu0 0.0
        %3459 = vmatpush1.msra.mxu0 0.0
        %3460 = vmatprep.subr.mxu0 0.0
        %3461 = vmatpush1.msra.mxu0 0.0
        %3462 = vmatprep.subr.mxu0 0.0
        %3463 = vmatpush1.msra.mxu0 0.0
        %3464 = vmatprep.subr.mxu0 0.0
        %3465 = vmatpush1.msra.mxu0 0.0
        %3466 = vmatprep.mubr.f32.mxu0 0.0
        %3467 = vmatmul.mubr.f32.gmra.mrb[0].mxu0 %v3302
        %v3468 = vpop.f32.mrb[0].mxu0
        %v3469 = vadd.f32 0.0, %v3468
        %v3470 = vpop.f32.mrb[0].mxu0
        %v3471 = vadd.f32 0.0, %v3470
        %3472 = vmatprep.mubr.f32.mxu0 0.0
        %3473 = vmatmul.mubr.f32.gmra.mrb[0].mxu0 %v3305
        %v3474 = vpop.f32.mrb[0].mxu0
        %v3475 = vadd.f32 0.0, %v3474
        %v3476 = vpop.f32.mrb[0].mxu0
        %v3477 = vadd.f32 0.0, %v3476
        %3478 = vmatprep.mubr.f32.mxu0 0.0
        %3479 = vmatmul.mubr.f32.gmra.mrb[0].mxu0 %v3308
        %v3480 = vpop.f32.mrb[0].mxu0
        %v3481 = vadd.f32 0.0, %v3480
        %v3482 = vpop.f32.mrb[0].mxu0
        %v3483 = vadd.f32 0.0, %v3482
        %3484 = vmatprep.mubr.f32.mxu0 0.0
        %3485 = vmatmul.mubr.f32.gmra.mrb[0].mxu0 %v3311
        %v3486 = vpop.f32.mrb[0].mxu0
        %v3487 = vadd.f32 0.0, %v3486
        %v3488 = vpop.f32.mrb[0].mxu0
        %v3489 = vadd.f32 0.0, %v3488
        %3490 = vdwg.mxu0
        %3491 = vmatprep.subr.mxu0 %v3278
        %3492 = vmatpush1.msra.mxu0 %v3277
        %3493 = vmatprep.subr.mxu0 %v3284
        %3494 = vmatpush1.msra.mxu0 %v3283
        %3495 = vmatprep.subr.mxu0 %v3290
        %3496 = vmatpush1.msra.mxu0 %v3289
        %3497 = vmatprep.subr.mxu0 %v3296
        %3498 = vmatpush1.msra.mxu0 %v3295
        %3499 = vmatprep.subr.mxu0 0.0
        %3500 = vmatpush1.msra.mxu0 0.0
        %3501 = vmatprep.subr.mxu0 0.0
        %3502 = vmatpush1.msra.mxu0 0.0
        %3503 = vmatprep.subr.mxu0 0.0
        %3504 = vmatpush1.msra.mxu0 0.0
        %3505 = vmatprep.subr.mxu0 0.0
        %3506 = vmatpush1.msra.mxu0 0.0
        %3507 = vmatprep.subr.mxu0 0.0
        %3508 = vmatpush1.msra.mxu0 0.0
        %3509 = vmatprep.subr.mxu0 0.0
        %3510 = vmatpush1.msra.mxu0 0.0
        %3511 = vmatprep.subr.mxu0 0.0
        %3512 = vmatpush1.msra.mxu0 0.0
        %3513 = vmatprep.subr.mxu0 0.0
        %3514 = vmatpush1.msra.mxu0 0.0
        %3515 = vmatprep.subr.mxu0 0.0
        %3516 = vmatpush1.msra.mxu0 0.0
        %3517 = vmatprep.subr.mxu0 0.0
        %3518 = vmatpush1.msra.mxu0 0.0
        %3519 = vmatprep.subr.mxu0 0.0
        %3520 = vmatpush1.msra.mxu0 0.0
        %3521 = vmatprep.subr.mxu0 0.0
        %3522 = vmatpush1.msra.mxu0 0.0
        %3523 = vmatprep.subr.mxu0 0.0
        %3524 = vmatpush1.msra.mxu0 0.0
        %3525 = vmatprep.subr.mxu0 0.0
        %3526 = vmatpush1.msra.mxu0 0.0
        %3527 = vmatprep.subr.mxu0 0.0
        %3528 = vmatpush1.msra.mxu0 0.0
        %3529 = vmatprep.subr.mxu0 0.0
        %3530 = vmatpush1.msra.mxu0 0.0
        %3531 = vmatprep.subr.mxu0 0.0
        %3532 = vmatpush1.msra.mxu0 0.0
        %3533 = vmatprep.subr.mxu0 0.0
        %3534 = vmatpush1.msra.mxu0 0.0
        %3535 = vmatprep.subr.mxu0 0.0
        %3536 = vmatpush1.msra.mxu0 0.0
        %3537 = vmatprep.subr.mxu0 0.0
        %3538 = vmatpush1.msra.mxu0 0.0
        %3539 = vmatprep.subr.mxu0 0.0
        %3540 = vmatpush1.msra.mxu0 0.0
        %3541 = vmatprep.subr.mxu0 0.0
        %3542 = vmatpush1.msra.mxu0 0.0
        %3543 = vmatprep.subr.mxu0 0.0
        %3544 = vmatpush1.msra.mxu0 0.0
        %3545 = vmatprep.subr.mxu0 0.0
        %3546 = vmatpush1.msra.mxu0 0.0
        %3547 = vmatprep.subr.mxu0 0.0
        %3548 = vmatpush1.msra.mxu0 0.0
        %3549 = vmatprep.subr.mxu0 0.0
        %3550 = vmatpush1.msra.mxu0 0.0
        %3551 = vmatprep.subr.mxu0 0.0
        %3552 = vmatpush1.msra.mxu0 0.0
        %3553 = vmatprep.subr.mxu0 0.0
        %3554 = vmatpush1.msra.mxu0 0.0
        %3555 = vmatprep.mubr.f32.mxu0 0.0
        %3556 = vmatmul.mubr.f32.gmra.mrb[0].mxu0 %v3302
        %v3557 = vpop.f32.mrb[0].mxu0
        %v3558 = vadd.f32 0.0, %v3557
        %v3559 = vpop.f32.mrb[0].mxu0
        %v3560 = vadd.f32 0.0, %v3559
        %3561 = vmatprep.mubr.f32.mxu0 0.0
        %3562 = vmatmul.mubr.f32.gmra.mrb[0].mxu0 %v3305
        %v3563 = vpop.f32.mrb[0].mxu0
        %v3564 = vadd.f32 0.0, %v3563
        %v3565 = vpop.f32.mrb[0].mxu0
        %v3566 = vadd.f32 0.0, %v3565
        %3567 = vmatprep.mubr.f32.mxu0 0.0
        %3568 = vmatmul.mubr.f32.gmra.mrb[0].mxu0 %v3308
        %v3569 = vpop.f32.mrb[0].mxu0
        %v3570 = vadd.f32 0.0, %v3569
        %v3571 = vpop.f32.mrb[0].mxu0
        %v3572 = vadd.f32 0.0, %v3571
        %3573 = vmatprep.mubr.f32.mxu0 0.0
        %3574 = vmatmul.mubr.f32.gmra.mrb[0].mxu0 %v3311
        %v3575 = vpop.f32.mrb[0].mxu0
        %v3576 = vadd.f32 0.0, %v3575
        %v3577 = vpop.f32.mrb[0].mxu0
        %v3578 = vadd.f32 0.0, %v3577
        %3579 = vdwg.mxu0
        %v3580 = vld [vmem:[%s13] sm:$0xff]
        %v3581 = vld [vmem:[%s13 + $0x8] sm:$0xff]
        %v3582 = vld [vmem:[%s13 + $0x10] sm:$0xff]
        %v3583 = vld [vmem:[%s13 + $0x18] sm:$0xff]
        %v3584 = vld [vmem:[%s14] sm:$0xff]
        %v3585 = vld [vmem:[%s14 + $0x8] sm:$0xff]
        %v3586 = vld [vmem:[%s14 + $0x10] sm:$0xff]
        %v3587 = vld [vmem:[%s14 + $0x18] sm:$0xff]
        %v3588 = vmul.f32 %v3380, %v3380
        %v3589 = vmul.f32 %v3382, %v3382
        %v3590 = vmul.f32 %v3386, %v3386
        %v3591 = vmul.f32 %v3388, %v3388
        %v3592 = vmul.f32 %v3392, %v3392
        %v3593 = vmul.f32 %v3394, %v3394
        %v3594 = vmul.f32 %v3398, %v3398
        %v3595 = vmul.f32 %v3400, %v3400
        %v3596 = vmul.f32 %v3469, %v3469
        %v3597 = vmul.f32 %v3471, %v3471
        %v3598 = vmul.f32 %v3475, %v3475
        %v3599 = vmul.f32 %v3477, %v3477
        %v3600 = vmul.f32 %v3481, %v3481
        %v3601 = vmul.f32 %v3483, %v3483
        %v3602 = vmul.f32 %v3487, %v3487
        %v3603 = vmul.f32 %v3489, %v3489
        %v3604 = vadd.f32 %v3588, %v3596
        %v3605 = vadd.f32 %v3589, %v3597
        %v3606 = vadd.f32 %v3590, %v3598
        %v3607 = vadd.f32 %v3591, %v3599
        %v3608 = vadd.f32 %v3592, %v3600
        %v3609 = vadd.f32 %v3593, %v3601
        %v3610 = vadd.f32 %v3594, %v3602
        %v3611 = vadd.f32 %v3595, %v3603
        %v3612 = vmul.f32 %v3558, %v3558
        %v3613 = vmul.f32 %v3560, %v3560
        %v3614 = vmul.f32 %v3564, %v3564
        %v3615 = vmul.f32 %v3566, %v3566
        %v3616 = vmul.f32 %v3570, %v3570
        %v3617 = vmul.f32 %v3572, %v3572
        %v3618 = vmul.f32 %v3576, %v3576
        %v3619 = vmul.f32 %v3578, %v3578
        %v3620 = vadd.f32 %v3604, %v3612
        %v3621 = vadd.f32 %v3605, %v3613
        %v3622 = vadd.f32 %v3606, %v3614
        %v3623 = vadd.f32 %v3607, %v3615
        %v3624 = vadd.f32 %v3608, %v3616
        %v3625 = vadd.f32 %v3609, %v3617
        %v3626 = vadd.f32 %v3610, %v3618
        %v3627 = vadd.f32 %v3611, %v3619
        %v3628 = vadd.f32 %v3620, 1e-06
        %v3629 = vadd.f32 %v3621, 1e-06
        %v3630 = vadd.f32 %v3622, 1e-06
        %v3631 = vadd.f32 %v3623, 1e-06
        %v3632 = vadd.f32 %v3624, 1e-06
        %v3633 = vadd.f32 %v3625, 1e-06
        %v3634 = vadd.f32 %v3626, 1e-06
        %v3635 = vadd.f32 %v3627, 1e-06
        %v3636 = vrsqrt.pop %v3628
        %v3637 = vmul.f32 %v3628, %v3636
        %vm3638 = vcmp.eq.f32.partialorder %v3628, inf
        %v3639 = vsel %vm3638, %v3628, %v3637
        %vm3640 = vcmp.eq.f32.partialorder %v3628, 0.0
        %v3641 = vand.u32 %v3628, 2147483648
        %v3642 = vsel %vm3640, %v3641, %v3639
        %v3643 = vrsqrt.pop %v3629
        %v3644 = vmul.f32 %v3629, %v3643
        %vm3645 = vcmp.eq.f32.partialorder %v3629, inf
        %v3646 = vsel %vm3645, %v3629, %v3644
        %vm3647 = vcmp.eq.f32.partialorder %v3629, 0.0
        %v3648 = vand.u32 %v3629, 2147483648
        %v3649 = vsel %vm3647, %v3648, %v3646
        %v3650 = vrsqrt.pop %v3630
        %v3651 = vmul.f32 %v3630, %v3650
        %vm3652 = vcmp.eq.f32.partialorder %v3630, inf
        %v3653 = vsel %vm3652, %v3630, %v3651
        %vm3654 = vcmp.eq.f32.partialorder %v3630, 0.0
        %v3655 = vand.u32 %v3630, 2147483648
        %v3656 = vsel %vm3654, %v3655, %v3653
        %v3657 = vrsqrt.pop %v3631
        %v3658 = vmul.f32 %v3631, %v3657
        %vm3659 = vcmp.eq.f32.partialorder %v3631, inf
        %v3660 = vsel %vm3659, %v3631, %v3658
        %vm3661 = vcmp.eq.f32.partialorder %v3631, 0.0
        %v3662 = vand.u32 %v3631, 2147483648
        %v3663 = vsel %vm3661, %v3662, %v3660
        %v3664 = vrsqrt.pop %v3632
        %v3665 = vmul.f32 %v3632, %v3664
        %vm3666 = vcmp.eq.f32.partialorder %v3632, inf
        %v3667 = vsel %vm3666, %v3632, %v3665
        %vm3668 = vcmp.eq.f32.partialorder %v3632, 0.0
        %v3669 = vand.u32 %v3632, 2147483648
        %v3670 = vsel %vm3668, %v3669, %v3667
        %v3671 = vrsqrt.pop %v3633
        %v3672 = vmul.f32 %v3633, %v3671
        %vm3673 = vcmp.eq.f32.partialorder %v3633, inf
        %v3674 = vsel %vm3673, %v3633, %v3672
        %vm3675 = vcmp.eq.f32.partialorder %v3633, 0.0
        %v3676 = vand.u32 %v3633, 2147483648
        %v3677 = vsel %vm3675, %v3676, %v3674
        %v3678 = vrsqrt.pop %v3634
        %v3679 = vmul.f32 %v3634, %v3678
        %vm3680 = vcmp.eq.f32.partialorder %v3634, inf
        %v3681 = vsel %vm3680, %v3634, %v3679
        %vm3682 = vcmp.eq.f32.partialorder %v3634, 0.0
        %v3683 = vand.u32 %v3634, 2147483648
        %v3684 = vsel %vm3682, %v3683, %v3681
        %v3685 = vrsqrt.pop %v3635
        %v3686 = vmul.f32 %v3635, %v3685
        %vm3687 = vcmp.eq.f32.partialorder %v3635, inf
        %v3688 = vsel %vm3687, %v3635, %v3686
        %vm3689 = vcmp.eq.f32.partialorder %v3635, 0.0
        %v3690 = vand.u32 %v3635, 2147483648
        %v3691 = vsel %vm3689, %v3690, %v3688
        %v3692 = vadd.f32 %v3642, %v3656
        %v3693 = vadd.f32 %v3692, %v3670
        %v3694 = vadd.f32 %v3693, %v3684
        %v3695 = vrot.slane %v3694, 4
        %v3696 = vadd.f32 %v3694, %v3695
        %v3697 = vrot.slane %v3696, 2
        %v3698 = vadd.f32 %v3696, %v3697
        %v3699 = vrot.slane %v3698, 1
        %v3700 = vadd.f32 %v3698, %v3699
        %v3701 = vadd.f32 %v3649, %v3663
        %v3702 = vadd.f32 %v3701, %v3677
        %v3703 = vadd.f32 %v3702, %v3691
        %v3704 = vrot.slane %v3703, 4
        %v3705 = vadd.f32 %v3703, %v3704
        %v3706 = vrot.slane %v3705, 2
        %v3707 = vadd.f32 %v3705, %v3706
        %v3708 = vrot.slane %v3707, 1
        %v3709 = vadd.f32 %v3707, %v3708
        %v3710 = vmul.f32 %v3700, %v1171
        %v3711 = vmul.f32 %v3709, %v1171
        %v3712 = vadd.f32 %v3628, %v3630
        %v3713 = vadd.f32 %v3712, %v3632
        %v3714 = vadd.f32 %v3713, %v3634
        %v3715 = vrot.slane %v3714, 4
        %v3716 = vadd.f32 %v3714, %v3715
        %v3717 = vrot.slane %v3716, 2
        %v3718 = vadd.f32 %v3716, %v3717
        %v3719 = vrot.slane %v3718, 1
        %v3720 = vadd.f32 %v3718, %v3719
        %v3721 = vadd.f32 %v3629, %v3631
        %v3722 = vadd.f32 %v3721, %v3633
        %v3723 = vadd.f32 %v3722, %v3635
        %v3724 = vrot.slane %v3723, 4
        %v3725 = vadd.f32 %v3723, %v3724
        %v3726 = vrot.slane %v3725, 2
        %v3727 = vadd.f32 %v3725, %v3726
        %v3728 = vrot.slane %v3727, 1
        %v3729 = vadd.f32 %v3727, %v3728
        %v3730 = vmul.f32 %v3720, %v1171
        %v3731 = vmul.f32 %v3729, %v1171
        %v3732 = vmul.f32 %v3710, %v3710
        %v3733 = vmul.f32 %v3711, %v3711
        %v3734 = vsub.f32 %v3730, %v3732
        %v3735 = vsub.f32 %v3731, %v3733
        %v3736 = vmax.f32 %v3734, 0.0
        %v3737 = vmax.f32 %v3735, 0.0
        %v3738 = vsub.f32 %v3642, %v3710
        %v3739 = vsub.f32 %v3649, %v3711
        %v3740 = vsub.f32 %v3656, %v3710
        %v3741 = vsub.f32 %v3663, %v3711
        %v3742 = vsub.f32 %v3670, %v3710
        %v3743 = vsub.f32 %v3677, %v3711
        %v3744 = vsub.f32 %v3684, %v3710
        %v3745 = vsub.f32 %v3691, %v3711
        %v3746 = vadd.f32 %v3736, 1e-06
        %v3747 = vadd.f32 %v3737, 1e-06
        %v3748 = vrsqrt.pop %v3746
        %v3749 = vrsqrt.pop %v3747
        %v3750 = vmul.f32 %v3738, %v3748
        %v3751 = vmul.f32 %v3739, %v3749
        %v3752 = vmul.f32 %v3740, %v3748
        %v3753 = vmul.f32 %v3741, %v3749
        %v3754 = vmul.f32 %v3742, %v3748
        %v3755 = vmul.f32 %v3743, %v3749
        %v3756 = vmul.f32 %v3744, %v3748
        %v3757 = vmul.f32 %v3745, %v3749
        %3759 = vset.pattern.permute.xlu0 0
        %3760 = vperm.xlu0 %3759, %v3580
        %v3761 = vpop.permute.xlu0 %3760
        %3764 = vset.pattern.permute.xlu0 0
        %3765 = vperm.xlu0 %3764, %v3581
        %v3766 = vpop.permute.xlu0 %3765
        %3769 = vset.pattern.permute.xlu0 0
        %3770 = vperm.xlu0 %3769, %v3582
        %v3771 = vpop.permute.xlu0 %3770
        %3774 = vset.pattern.permute.xlu0 0
        %3775 = vperm.xlu0 %3774, %v3583
        %v3776 = vpop.permute.xlu0 %3775
        %v3778 = vmul.f32 %v3750, %v3761
        %v3779 = vmul.f32 %v3751, %v3761
        %v3780 = vmul.f32 %v3752, %v3766
        %v3781 = vmul.f32 %v3753, %v3766
        %v3782 = vmul.f32 %v3754, %v3771
        %v3783 = vmul.f32 %v3755, %v3771
        %v3784 = vmul.f32 %v3756, %v3776
        %v3785 = vmul.f32 %v3757, %v3776
        %3787 = vset.pattern.permute.xlu0 0
        %3788 = vperm.xlu0 %3787, %v3584
        %v3789 = vpop.permute.xlu0 %3788
        %3792 = vset.pattern.permute.xlu0 0
        %3793 = vperm.xlu0 %3792, %v3585
        %v3794 = vpop.permute.xlu0 %3793
        %3797 = vset.pattern.permute.xlu0 0
        %3798 = vperm.xlu0 %3797, %v3586
        %v3799 = vpop.permute.xlu0 %3798
        %3802 = vset.pattern.permute.xlu0 0
        %3803 = vperm.xlu0 %3802, %v3587
        %v3804 = vpop.permute.xlu0 %3803
        %v3806 = vadd.f32 %v3778, %v3789
        %v3807 = vadd.f32 %v3779, %v3789
        %v3808 = vadd.f32 %v3780, %v3794
        %v3809 = vadd.f32 %v3781, %v3794
        %v3810 = vadd.f32 %v3782, %v3799
        %v3811 = vadd.f32 %v3783, %v3799
        %v3812 = vadd.f32 %v3784, %v3804
        %v3813 = vadd.f32 %v3785, %v3804
        %v3814 = vrcp.pop %v3642
        %v3815 = vrcp.pop %v3649
        %v3816 = vrcp.pop %v3656
        %v3817 = vrcp.pop %v3663
        %v3818 = vrcp.pop %v3670
        %v3819 = vrcp.pop %v3677
        %v3820 = vrcp.pop %v3684
        %v3821 = vrcp.pop %v3691
        %v3822 = vmul.f32 %v3806, %v3814
        %v3823 = vmul.f32 %v3807, %v3815
        %v3824 = vmul.f32 %v3808, %v3816
        %v3825 = vmul.f32 %v3809, %v3817
        %v3826 = vmul.f32 %v3810, %v3818
        %v3827 = vmul.f32 %v3811, %v3819
        %v3828 = vmul.f32 %v3812, %v3820
        %v3829 = vmul.f32 %v3813, %v3821
        %v3830 = vmul.f32 %v3380, %v3822
        %v3831 = vmul.f32 %v3382, %v3823
        %v3832 = vmul.f32 %v3469, %v3822
        %v3833 = vmul.f32 %v3471, %v3823
        %v3834 = vmul.f32 %v3558, %v3822
        %v3835 = vmul.f32 %v3560, %v3823
        %v3836 = vmul.f32 %v3386, %v3824
        %v3837 = vmul.f32 %v3388, %v3825
        %v3838 = vmul.f32 %v3475, %v3824
        %v3839 = vmul.f32 %v3477, %v3825
        %v3840 = vmul.f32 %v3564, %v3824
        %v3841 = vmul.f32 %v3566, %v3825
        %v3842 = vmul.f32 %v3392, %v3826
        %v3843 = vmul.f32 %v3394, %v3827
        %v3844 = vmul.f32 %v3481, %v3826
        %v3845 = vmul.f32 %v3483, %v3827
        %v3846 = vmul.f32 %v3570, %v3826
        %v3847 = vmul.f32 %v3572, %v3827
        %v3848 = vmul.f32 %v3398, %v3828
        %v3849 = vmul.f32 %v3400, %v3829
        %v3850 = vmul.f32 %v3487, %v3828
        %v3851 = vmul.f32 %v3489, %v3829
        %v3852 = vmul.f32 %v3576, %v3828
        %v3853 = vmul.f32 %v3578, %v3829
        %v3854 = vld [vmem:[%s15] sm:$0xff]
        %v3855 = vld [vmem:[%s15 + $0x8] sm:$0xff]
        %v3856 = vld [vmem:[%s15 + $0x10] sm:$0xff]
        %v3857 = vld [vmem:[%s15 + $0x18] sm:$0xff]
        %v3859 = vsel %vm1320, %v3854, 0
        %v3862 = vsel %vm1320, %v3855, 0
        %v3865 = vsel %vm1320, %v3856, 0
        %v3868 = vsel %vm1320, %v3857, 0
        %3870 = vmatprep.subr.mxu0 %v3831
        %3871 = vmatpush1.msra.mxu0 %v3830
        %3872 = vmatprep.subr.mxu0 %v3837
        %3873 = vmatpush1.msra.mxu0 %v3836
        %3874 = vmatprep.subr.mxu0 %v3843
        %3875 = vmatpush1.msra.mxu0 %v3842
        %3876 = vmatprep.subr.mxu0 %v3849
        %3877 = vmatpush1.msra.mxu0 %v3848
        %3878 = vmatprep.subr.mxu0 0.0
        %3879 = vmatpush1.msra.mxu0 0.0
        %3880 = vmatprep.subr.mxu0 0.0
        %3881 = vmatpush1.msra.mxu0 0.0
        %3882 = vmatprep.subr.mxu0 0.0
        %3883 = vmatpush1.msra.mxu0 0.0
        %3884 = vmatprep.subr.mxu0 0.0
        %3885 = vmatpush1.msra.mxu0 0.0
        %3886 = vmatprep.subr.mxu0 0.0
        %3887 = vmatpush1.msra.mxu0 0.0
        %3888 = vmatprep.subr.mxu0 0.0
        %3889 = vmatpush1.msra.mxu0 0.0
        %3890 = vmatprep.subr.mxu0 0.0
        %3891 = vmatpush1.msra.mxu0 0.0
        %3892 = vmatprep.subr.mxu0 0.0
        %3893 = vmatpush1.msra.mxu0 0.0
        %3894 = vmatprep.subr.mxu0 0.0
        %3895 = vmatpush1.msra.mxu0 0.0
        %3896 = vmatprep.subr.mxu0 0.0
        %3897 = vmatpush1.msra.mxu0 0.0
        %3898 = vmatprep.subr.mxu0 0.0
        %3899 = vmatpush1.msra.mxu0 0.0
        %3900 = vmatprep.subr.mxu0 0.0
        %3901 = vmatpush1.msra.mxu0 0.0
        %3902 = vmatprep.subr.mxu0 0.0
        %3903 = vmatpush1.msra.mxu0 0.0
        %3904 = vmatprep.subr.mxu0 0.0
        %3905 = vmatpush1.msra.mxu0 0.0
        %3906 = vmatprep.subr.mxu0 0.0
        %3907 = vmatpush1.msra.mxu0 0.0
        %3908 = vmatprep.subr.mxu0 0.0
        %3909 = vmatpush1.msra.mxu0 0.0
        %3910 = vmatprep.subr.mxu0 0.0
        %3911 = vmatpush1.msra.mxu0 0.0
        %3912 = vmatprep.subr.mxu0 0.0
        %3913 = vmatpush1.msra.mxu0 0.0
        %3914 = vmatprep.subr.mxu0 0.0
        %3915 = vmatpush1.msra.mxu0 0.0
        %3916 = vmatprep.subr.mxu0 0.0
        %3917 = vmatpush1.msra.mxu0 0.0
        %3918 = vmatprep.subr.mxu0 0.0
        %3919 = vmatpush1.msra.mxu0 0.0
        %3920 = vmatprep.subr.mxu0 0.0
        %3921 = vmatpush1.msra.mxu0 0.0
        %3922 = vmatprep.subr.mxu0 0.0
        %3923 = vmatpush1.msra.mxu0 0.0
        %3924 = vmatprep.subr.mxu0 0.0
        %3925 = vmatpush1.msra.mxu0 0.0
        %3926 = vmatprep.subr.mxu0 0.0
        %3927 = vmatpush1.msra.mxu0 0.0
        %3928 = vmatprep.subr.mxu0 0.0
        %3929 = vmatpush1.msra.mxu0 0.0
        %3930 = vmatprep.subr.mxu0 0.0
        %3931 = vmatpush1.msra.mxu0 0.0
        %3932 = vmatprep.subr.mxu0 0.0
        %3933 = vmatpush1.msra.mxu0 0.0
        %3934 = vmatprep.mubr.f32.mxu0 0.0
        %3935 = vmatmul.mubr.f32.gmra.mrb[0].mxu0 %v3859
        %v3936 = vpop.f32.mrb[0].mxu0
        %v3937 = vadd.f32 0.0, %v3936
        %v3938 = vpop.f32.mrb[0].mxu0
        %v3939 = vadd.f32 0.0, %v3938
        %3940 = vmatprep.mubr.f32.mxu0 0.0
        %3941 = vmatmul.mubr.f32.gmra.mrb[0].mxu0 %v3862
        %v3942 = vpop.f32.mrb[0].mxu0
        %v3943 = vadd.f32 0.0, %v3942
        %v3944 = vpop.f32.mrb[0].mxu0
        %v3945 = vadd.f32 0.0, %v3944
        %3946 = vmatprep.mubr.f32.mxu0 0.0
        %3947 = vmatmul.mubr.f32.gmra.mrb[0].mxu0 %v3865
        %v3948 = vpop.f32.mrb[0].mxu0
        %v3949 = vadd.f32 0.0, %v3948
        %v3950 = vpop.f32.mrb[0].mxu0
        %v3951 = vadd.f32 0.0, %v3950
        %3952 = vmatprep.mubr.f32.mxu0 0.0
        %3953 = vmatmul.mubr.f32.gmra.mrb[0].mxu0 %v3868
        %v3954 = vpop.f32.mrb[0].mxu0
        %v3955 = vadd.f32 0.0, %v3954
        %v3956 = vpop.f32.mrb[0].mxu0
        %v3957 = vadd.f32 0.0, %v3956
        %3958 = vdwg.mxu0
        %3959 = vmatprep.subr.mxu0 %v3833
        %3960 = vmatpush1.msra.mxu0 %v3832
        %3961 = vmatprep.subr.mxu0 %v3839
        %3962 = vmatpush1.msra.mxu0 %v3838
        %3963 = vmatprep.subr.mxu0 %v3845
        %3964 = vmatpush1.msra.mxu0 %v3844
        %3965 = vmatprep.subr.mxu0 %v3851
        %3966 = vmatpush1.msra.mxu0 %v3850
        %3967 = vmatprep.subr.mxu0 0.0
        %3968 = vmatpush1.msra.mxu0 0.0
        %3969 = vmatprep.subr.mxu0 0.0
        %3970 = vmatpush1.msra.mxu0 0.0
        %3971 = vmatprep.subr.mxu0 0.0
        %3972 = vmatpush1.msra.mxu0 0.0
        %3973 = vmatprep.subr.mxu0 0.0
        %3974 = vmatpush1.msra.mxu0 0.0
        %3975 = vmatprep.subr.mxu0 0.0
        %3976 = vmatpush1.msra.mxu0 0.0
        %3977 = vmatprep.subr.mxu0 0.0
        %3978 = vmatpush1.msra.mxu0 0.0
        %3979 = vmatprep.subr.mxu0 0.0
        %3980 = vmatpush1.msra.mxu0 0.0
        %3981 = vmatprep.subr.mxu0 0.0
        %3982 = vmatpush1.msra.mxu0 0.0
        %3983 = vmatprep.subr.mxu0 0.0
        %3984 = vmatpush1.msra.mxu0 0.0
        %3985 = vmatprep.subr.mxu0 0.0
        %3986 = vmatpush1.msra.mxu0 0.0
        %3987 = vmatprep.subr.mxu0 0.0
        %3988 = vmatpush1.msra.mxu0 0.0
        %3989 = vmatprep.subr.mxu0 0.0
        %3990 = vmatpush1.msra.mxu0 0.0
        %3991 = vmatprep.subr.mxu0 0.0
        %3992 = vmatpush1.msra.mxu0 0.0
        %3993 = vmatprep.subr.mxu0 0.0
        %3994 = vmatpush1.msra.mxu0 0.0
        %3995 = vmatprep.subr.mxu0 0.0
        %3996 = vmatpush1.msra.mxu0 0.0
        %3997 = vmatprep.subr.mxu0 0.0
        %3998 = vmatpush1.msra.mxu0 0.0
        %3999 = vmatprep.subr.mxu0 0.0
        %4000 = vmatpush1.msra.mxu0 0.0
        %4001 = vmatprep.subr.mxu0 0.0
        %4002 = vmatpush1.msra.mxu0 0.0
        %4003 = vmatprep.subr.mxu0 0.0
        %4004 = vmatpush1.msra.mxu0 0.0
        %4005 = vmatprep.subr.mxu0 0.0
        %4006 = vmatpush1.msra.mxu0 0.0
        %4007 = vmatprep.subr.mxu0 0.0
        %4008 = vmatpush1.msra.mxu0 0.0
        %4009 = vmatprep.subr.mxu0 0.0
        %4010 = vmatpush1.msra.mxu0 0.0
        %4011 = vmatprep.subr.mxu0 0.0
        %4012 = vmatpush1.msra.mxu0 0.0
        %4013 = vmatprep.subr.mxu0 0.0
        %4014 = vmatpush1.msra.mxu0 0.0
        %4015 = vmatprep.subr.mxu0 0.0
        %4016 = vmatpush1.msra.mxu0 0.0
        %4017 = vmatprep.subr.mxu0 0.0
        %4018 = vmatpush1.msra.mxu0 0.0
        %4019 = vmatprep.subr.mxu0 0.0
        %4020 = vmatpush1.msra.mxu0 0.0
        %4021 = vmatprep.subr.mxu0 0.0
        %4022 = vmatpush1.msra.mxu0 0.0
        %4023 = vmatprep.mubr.f32.mxu0 0.0
        %4024 = vmatmul.mubr.f32.gmra.mrb[0].mxu0 %v3859
        %v4025 = vpop.f32.mrb[0].mxu0
        %v4026 = vadd.f32 0.0, %v4025
        %v4027 = vpop.f32.mrb[0].mxu0
        %v4028 = vadd.f32 0.0, %v4027
        %4029 = vmatprep.mubr.f32.mxu0 0.0
        %4030 = vmatmul.mubr.f32.gmra.mrb[0].mxu0 %v3862
        %v4031 = vpop.f32.mrb[0].mxu0
        %v4032 = vadd.f32 0.0, %v4031
        %v4033 = vpop.f32.mrb[0].mxu0
        %v4034 = vadd.f32 0.0, %v4033
        %4035 = vmatprep.mubr.f32.mxu0 0.0
        %4036 = vmatmul.mubr.f32.gmra.mrb[0].mxu0 %v3865
        %v4037 = vpop.f32.mrb[0].mxu0
        %v4038 = vadd.f32 0.0, %v4037
        %v4039 = vpop.f32.mrb[0].mxu0
        %v4040 = vadd.f32 0.0, %v4039
        %4041 = vmatprep.mubr.f32.mxu0 0.0
        %4042 = vmatmul.mubr.f32.gmra.mrb[0].mxu0 %v3868
        %v4043 = vpop.f32.mrb[0].mxu0
        %v4044 = vadd.f32 0.0, %v4043
        %v4045 = vpop.f32.mrb[0].mxu0
        %v4046 = vadd.f32 0.0, %v4045
        %4047 = vdwg.mxu0
        %4048 = vmatprep.subr.mxu0 %v3835
        %4049 = vmatpush1.msra.mxu0 %v3834
        %4050 = vmatprep.subr.mxu0 %v3841
        %4051 = vmatpush1.msra.mxu0 %v3840
        %4052 = vmatprep.subr.mxu0 %v3847
        %4053 = vmatpush1.msra.mxu0 %v3846
        %4054 = vmatprep.subr.mxu0 %v3853
        %4055 = vmatpush1.msra.mxu0 %v3852
        %4056 = vmatprep.subr.mxu0 0.0
        %4057 = vmatpush1.msra.mxu0 0.0
        %4058 = vmatprep.subr.mxu0 0.0
        %4059 = vmatpush1.msra.mxu0 0.0
        %4060 = vmatprep.subr.mxu0 0.0
        %4061 = vmatpush1.msra.mxu0 0.0
        %4062 = vmatprep.subr.mxu0 0.0
        %4063 = vmatpush1.msra.mxu0 0.0
        %4064 = vmatprep.subr.mxu0 0.0
        %4065 = vmatpush1.msra.mxu0 0.0
        %4066 = vmatprep.subr.mxu0 0.0
        %4067 = vmatpush1.msra.mxu0 0.0
        %4068 = vmatprep.subr.mxu0 0.0
        %4069 = vmatpush1.msra.mxu0 0.0
        %4070 = vmatprep.subr.mxu0 0.0
        %4071 = vmatpush1.msra.mxu0 0.0
        %4072 = vmatprep.subr.mxu0 0.0
        %4073 = vmatpush1.msra.mxu0 0.0
        %4074 = vmatprep.subr.mxu0 0.0
        %4075 = vmatpush1.msra.mxu0 0.0
        %4076 = vmatprep.subr.mxu0 0.0
        %4077 = vmatpush1.msra.mxu0 0.0
        %4078 = vmatprep.subr.mxu0 0.0
        %4079 = vmatpush1.msra.mxu0 0.0
        %4080 = vmatprep.subr.mxu0 0.0
        %4081 = vmatpush1.msra.mxu0 0.0
        %4082 = vmatprep.subr.mxu0 0.0
        %4083 = vmatpush1.msra.mxu0 0.0
        %4084 = vmatprep.subr.mxu0 0.0
        %4085 = vmatpush1.msra.mxu0 0.0
        %4086 = vmatprep.subr.mxu0 0.0
        %4087 = vmatpush1.msra.mxu0 0.0
        %4088 = vmatprep.subr.mxu0 0.0
        %4089 = vmatpush1.msra.mxu0 0.0
        %4090 = vmatprep.subr.mxu0 0.0
        %4091 = vmatpush1.msra.mxu0 0.0
        %4092 = vmatprep.subr.mxu0 0.0
        %4093 = vmatpush1.msra.mxu0 0.0
        %4094 = vmatprep.subr.mxu0 0.0
        %4095 = vmatpush1.msra.mxu0 0.0
        %4096 = vmatprep.subr.mxu0 0.0
        %4097 = vmatpush1.msra.mxu0 0.0
        %4098 = vmatprep.subr.mxu0 0.0
        %4099 = vmatpush1.msra.mxu0 0.0
        %4100 = vmatprep.subr.mxu0 0.0
        %4101 = vmatpush1.msra.mxu0 0.0
        %4102 = vmatprep.subr.mxu0 0.0
        %4103 = vmatpush1.msra.mxu0 0.0
        %4104 = vmatprep.subr.mxu0 0.0
        %4105 = vmatpush1.msra.mxu0 0.0
        %4106 = vmatprep.subr.mxu0 0.0
        %4107 = vmatpush1.msra.mxu0 0.0
        %4108 = vmatprep.subr.mxu0 0.0
        %4109 = vmatpush1.msra.mxu0 0.0
        %4110 = vmatprep.subr.mxu0 0.0
        %4111 = vmatpush1.msra.mxu0 0.0
        %4112 = vmatprep.mubr.f32.mxu0 0.0
        %4113 = vmatmul.mubr.f32.gmra.mrb[0].mxu0 %v3859
        %v4114 = vpop.f32.mrb[0].mxu0
        %v4115 = vadd.f32 0.0, %v4114
        %v4116 = vpop.f32.mrb[0].mxu0
        %v4117 = vadd.f32 0.0, %v4116
        %4118 = vmatprep.mubr.f32.mxu0 0.0
        %4119 = vmatmul.mubr.f32.gmra.mrb[0].mxu0 %v3862
        %v4120 = vpop.f32.mrb[0].mxu0
        %v4121 = vadd.f32 0.0, %v4120
        %v4122 = vpop.f32.mrb[0].mxu0
        %v4123 = vadd.f32 0.0, %v4122
        %4124 = vmatprep.mubr.f32.mxu0 0.0
        %4125 = vmatmul.mubr.f32.gmra.mrb[0].mxu0 %v3865
        %v4126 = vpop.f32.mrb[0].mxu0
        %v4127 = vadd.f32 0.0, %v4126
        %v4128 = vpop.f32.mrb[0].mxu0
        %v4129 = vadd.f32 0.0, %v4128
        %4130 = vmatprep.mubr.f32.mxu0 0.0
        %4131 = vmatmul.mubr.f32.gmra.mrb[0].mxu0 %v3868
        %v4132 = vpop.f32.mrb[0].mxu0
        %v4133 = vadd.f32 0.0, %v4132
        %v4134 = vpop.f32.mrb[0].mxu0
        %v4135 = vadd.f32 0.0, %v4134
        %4136 = vdwg.mxu0
        %v4137 = vmul.f32 %v3830, %v3937
        %v4138 = vmul.f32 %v3831, %v3939
        %v4139 = vmul.f32 %v3836, %v3943
        %v4140 = vmul.f32 %v3837, %v3945
        %v4141 = vmul.f32 %v3842, %v3949
        %v4142 = vmul.f32 %v3843, %v3951
        %v4143 = vmul.f32 %v3848, %v3955
        %v4144 = vmul.f32 %v3849, %v3957
        %v4145 = vmul.f32 %v3832, %v4026
        %v4146 = vmul.f32 %v3833, %v4028
        %v4147 = vmul.f32 %v3838, %v4032
        %v4148 = vmul.f32 %v3839, %v4034
        %v4149 = vmul.f32 %v3844, %v4038
        %v4150 = vmul.f32 %v3845, %v4040
        %v4151 = vmul.f32 %v3850, %v4044
        %v4152 = vmul.f32 %v3851, %v4046
        %v4153 = vadd.f32 %v4137, %v4145
        %v4154 = vadd.f32 %v4138, %v4146
        %v4155 = vadd.f32 %v4139, %v4147
        %v4156 = vadd.f32 %v4140, %v4148
        %v4157 = vadd.f32 %v4141, %v4149
        %v4158 = vadd.f32 %v4142, %v4150
        %v4159 = vadd.f32 %v4143, %v4151
        %v4160 = vadd.f32 %v4144, %v4152
        %v4161 = vmul.f32 %v3834, %v4115
        %v4162 = vmul.f32 %v3835, %v4117
        %v4163 = vmul.f32 %v3840, %v4121
        %v4164 = vmul.f32 %v3841, %v4123
        %v4165 = vmul.f32 %v3846, %v4127
        %v4166 = vmul.f32 %v3847, %v4129
        %v4167 = vmul.f32 %v3852, %v4133
        %v4168 = vmul.f32 %v3853, %v4135
        %v4169 = vadd.f32 %v4153, %v4161
        %v4170 = vadd.f32 %v4154, %v4162
        %v4171 = vadd.f32 %v4155, %v4163
        %v4172 = vadd.f32 %v4156, %v4164
        %v4173 = vadd.f32 %v4157, %v4165
        %v4174 = vadd.f32 %v4158, %v4166
        %v4175 = vadd.f32 %v4159, %v4167
        %v4176 = vadd.f32 %v4160, %v4168
        %v4177 = vmul.f32 %v3937, %v3937
        %v4178 = vmul.f32 %v3939, %v3939
        %v4179 = vmul.f32 %v3943, %v3943
        %v4180 = vmul.f32 %v3945, %v3945
        %v4181 = vmul.f32 %v3949, %v3949
        %v4182 = vmul.f32 %v3951, %v3951
        %v4183 = vmul.f32 %v3955, %v3955
        %v4184 = vmul.f32 %v3957, %v3957
        %v4185 = vmul.f32 %v4026, %v4026
        %v4186 = vmul.f32 %v4028, %v4028
        %v4187 = vmul.f32 %v4032, %v4032
        %v4188 = vmul.f32 %v4034, %v4034
        %v4189 = vmul.f32 %v4038, %v4038
        %v4190 = vmul.f32 %v4040, %v4040
        %v4191 = vmul.f32 %v4044, %v4044
        %v4192 = vmul.f32 %v4046, %v4046
        %v4193 = vadd.f32 %v4177, %v4185
        %v4194 = vadd.f32 %v4178, %v4186
        %v4195 = vadd.f32 %v4179, %v4187
        %v4196 = vadd.f32 %v4180, %v4188
        %v4197 = vadd.f32 %v4181, %v4189
        %v4198 = vadd.f32 %v4182, %v4190
        %v4199 = vadd.f32 %v4183, %v4191
        %v4200 = vadd.f32 %v4184, %v4192
        %v4201 = vmul.f32 %v4115, %v4115
        %v4202 = vmul.f32 %v4117, %v4117
        %v4203 = vmul.f32 %v4121, %v4121
        %v4204 = vmul.f32 %v4123, %v4123
        %v4205 = vmul.f32 %v4127, %v4127
        %v4206 = vmul.f32 %v4129, %v4129
        %v4207 = vmul.f32 %v4133, %v4133
        %v4208 = vmul.f32 %v4135, %v4135
        %v4209 = vadd.f32 %v4193, %v4201
        %v4210 = vadd.f32 %v4194, %v4202
        %v4211 = vadd.f32 %v4195, %v4203
        %v4212 = vadd.f32 %v4196, %v4204
        %v4213 = vadd.f32 %v4197, %v4205
        %v4214 = vadd.f32 %v4198, %v4206
        %v4215 = vadd.f32 %v4199, %v4207
        %v4216 = vadd.f32 %v4200, %v4208
        %v4217 = vadd.f32 %v4209, 1e-06
        %v4218 = vadd.f32 %v4210, 1e-06
        %v4219 = vadd.f32 %v4211, 1e-06
        %v4220 = vadd.f32 %v4212, 1e-06
        %v4221 = vadd.f32 %v4213, 1e-06
        %v4222 = vadd.f32 %v4214, 1e-06
        %v4223 = vadd.f32 %v4215, 1e-06
        %v4224 = vadd.f32 %v4216, 1e-06
        %v4225 = vmin.f32 %v4169, 0.0
        %v4226 = vmin.f32 %v4170, 0.0
        %v4227 = vmin.f32 %v4171, 0.0
        %v4228 = vmin.f32 %v4172, 0.0
        %v4229 = vmin.f32 %v4173, 0.0
        %v4230 = vmin.f32 %v4174, 0.0
        %v4231 = vmin.f32 %v4175, 0.0
        %v4232 = vmin.f32 %v4176, 0.0
        %v4233 = vrcp.pop %v4217
        %v4234 = vrcp.pop %v4218
        %v4235 = vrcp.pop %v4219
        %v4236 = vrcp.pop %v4220
        %v4237 = vrcp.pop %v4221
        %v4238 = vrcp.pop %v4222
        %v4239 = vrcp.pop %v4223
        %v4240 = vrcp.pop %v4224
        %v4241 = vmul.f32 %v4225, %v4233
        %v4242 = vmul.f32 %v4226, %v4234
        %v4243 = vmul.f32 %v4227, %v4235
        %v4244 = vmul.f32 %v4228, %v4236
        %v4245 = vmul.f32 %v4229, %v4237
        %v4246 = vmul.f32 %v4230, %v4238
        %v4247 = vmul.f32 %v4231, %v4239
        %v4248 = vmul.f32 %v4232, %v4240
        %v4249 = vmul.f32 %v4241, %v3937
        %v4250 = vmul.f32 %v4242, %v3939
        %v4251 = vmul.f32 %v4241, %v4026
        %v4252 = vmul.f32 %v4242, %v4028
        %v4253 = vmul.f32 %v4241, %v4115
        %v4254 = vmul.f32 %v4242, %v4117
        %v4255 = vmul.f32 %v4243, %v3943
        %v4256 = vmul.f32 %v4244, %v3945
        %v4257 = vmul.f32 %v4243, %v4032
        %v4258 = vmul.f32 %v4244, %v4034
        %v4259 = vmul.f32 %v4243, %v4121
        %v4260 = vmul.f32 %v4244, %v4123
        %v4261 = vmul.f32 %v4245, %v3949
        %v4262 = vmul.f32 %v4246, %v3951
        %v4263 = vmul.f32 %v4245, %v4038
        %v4264 = vmul.f32 %v4246, %v4040
        %v4265 = vmul.f32 %v4245, %v4127
        %v4266 = vmul.f32 %v4246, %v4129
        %v4267 = vmul.f32 %v4247, %v3955
        %v4268 = vmul.f32 %v4248, %v3957
        %v4269 = vmul.f32 %v4247, %v4044
        %v4270 = vmul.f32 %v4248, %v4046
        %v4271 = vmul.f32 %v4247, %v4133
        %v4272 = vmul.f32 %v4248, %v4135
        %v4273 = vsub.f32 %v3830, %v4249
        %v4274 = vsub.f32 %v3831, %v4250
        %v4275 = vsub.f32 %v3832, %v4251
        %v4276 = vsub.f32 %v3833, %v4252
        %v4277 = vsub.f32 %v3834, %v4253
        %v4278 = vsub.f32 %v3835, %v4254
        %v4279 = vsub.f32 %v3836, %v4255
        %v4280 = vsub.f32 %v3837, %v4256
        %v4281 = vsub.f32 %v3838, %v4257
        %v4282 = vsub.f32 %v3839, %v4258
        %v4283 = vsub.f32 %v3840, %v4259
        %v4284 = vsub.f32 %v3841, %v4260
        %v4285 = vsub.f32 %v3842, %v4261
        %v4286 = vsub.f32 %v3843, %v4262
        %v4287 = vsub.f32 %v3844, %v4263
        %v4288 = vsub.f32 %v3845, %v4264
        %v4289 = vsub.f32 %v3846, %v4265
        %v4290 = vsub.f32 %v3847, %v4266
        %v4291 = vsub.f32 %v3848, %v4267
        %v4292 = vsub.f32 %v3849, %v4268
        %v4293 = vsub.f32 %v3850, %v4269
        %v4294 = vsub.f32 %v3851, %v4270
        %v4295 = vsub.f32 %v3852, %v4271
        %v4296 = vsub.f32 %v3853, %v4272
        %v4297 = vld [vmem:[%s16] sm:$0xff]
        %v4299 = vsel %vm1320, %v4297, 0
        %4301 = vmatprep.subr.mxu0 %v4274
        %4302 = vmatpush1.msra.mxu0 %v4273
        %4303 = vmatprep.subr.mxu0 %v4280
        %4304 = vmatpush1.msra.mxu0 %v4279
        %4305 = vmatprep.subr.mxu0 %v4286
        %4306 = vmatpush1.msra.mxu0 %v4285
        %4307 = vmatprep.subr.mxu0 %v4292
        %4308 = vmatpush1.msra.mxu0 %v4291
        %4309 = vmatprep.subr.mxu0 0.0
        %4310 = vmatpush1.msra.mxu0 0.0
        %4311 = vmatprep.subr.mxu0 0.0
        %4312 = vmatpush1.msra.mxu0 0.0
        %4313 = vmatprep.subr.mxu0 0.0
        %4314 = vmatpush1.msra.mxu0 0.0
        %4315 = vmatprep.subr.mxu0 0.0
        %4316 = vmatpush1.msra.mxu0 0.0
        %4317 = vmatprep.subr.mxu0 0.0
        %4318 = vmatpush1.msra.mxu0 0.0
        %4319 = vmatprep.subr.mxu0 0.0
        %4320 = vmatpush1.msra.mxu0 0.0
        %4321 = vmatprep.subr.mxu0 0.0
        %4322 = vmatpush1.msra.mxu0 0.0
        %4323 = vmatprep.subr.mxu0 0.0
        %4324 = vmatpush1.msra.mxu0 0.0
        %4325 = vmatprep.subr.mxu0 0.0
        %4326 = vmatpush1.msra.mxu0 0.0
        %4327 = vmatprep.subr.mxu0 0.0
        %4328 = vmatpush1.msra.mxu0 0.0
        %4329 = vmatprep.subr.mxu0 0.0
        %4330 = vmatpush1.msra.mxu0 0.0
        %4331 = vmatprep.subr.mxu0 0.0
        %4332 = vmatpush1.msra.mxu0 0.0
        %4333 = vmatprep.subr.mxu0 0.0
        %4334 = vmatpush1.msra.mxu0 0.0
        %4335 = vmatprep.subr.mxu0 0.0
        %4336 = vmatpush1.msra.mxu0 0.0
        %4337 = vmatprep.subr.mxu0 0.0
        %4338 = vmatpush1.msra.mxu0 0.0
        %4339 = vmatprep.subr.mxu0 0.0
        %4340 = vmatpush1.msra.mxu0 0.0
        %4341 = vmatprep.subr.mxu0 0.0
        %4342 = vmatpush1.msra.mxu0 0.0
        %4343 = vmatprep.subr.mxu0 0.0
        %4344 = vmatpush1.msra.mxu0 0.0
        %4345 = vmatprep.subr.mxu0 0.0
        %4346 = vmatpush1.msra.mxu0 0.0
        %4347 = vmatprep.subr.mxu0 0.0
        %4348 = vmatpush1.msra.mxu0 0.0
        %4349 = vmatprep.subr.mxu0 0.0
        %4350 = vmatpush1.msra.mxu0 0.0
        %4351 = vmatprep.subr.mxu0 0.0
        %4352 = vmatpush1.msra.mxu0 0.0
        %4353 = vmatprep.subr.mxu0 0.0
        %4354 = vmatpush1.msra.mxu0 0.0
        %4355 = vmatprep.subr.mxu0 0.0
        %4356 = vmatpush1.msra.mxu0 0.0
        %4357 = vmatprep.subr.mxu0 0.0
        %4358 = vmatpush1.msra.mxu0 0.0
        %4359 = vmatprep.subr.mxu0 0.0
        %4360 = vmatpush1.msra.mxu0 0.0
        %4361 = vmatprep.subr.mxu0 0.0
        %4362 = vmatpush1.msra.mxu0 0.0
        %4363 = vmatprep.subr.mxu0 0.0
        %4364 = vmatpush1.msra.mxu0 0.0
        %4365 = vmatprep.mubr.f32.mxu0 0.0
        %4366 = vmatmul.mubr.f32.gmra.mrb[0].mxu0 %v4299
        %v4367 = vpop.f32.mrb[0].mxu0
        %v4368 = vadd.f32 0.0, %v4367
        %v4369 = vpop.f32.mrb[0].mxu0
        %v4370 = vadd.f32 0.0, %v4369
        %4371 = vdwg.mxu0
        %4372 = vmatprep.subr.mxu0 %v4276
        %4373 = vmatpush1.msra.mxu0 %v4275
        %4374 = vmatprep.subr.mxu0 %v4282
        %4375 = vmatpush1.msra.mxu0 %v4281
        %4376 = vmatprep.subr.mxu0 %v4288
        %4377 = vmatpush1.msra.mxu0 %v4287
        %4378 = vmatprep.subr.mxu0 %v4294
        %4379 = vmatpush1.msra.mxu0 %v4293
        %4380 = vmatprep.subr.mxu0 0.0
        %4381 = vmatpush1.msra.mxu0 0.0
        %4382 = vmatprep.subr.mxu0 0.0
        %4383 = vmatpush1.msra.mxu0 0.0
        %4384 = vmatprep.subr.mxu0 0.0
        %4385 = vmatpush1.msra.mxu0 0.0
        %4386 = vmatprep.subr.mxu0 0.0
        %4387 = vmatpush1.msra.mxu0 0.0
        %4388 = vmatprep.subr.mxu0 0.0
        %4389 = vmatpush1.msra.mxu0 0.0
        %4390 = vmatprep.subr.mxu0 0.0
        %4391 = vmatpush1.msra.mxu0 0.0
        %4392 = vmatprep.subr.mxu0 0.0
        %4393 = vmatpush1.msra.mxu0 0.0
        %4394 = vmatprep.subr.mxu0 0.0
        %4395 = vmatpush1.msra.mxu0 0.0
        %4396 = vmatprep.subr.mxu0 0.0
        %4397 = vmatpush1.msra.mxu0 0.0
        %4398 = vmatprep.subr.mxu0 0.0
        %4399 = vmatpush1.msra.mxu0 0.0
        %4400 = vmatprep.subr.mxu0 0.0
        %4401 = vmatpush1.msra.mxu0 0.0
        %4402 = vmatprep.subr.mxu0 0.0
        %4403 = vmatpush1.msra.mxu0 0.0
        %4404 = vmatprep.subr.mxu0 0.0
        %4405 = vmatpush1.msra.mxu0 0.0
        %4406 = vmatprep.subr.mxu0 0.0
        %4407 = vmatpush1.msra.mxu0 0.0
        %4408 = vmatprep.subr.mxu0 0.0
        %4409 = vmatpush1.msra.mxu0 0.0
        %4410 = vmatprep.subr.mxu0 0.0
        %4411 = vmatpush1.msra.mxu0 0.0
        %4412 = vmatprep.subr.mxu0 0.0
        %4413 = vmatpush1.msra.mxu0 0.0
        %4414 = vmatprep.subr.mxu0 0.0
        %4415 = vmatpush1.msra.mxu0 0.0
        %4416 = vmatprep.subr.mxu0 0.0
        %4417 = vmatpush1.msra.mxu0 0.0
        %4418 = vmatprep.subr.mxu0 0.0
        %4419 = vmatpush1.msra.mxu0 0.0
        %4420 = vmatprep.subr.mxu0 0.0
        %4421 = vmatpush1.msra.mxu0 0.0
        %4422 = vmatprep.subr.mxu0 0.0
        %4423 = vmatpush1.msra.mxu0 0.0
        %4424 = vmatprep.subr.mxu0 0.0
        %4425 = vmatpush1.msra.mxu0 0.0
        %4426 = vmatprep.subr.mxu0 0.0
        %4427 = vmatpush1.msra.mxu0 0.0
        %4428 = vmatprep.subr.mxu0 0.0
        %4429 = vmatpush1.msra.mxu0 0.0
        %4430 = vmatprep.subr.mxu0 0.0
        %4431 = vmatpush1.msra.mxu0 0.0
        %4432 = vmatprep.subr.mxu0 0.0
        %4433 = vmatpush1.msra.mxu0 0.0
        %4434 = vmatprep.subr.mxu0 0.0
        %4435 = vmatpush1.msra.mxu0 0.0
        %4436 = vmatprep.mubr.f32.mxu0 0.0
        %4437 = vmatmul.mubr.f32.gmra.mrb[0].mxu0 %v4299
        %v4438 = vpop.f32.mrb[0].mxu0
        %v4439 = vadd.f32 0.0, %v4438
        %v4440 = vpop.f32.mrb[0].mxu0
        %v4441 = vadd.f32 0.0, %v4440
        %4442 = vdwg.mxu0
        %4443 = vmatprep.subr.mxu0 %v4278
        %4444 = vmatpush1.msra.mxu0 %v4277
        %4445 = vmatprep.subr.mxu0 %v4284
        %4446 = vmatpush1.msra.mxu0 %v4283
        %4447 = vmatprep.subr.mxu0 %v4290
        %4448 = vmatpush1.msra.mxu0 %v4289
        %4449 = vmatprep.subr.mxu0 %v4296
        %4450 = vmatpush1.msra.mxu0 %v4295
        %4451 = vmatprep.subr.mxu0 0.0
        %4452 = vmatpush1.msra.mxu0 0.0
        %4453 = vmatprep.subr.mxu0 0.0
        %4454 = vmatpush1.msra.mxu0 0.0
        %4455 = vmatprep.subr.mxu0 0.0
        %4456 = vmatpush1.msra.mxu0 0.0
        %4457 = vmatprep.subr.mxu0 0.0
        %4458 = vmatpush1.msra.mxu0 0.0
        %4459 = vmatprep.subr.mxu0 0.0
        %4460 = vmatpush1.msra.mxu0 0.0
        %4461 = vmatprep.subr.mxu0 0.0
        %4462 = vmatpush1.msra.mxu0 0.0
        %4463 = vmatprep.subr.mxu0 0.0
        %4464 = vmatpush1.msra.mxu0 0.0
        %4465 = vmatprep.subr.mxu0 0.0
        %4466 = vmatpush1.msra.mxu0 0.0
        %4467 = vmatprep.subr.mxu0 0.0
        %4468 = vmatpush1.msra.mxu0 0.0
        %4469 = vmatprep.subr.mxu0 0.0
        %4470 = vmatpush1.msra.mxu0 0.0
        %4471 = vmatprep.subr.mxu0 0.0
        %4472 = vmatpush1.msra.mxu0 0.0
        %4473 = vmatprep.subr.mxu0 0.0
        %4474 = vmatpush1.msra.mxu0 0.0
        %4475 = vmatprep.subr.mxu0 0.0
        %4476 = vmatpush1.msra.mxu0 0.0
        %4477 = vmatprep.subr.mxu0 0.0
        %4478 = vmatpush1.msra.mxu0 0.0
        %4479 = vmatprep.subr.mxu0 0.0
        %4480 = vmatpush1.msra.mxu0 0.0
        %4481 = vmatprep.subr.mxu0 0.0
        %4482 = vmatpush1.msra.mxu0 0.0
        %4483 = vmatprep.subr.mxu0 0.0
        %4484 = vmatpush1.msra.mxu0 0.0
        %4485 = vmatprep.subr.mxu0 0.0
        %4486 = vmatpush1.msra.mxu0 0.0
        %4487 = vmatprep.subr.mxu0 0.0
        %4488 = vmatpush1.msra.mxu0 0.0
        %4489 = vmatprep.subr.mxu0 0.0
        %4490 = vmatpush1.msra.mxu0 0.0
        %4491 = vmatprep.subr.mxu0 0.0
        %4492 = vmatpush1.msra.mxu0 0.0
        %4493 = vmatprep.subr.mxu0 0.0
        %4494 = vmatpush1.msra.mxu0 0.0
        %4495 = vmatprep.subr.mxu0 0.0
        %4496 = vmatpush1.msra.mxu0 0.0
        %4497 = vmatprep.subr.mxu0 0.0
        %4498 = vmatpush1.msra.mxu0 0.0
        %4499 = vmatprep.subr.mxu0 0.0
        %4500 = vmatpush1.msra.mxu0 0.0
        %4501 = vmatprep.subr.mxu0 0.0
        %4502 = vmatpush1.msra.mxu0 0.0
        %4503 = vmatprep.subr.mxu0 0.0
        %4504 = vmatpush1.msra.mxu0 0.0
        %4505 = vmatprep.subr.mxu0 0.0
        %4506 = vmatpush1.msra.mxu0 0.0
        %4507 = vmatprep.mubr.f32.mxu0 0.0
        %4508 = vmatmul.mubr.f32.gmra.mrb[0].mxu0 %v4299
        %v4509 = vpop.f32.mrb[0].mxu0
        %v4510 = vadd.f32 0.0, %v4509
        %v4511 = vpop.f32.mrb[0].mxu0
        %v4512 = vadd.f32 0.0, %v4511
        %4513 = vdwg.mxu0
        %4514 = vst [vmem:[%s678] sm:$0xff] %v4368
        %4515 = vst [vmem:[%s678 + $0x8] sm:$0xff] %v4370
        %s4516 = scalar_lea.vmem %s678, 16 [#allocation4]
        %4517 = vst [vmem:[%s4516] sm:$0xff] %v4439
        %4518 = vst [vmem:[%s4516 + $0x8] sm:$0xff] %v4441
        %s4519 = scalar_lea.vmem %s678, 32 [#allocation4]
        %4520 = vst [vmem:[%s4519] sm:$0xff] %v4510
        %4521 = vst [vmem:[%s4519 + $0x8] sm:$0xff] %v4512
        %s4522 = sand.u32 %s438, 1
        %s4523 = scalar_lea.sflag [#allocation3], %s4522
        %s4524 = sand.u32 %s438, 1
        %s4525 = smul.addr %s4524, 192
        %s4526 = scalar_lea.vmem [#allocation2], %s4525
        %s4527 = sand.u32 %s466, 1
        %s4528 = scalar_lea.sflag [#allocation5], %s4527
        %s4529 = sand.u32 %s466, 1
        %s4530 = smul.addr %s4529, 48
        %s4531 = scalar_lea.vmem [#allocation4], %s4530
        %p4532 = scmp.lt.s32.totalorder %s41, 1
        %s4533 = scalar_select %p4532, %s41, 1
        %s4534 = smul.addr %s4533, 12
        %s4535 = smul.addr %s4534, 8
        %s4536 = scalar_lea.vmem %s19, %s4535
        // Predicated region
        $region93: #{tpu_custom_call.1} parent=87 // pred_check
          %p4537 = pneg %p448
        $region94: #{tpu_custom_call.1} parent=87 // pred_check_branch
          %4539 = sbr.rel (%p4537) target = $region96
        $region95: #{tpu_custom_call.1} parent=87 // pred_region
          %s4540 = smul.u32 2, %s42
          %s4542 = ssub.s32 3072, 3072
          %4543 = vsyncadd %s4523, %s4542
          %s4544 = smul.addr %s41, 24
          %s4545 = sadd.s32 %s4540, %s4544
          %s4546 = smul.addr %s4545, 128
          %s4547 = scalar_lea.hbm %s17, %s4546
          %s4548 = sshll.u32 %s4526, 4
          %s4549 = int_to_ptr.vmem [resolvable:$true] %s4548
          %4554 = dma.vmem_to_hbm [thread:$0]  %s4549, 3072, %s4547, %s4523, 256, 256, 16
        $region96: #{tpu_custom_call.1} parent=87 // pred_fallthru
          _
        // Predicated region
        $region97: #{tpu_custom_call.1} parent=87 // pred_check
          %p4555 = pneg %p476
        $region98: #{tpu_custom_call.1} parent=87 // pred_check_branch
          %4557 = sbr.rel (%p4555) target = $region100
        $region99: #{tpu_custom_call.1} parent=87 // pred_region
          %s4558 = smul.u32 2, %s42
          %s4560 = ssub.s32 768, 768
          %4561 = vsyncadd %s4528, %s4560
          %s4562 = smul.addr %s41, 6
          %s4563 = sadd.s32 %s4558, %s4562
          %s4564 = smul.addr %s4563, 128
          %s4565 = scalar_lea.hbm %s18, %s4564
          %s4566 = sshll.u32 %s4531, 4
          %s4567 = int_to_ptr.vmem [resolvable:$true] %s4566
          %4572 = dma.vmem_to_hbm [thread:$0]  %s4567, 768, %s4565, %s4528, 256, 256, 16
        $region100: #{tpu_custom_call.1} parent=87 // pred_fallthru
          _
        // Predicated region
        $region101: #{tpu_custom_call.1} parent=87 // pred_check
          %p4573 = pneg %p502
        $region102: #{tpu_custom_call.1} parent=87 // pred_check_branch
          %4575 = sbr.rel (%p4573) target = $region104
        $region103: #{tpu_custom_call.1} parent=87 // pred_region
          _
        $region104: #{tpu_custom_call.1} parent=87 // pred_fallthru
          _
      $region88: #{tpu_custom_call.1} parent=5 // pred_fallthru
        _
      %p4576 = scmp.le.s32.totalorder 2, %s32
      // Predicated region
      $region105: #{tpu_custom_call.1} parent=5 // pred_check
        %p4577 = pneg %p4576
      $region106: #{tpu_custom_call.1} parent=5 // pred_check_branch
        %4579 = sbr.rel (%p4577) target = $region108
      $region107: #{tpu_custom_call.1} parent=5 // pred_region
        %s4580 = ssub.s32 %s32, 2
        // Predicated region
        $region109: #{tpu_custom_call.1} parent=107 // pred_check
          %p4581 = pneg %p454
        $region110: #{tpu_custom_call.1} parent=107 // pred_check_branch
          %4583 = sbr.rel (%p4581) target = $region112
        $region111: #{tpu_custom_call.1} parent=107 // pred_region
          %s4584 = sand.u32 %s439, 1
          %s4585 = scalar_lea.sflag [#allocation3], %s4584
          %s4586 = sand.u32 %s439, 1
          %s4587 = smul.addr %s4586, 192
          %s4588 = scalar_lea.vmem [#allocation2], %s4587
          %4589 = dma.done %s4585, 3072
        $region112: #{tpu_custom_call.1} parent=107 // pred_fallthru
          _
        // Predicated region
        $region113: #{tpu_custom_call.1} parent=107 // pred_check
          %p4590 = pneg %p482
        $region114: #{tpu_custom_call.1} parent=107 // pred_check_branch
          %4592 = sbr.rel (%p4590) target = $region116
        $region115: #{tpu_custom_call.1} parent=107 // pred_region
          %s4593 = sand.u32 %s467, 1
          %s4594 = scalar_lea.sflag [#allocation5], %s4593
          %s4595 = sand.u32 %s467, 1
          %s4596 = smul.addr %s4595, 48
          %s4597 = scalar_lea.vmem [#allocation4], %s4596
          %4598 = dma.done %s4594, 768
        $region116: #{tpu_custom_call.1} parent=107 // pred_fallthru
          _
        // Predicated region
        $region117: #{tpu_custom_call.1} parent=107 // pred_check
          %p4599 = pneg %p508
        $region118: #{tpu_custom_call.1} parent=107 // pred_check_branch
          %4601 = sbr.rel (%p4599) target = $region120
        $region119: #{tpu_custom_call.1} parent=107 // pred_region
          %p4602 = scmp.lt.s32.totalorder %s43, 1
          %s4603 = scalar_select %p4602, %s43, 1
          %s4604 = smul.addr %s4603, 12
          %s4605 = smul.addr %s4604, 8
          %s4606 = scalar_lea.vmem %s19, %s4605
        $region120: #{tpu_custom_call.1} parent=107 // pred_fallthru
          _
      $region108: #{tpu_custom_call.1} parent=5 // pred_fallthru
        _
    $region6: #{tpu_custom_call.1} parent=1 // loop_footer
      %s36 = sadd.s32 1, %s32
    $region7: #{tpu_custom_call.1} parent=1 // loop_footer_branch
      %31 = sbr.rel target = $region3
    $region8: #{tpu_custom_call.1} parent=1 // loop_exit
      _
    %4607 = vsyncpa [#allocation3], 1
    %s4608 = scalar_lea.sflag [#allocation3], 1
    %4609 = vsyncpa %s4608, 1
    %4610 = vsyncpa [#allocation5], 1
    %s4611 = scalar_lea.sflag [#allocation5], 1
    %4612 = vsyncpa %s4611, 1

</llo_original>
